<compile_context>
chip_gen: v7x
topology: tpu7x:2x2x1
jax: 0.10.0
libtpu: 0.0.40
codegen_flags: <defaults>
</compile_context>

<pallas_src>
import functools
import math

import numpy as np
import jax
import jax.numpy as jnp
from jax.experimental import pallas as pl
from jax.experimental.pallas import tpu as pltpu


_VMEM_LIMIT = 48 * 1024 * 1024   # safe on v7x (64 MiB physical), plenty on v5e/v6e (128 MiB)


# ----------------------------------------------------------------------------
# Pallas kernels
# ----------------------------------------------------------------------------
def _conv3x3_kernel(x_ref, w_ref, b_ref, o_ref, *, H, W, apply_relu):
    """x_ref: (H+2, W+2, Cin) bf16; w_ref: (9, Cin, Cout) bf16; b_ref: (1, Cout) f32;
    o_ref: (H, W, Cout) f32.  In-kernel 9-tap accumulation (no HBM im2col)."""
    Cin = x_ref.shape[-1]
    Cout = o_ref.shape[-1]
    acc = jnp.zeros((H * W, Cout), jnp.float32)
    for t in range(9):
        dy, dx = divmod(t, 3)
        xs = x_ref[dy:dy + H, dx:dx + W, :].reshape(H * W, Cin)
        acc = acc + jnp.dot(xs, w_ref[t], preferred_element_type=jnp.float32)
    acc = acc + b_ref[...]
    if apply_relu:
        acc = jnp.maximum(acc, 0.0)
    o_ref[...] = acc.reshape(H, W, Cout)


def _smb_conv_mix_kernel(x_ref, w_ref, spa_ref, cm0_ref, cm1_ref, o_ref, *, H, W):
    """Fused SMB layer: dual-branch 3x3 conv (mask folded into a (Cin, 2C) weight) + mask mix + ReLU.
    x_ref: (H+2, W+2, C) bf16; w_ref: (9, C, 2C) bf16; spa_ref: (H*W, 1) f32;
    cm0_ref/cm1_ref: (1, C) f32; o_ref: (H, W, C) f32."""
    Cin = x_ref.shape[-1]
    C = o_ref.shape[-1]
    acc = jnp.zeros((H * W, 2 * C), jnp.float32)
    for t in range(9):
        dy, dx = divmod(t, 3)
        xs = x_ref[dy:dy + H, dx:dx + W, :].reshape(H * W, Cin)
        acc = acc + jnp.dot(xs, w_ref[t], preferred_element_type=jnp.float32)
    fd = acc[:, :C]          # conv(fea * cm0)   (fs weight half is zero at layer 0)
    fs = acc[:, C:]          # conv(fea * cm1)
    spa = spa_ref[...]       # (H*W, 1)
    cm0 = cm0_ref[...]       # (1, C)
    cm1 = cm1_ref[...]
    a = cm1 * spa + cm0
    b = (cm1 + cm0) * spa
    o_ref[...] = jnp.maximum(fd * a + fs * b, 0.0).reshape(H, W, C)


def _mm_kernel(a_ref, w_ref, b_ref, o_ref, *, apply_relu):
    acc = jnp.dot(a_ref[...], w_ref[...], preferred_element_type=jnp.float32) + b_ref[...]
    if apply_relu:
        acc = jnp.maximum(acc, 0.0)
    o_ref[...] = acc


# ----------------------------------------------------------------------------
# Kernel wrappers
# ----------------------------------------------------------------------------
def conv3x3(x, p, relu=False):
    """3x3 conv, stride 1, pad 1. x: (B,H,W,Cin) NHWC; p['w']: (Cout,Cin,3,3); p['b']: (Cout,)."""
    B, H, W, Cin = x.shape
    w = p["w"]
    Cout = w.shape[0]
    xp = jnp.pad(x, ((0, 0), (1, 1), (1, 1), (0, 0)))
    if Cin < 8:                                     # pad tiny channel counts (RGB head) to 8
        pad_c = 8 - Cin
        xp = jnp.pad(xp, ((0, 0), (0, 0), (0, 0), (0, pad_c)))
        w = jnp.pad(w, ((0, 0), (0, pad_c), (0, 0), (0, 0)))
        Cin = 8
    xp = xp.astype(jnp.bfloat16)
    w_tap = jnp.transpose(w, (2, 3, 1, 0)).reshape(9, Cin, Cout).astype(jnp.bfloat16)
    bias = p["b"].reshape(1, Cout).astype(jnp.float32)
    return pl.pallas_call(
        functools.partial(_conv3x3_kernel, H=H, W=W, apply_relu=relu),
        out_shape=jax.ShapeDtypeStruct((B, H, W, Cout), jnp.float32),
        grid=(B,),
        in_specs=[
            pl.BlockSpec((None, H + 2, W + 2, Cin), lambda n: (n, 0, 0, 0)),
            pl.BlockSpec((9, Cin, Cout), lambda n: (0, 0, 0)),        # resident weights
            pl.BlockSpec((1, Cout), lambda n: (0, 0)),                # resident bias
        ],
        out_specs=pl.BlockSpec((None, H, W, Cout), lambda n: (n, 0, 0, 0)),
        compiler_params=pltpu.CompilerParams(
            dimension_semantics=("parallel",),
            vmem_limit_bytes=_VMEM_LIMIT),
    )(xp, w_tap, bias)


def smb_conv_mix(x, wd, spa_flat, cm0, cm1):
    """Fused SMB stage. x: (B,H,W,C) f32; wd: (9,C,2C) bf16; spa_flat: (B,H*W,1) f32;
    cm0/cm1: (1,C) f32. Returns (B,H,W,C) f32."""
    B, H, W, C = x.shape
    xp = jnp.pad(x, ((0, 0), (1, 1), (1, 1), (0, 0))).astype(jnp.bfloat16)
    return pl.pallas_call(
        functools.partial(_smb_conv_mix_kernel, H=H, W=W),
        out_shape=jax.ShapeDtypeStruct((B, H, W, C), jnp.float32),
        grid=(B,),
        in_specs=[
            pl.BlockSpec((None, H + 2, W + 2, C), lambda n: (n, 0, 0, 0)),
            pl.BlockSpec((9, C, 2 * C), lambda n: (0, 0, 0)),
            pl.BlockSpec((None, H * W, 1), lambda n: (n, 0, 0)),
            pl.BlockSpec((1, C), lambda n: (0, 0)),
            pl.BlockSpec((1, C), lambda n: (0, 0)),
        ],
        out_specs=pl.BlockSpec((None, H, W, C), lambda n: (n, 0, 0, 0)),
        compiler_params=pltpu.CompilerParams(
            dimension_semantics=("parallel",),
            vmem_limit_bytes=_VMEM_LIMIT),
    )(xp, wd, spa_flat, cm0, cm1)


def matmul_bias(a, w, b, relu=False, tm_max=256):
    """Tiled (over M) matmul + bias (+ optional ReLU). a:(M,K), w:(K,N), b:(N,) -> (M,N) f32."""
    M, K = a.shape
    N = w.shape[1]
    a = a.astype(jnp.bfloat16)
    w = w.astype(jnp.bfloat16)
    b2 = jnp.asarray(b).reshape(1, N).astype(jnp.float32)
    tm = tm_max if M > tm_max else max(8, -(-M // 8) * 8)
    Mp = -(-M // tm) * tm
    if Mp != M:
        a = jnp.pad(a, ((0, Mp - M), (0, 0)))
    out = pl.pallas_call(
        functools.partial(_mm_kernel, apply_relu=relu),
        out_shape=jax.ShapeDtypeStruct((Mp, N), jnp.float32),
        grid=(Mp // tm,),
        in_specs=[
            pl.BlockSpec((tm, K), lambda i: (i, 0)),
            pl.BlockSpec((K, N), lambda i: (0, 0)),       # resident weight
            pl.BlockSpec((1, N), lambda i: (0, 0)),       # resident bias
        ],
        out_specs=pl.BlockSpec((tm, N), lambda i: (i, 0)),
        compiler_params=pltpu.CompilerParams(
            dimension_semantics=("parallel",),
            vmem_limit_bytes=_VMEM_LIMIT),
    )(a, w, b2)
    return out[:M] if Mp != M else out


def conv1x1(x, p, relu=False):
    B, H, W, Cin = x.shape
    Cout = p["w"].shape[0]
    a = x.reshape(B * H * W, Cin)
    wm = jnp.transpose(p["w"][:, :, 0, 0])                # (Cin, Cout)
    out = matmul_bias(a, wm, p["b"], relu=relu)
    return out.reshape(B, H, W, Cout)


def conv_transpose_subpix(x, p):
    """ConvTranspose2d(Cin,Cout,3,stride=2,pad=1,output_padding=1) as 4 sub-pixel convs (one matmul).
    x: (B,H,W,Cin); p['w']: (Cin,Cout,3,3); returns (B,2H,2W,Cout)."""
    B, H, W, Cin = x.shape
    w = p["w"]
    Cout = w.shape[1]
    xp = jnp.pad(x, ((0, 0), (0, 1), (0, 1), (0, 0)))     # bottom/right halo of zeros
    x00 = x
    x01 = xp[:, :H, 1:W + 1, :]
    x10 = xp[:, 1:H + 1, :W, :]
    x11 = xp[:, 1:H + 1, 1:W + 1, :]
    a = jnp.concatenate([x00, x01, x10, x11], axis=-1).reshape(B * H * W, 4 * Cin)

    z = jnp.zeros((Cin, Cout), w.dtype)
    wk = lambda ky, kx: w[:, :, ky, kx]                   # (Cin, Cout)
    # output sub-pixels ordered [ee, eo, oe, oo]
    row00 = jnp.concatenate([wk(1, 1), wk(1, 2), wk(2, 1), wk(2, 2)], axis=1)
    row01 = jnp.concatenate([z,        wk(1, 0), z,        wk(2, 0)], axis=1)
    row10 = jnp.concatenate([z,        z,        wk(0, 1), wk(0, 2)], axis=1)
    row11 = jnp.concatenate([z,        z,        z,        wk(0, 0)], axis=1)
    w_big = jnp.concatenate([row00, row01, row10, row11], axis=0)     # (4Cin, 4Cout)
    b_big = jnp.tile(p["b"], 4)

    out = matmul_bias(a, w_big, b_big)                    # (B*H*W, 4*Cout)
    out = out.reshape(B, H, W, 2, 2, Cout)
    out = jnp.transpose(out, (0, 1, 3, 2, 4, 5)).reshape(B, 2 * H, 2 * W, Cout)
    return out


# ----------------------------------------------------------------------------
# Plain JAX glue
# ----------------------------------------------------------------------------
def avgpool2(x):
    B, H, W, C = x.shape
    return x.reshape(B, H // 2, 2, W // 2, 2, C).mean(axis=(2, 4))


def gumbel_softmax(key, x, axis, tau):
    u = jax.random.uniform(key, x.shape, jnp.float32)
    u = jnp.clip(u, 1e-12, 1.0)
    g = -jnp.log(-jnp.log(u))
    return jax.nn.softmax((x + g) / tau, axis=axis)


def pixel_shuffle_nchw(x, r):
    B, C, H, W = x.shape
    c = C // (r * r)
    x = x.reshape(B, c, r, r, H, W)
    x = jnp.transpose(x, (0, 1, 4, 2, 5, 3))
    return x.reshape(B, c, H * r, W * r)


def _cubic(x, a=-0.75):
    x = abs(float(x))
    if x <= 1.0:
        return (a + 2.0) * x ** 3 - (a + 3.0) * x ** 2 + 1.0
    elif x < 2.0:
        return a * x ** 3 - 5.0 * a * x ** 2 + 8.0 * a * x - 4.0 * a
    return 0.0


def _bicubic_weights(n_in, scale):
    n_out = n_in * scale
    W = np.zeros((n_out, n_in), np.float32)
    for o in range(n_out):
        src = (o + 0.5) / scale - 0.5
        i0 = int(math.floor(src))
        t = src - i0
        idxs = [i0 - 1, i0, i0 + 1, i0 + 2]
        ws = [_cubic(t + 1.0), _cubic(t), _cubic(1.0 - t), _cubic(2.0 - t)]
        for idx, wv in zip(idxs, ws):
            W[o, min(max(idx, 0), n_in - 1)] += wv
    return jnp.asarray(W)


def bicubic_upsample_nchw(x, scale):
    _, _, H, W = x.shape
    Wh = _bicubic_weights(H, scale)
    Ww = _bicubic_weights(W, scale)
    return jnp.einsum("oh,bchw,pw->bcop", Wh, x, Ww)


# ----------------------------------------------------------------------------
# Parameter construction (deterministic, in-script)
# ----------------------------------------------------------------------------
class ParamGen:
    def __init__(self, seed=0):
        self.key = jax.random.PRNGKey(seed)

    def _next(self):
        self.key, sub = jax.random.split(self.key)
        return sub

    def conv(self, cout, cin, k, bias=True):
        fan_in = cin * k * k
        w = jax.random.normal(self._next(), (cout, cin, k, k), jnp.float32) / math.sqrt(fan_in)
        b = (jax.random.normal(self._next(), (cout,), jnp.float32) * 0.01
             if bias else jnp.zeros((cout,), jnp.float32))
        return {"w": w, "b": b}

    def conv_t(self, cin, cout, k):
        fan_in = cin * k * k
        w = jax.random.normal(self._next(), (cin, cout, k, k), jnp.float32) / math.sqrt(fan_in)
        b = jax.random.normal(self._next(), (cout,), jnp.float32) * 0.01
        return {"w": w, "b": b}

    def uniform(self, shape):
        return jax.random.uniform(self._next(), shape, jnp.float32)


def build_params(num_channels=3, n_feats=64, scale=2, seed=0):
    pg = ParamGen(seed)
    P = {}
    P["head"] = [pg.conv(n_feats, num_channels, 3), pg.conv(n_feats, n_feats, 3)]
    body = []
    c4 = n_feats // 4
    red = n_feats // 16
    for _ in range(5):
        smm = {
            "spa": [pg.conv(c4, n_feats, 3), pg.conv(c4, c4, 3), pg.conv_t(c4, 2, 3)],
            "smb": {
                "ch_mask": pg.uniform((1, n_feats, 4, 2)),
                "body": [pg.conv(n_feats, n_feats, 3, bias=False) for _ in range(4)],
                "collect": pg.conv(n_feats, n_feats * 4, 1),
            },
            "ca": [pg.conv(red, n_feats, 1), pg.conv(n_feats, red, 1)],
        }
        body.append(smm)
    P["body"] = body
    P["collect"] = [pg.conv(n_feats, n_feats * 5, 1), pg.conv(n_feats, n_feats, 3)]
    P["tail"] = pg.conv(num_channels * scale * scale, n_feats, 3)
    return P


# ----------------------------------------------------------------------------
# Module forwards
# ----------------------------------------------------------------------------
def ca_forward(x, p):
    # tiny (B,64)x(64,4)x(4,64) matmuls: leave to XLA (launch overhead dominates a Pallas call).
    B, H, W, C = x.shape
    y = jnp.mean(x, axis=(1, 2))                          # adaptive avg pool to 1x1 -> (B, C)
    w0 = p[0]["w"][:, :, 0, 0]                            # (C//16, C)
    w1 = p[1]["w"][:, :, 0, 0]                            # (C, C//16)
    y = jnp.maximum(y @ w0.T + p[0]["b"], 0.0)
    y = jax.nn.sigmoid(y @ w1.T + p[1]["b"])
    return x * y.reshape(B, 1, 1, C)


def smb_forward(x, spa, p, key, tau):
    ch_mask = gumbel_softmax(key, p["ch_mask"], axis=3, tau=tau)   # (1, C, 4, 2)
    B, H, W, C = x.shape
    spa_flat = spa.reshape(B, H * W, 1).astype(jnp.float32)
    fea = x
    outs = []
    for i in range(4):
        cm0 = ch_mask[0, :, i, 0]                          # (C,)
        cm1 = ch_mask[0, :, i, 1]
        w = p["body"][i]["w"]                              # (C, C, 3, 3), bias=False
        if i == 0:
            w0, w1 = w, jnp.zeros_like(w)                  # fea_s branch is zero at layer 0
        else:
            # fold input-channel masking into the weights: conv(fea*cm, W) == conv(fea, W*cm_in)
            w0 = w * cm0[None, :, None, None]
            w1 = w * cm1[None, :, None, None]
        wd = jnp.concatenate(
            [jnp.transpose(w0, (2, 3, 1, 0)), jnp.transpose(w1, (2, 3, 1, 0))],
            axis=-1).reshape(9, C, 2 * C).astype(jnp.bfloat16)
        fea = smb_conv_mix(fea, wd, spa_flat, cm0.reshape(1, C), cm1.reshape(1, C))
        outs.append(fea)
    cat = jnp.concatenate([o.astype(jnp.bfloat16) for o in outs], axis=-1)   # (B,H,W,4C) bf16
    out = conv1x1(cat, p["collect"], relu=False)
    return out, ch_mask


def smm_forward(x, p, key, tau=1.0):
    k1, k2 = jax.random.split(key)
    s = conv3x3(x, p["spa"][0], relu=True)
    s = avgpool2(s)
    s = conv3x3(s, p["spa"][1], relu=True)
    s = conv_transpose_subpix(s, p["spa"][2])              # (B,H,W,2)
    spa_mask = gumbel_softmax(k1, s, axis=-1, tau=tau)
    spa = spa_mask[..., 1:2]                               # (B,H,W,1)
    out, ch_mask = smb_forward(x, spa, p["smb"], k2, tau)
    out = ca_forward(out, p["ca"]) + x
    return out, spa, ch_mask


def net_forward(x_nchw, P, key, scale=2, tau=1.0):
    """Returns [sr (B,C,H*s,W*s) NCHW, sparsity (5B, 4*n_feats, H, W) NCHW]."""
    x0 = x_nchw.astype(jnp.float32)
    x = jnp.transpose(x0, (0, 2, 3, 1))                    # NHWC
    x = conv3x3(x, P["head"][0], relu=True)                # ConvBlock(relu)
    x = conv3x3(x, P["head"][1], relu=False)               # ConvBlock(no act)

    fea = x
    out_fea = []
    sparsity = []
    keys = jax.random.split(key, 5)
    for i in range(5):
        fea, spa, ch_mask = smm_forward(fea, P["body"][i], keys[i], tau)
        out_fea.append(fea)
        cm1 = ch_mask[..., 1].reshape(1, 1, 1, -1)         # (1,1,1,4*C), channel-major like torch .view
        cm0 = ch_mask[..., 0].reshape(1, 1, 1, -1)
        sparsity.append(spa * cm1 + jnp.ones_like(spa) * cm0)

    cat = jnp.concatenate([f.astype(jnp.bfloat16) for f in out_fea], axis=-1)   # (B,H,W,320) bf16
    of = conv1x1(cat, P["collect"][0], relu=True)
    of = conv3x3(of, P["collect"][1], relu=False) + x

    t = conv3x3(of, P["tail"], relu=False)                 # (B,H,W,C*s*s)
    t_nchw = jnp.transpose(t, (0, 3, 1, 2))
    sr = pixel_shuffle_nchw(t_nchw, scale) + bicubic_upsample_nchw(x0, scale)

    sparsity = jnp.concatenate(
        [jnp.transpose(s, (0, 3, 1, 2)) for s in sparsity], axis=0)
    return sr, sparsity


# ----------------------------------------------------------------------------
if __name__ == "__main__":
    B, C, H, W = 2, 3, 16, 16
    scale = 2
    key = jax.random.PRNGKey(0)
    k_in, k_fwd = jax.random.split(key)

    x = jax.random.normal(k_in, (B, C, H, W), jnp.float32)
    params = build_params(num_channels=C, n_feats=64, scale=scale, seed=0)

    sr, sparsity = net_forward(x, params, k_fwd, scale=scale, tau=1.0)
    jax.block_until_ready(sr)
    jax.block_until_ready(sparsity)

    assert sr.shape == (B, C, H * scale, W * scale), sr.shape
    assert sparsity.shape == (5 * B, 64 * 4, H, W), sparsity.shape
    assert bool(jnp.all(jnp.isfinite(sr))) and bool(jnp.all(jnp.isfinite(sparsity)))
    print("KERNEL_OK")
</pallas_src>

<mosaic_0001>
module attributes {stable_mosaic.version = 11 : i64} {
  func.func @_conv3x3_kernel(%arg0: i32, %arg1: memref<1x18x18x8xbf16, #tpu.memory_space<vmem>>, %arg2: memref<9x8x64xbf16, #tpu.memory_space<vmem>>, %arg3: memref<1x64xf32, #tpu.memory_space<vmem>>, %arg4: memref<1x16x16x64xf32, #tpu.memory_space<vmem>>) attributes {dimension_semantics = [#tpu.dimension_semantics<parallel>], iteration_bounds = array<i64: 2>, scalar_prefetch = 0 : i64, scratch_operands = 0 : i64, tpu.core_type = #tpu.core_type<tc>, window_params = [{transform_indices = @transform_0, window_bounds = array<i64: 1, 18, 18, 8>}, {pipeline_mode = #tpu.pipeline_mode<synchronous>, transform_indices = @transform_1, window_bounds = array<i64: 9, 8, 64>}, {pipeline_mode = #tpu.pipeline_mode<synchronous>, transform_indices = @transform_2, window_bounds = array<i64: 1, 64>}, {transform_indices = @transform_3, window_bounds = array<i64: 1, 16, 16, 64>}]} {
    %cst = arith.constant 0.000000e+00 : f32
    %0 = vector.broadcast %cst : f32 to vector<256x64xf32>
    %c0 = arith.constant 0 : index
    %c0_0 = arith.constant 0 : index
    %c0_1 = arith.constant 0 : index
    %c0_2 = arith.constant 0 : index
    %1 = vector.load %arg1[%c0, %c0_0, %c0_1, %c0_2] : memref<1x18x18x8xbf16, #tpu.memory_space<vmem>>, vector<1x16x16x8xbf16>
    %2 = vector.shape_cast %1 : vector<1x16x16x8xbf16> to vector<16x16x8xbf16>
    %3 = vector.shape_cast %2 : vector<16x16x8xbf16> to vector<256x8xbf16>
    %c0_3 = arith.constant 0 : index
    %c0_4 = arith.constant 0 : index
    %c0_5 = arith.constant 0 : index
    %4 = vector.load %arg2[%c0_3, %c0_4, %c0_5] : memref<9x8x64xbf16, #tpu.memory_space<vmem>>, vector<1x8x64xbf16>
    %5 = vector.shape_cast %4 : vector<1x8x64xbf16> to vector<8x64xbf16>
    %cst_6 = arith.constant dense<0.000000e+00> : vector<256x64xf32>
    %6 = tpu.matmul %3, %5, %cst_6 {dimension_numbers = #tpu.dot_dimension_numbers<[1], [0], [0], [1], [0, 0, 1, 1], [], []>} : vector<256x8xbf16>, vector<8x64xbf16>, vector<256x64xf32> -> vector<256x64xf32>
    %7 = arith.addf %0, %6 : vector<256x64xf32>
    %c0_7 = arith.constant 0 : index
    %c0_8 = arith.constant 0 : index
    %c1 = arith.constant 1 : index
    %c0_9 = arith.constant 0 : index
    %8 = vector.load %arg1[%c0_7, %c0_8, %c1, %c0_9] : memref<1x18x18x8xbf16, #tpu.memory_space<vmem>>, vector<1x16x16x8xbf16>
    %9 = vector.shape_cast %8 : vector<1x16x16x8xbf16> to vector<16x16x8xbf16>
    %10 = vector.shape_cast %9 : vector<16x16x8xbf16> to vector<256x8xbf16>
    %c1_10 = arith.constant 1 : index
    %c0_11 = arith.constant 0 : index
    %c0_12 = arith.constant 0 : index
    %11 = vector.load %arg2[%c1_10, %c0_11, %c0_12] : memref<9x8x64xbf16, #tpu.memory_space<vmem>>, vector<1x8x64xbf16>
    %12 = vector.shape_cast %11 : vector<1x8x64xbf16> to vector<8x64xbf16>
    %cst_13 = arith.constant dense<0.000000e+00> : vector<256x64xf32>
    %13 = tpu.matmul %10, %12, %cst_13 {dimension_numbers = #tpu.dot_dimension_numbers<[1], [0], [0], [1], [0, 0, 1, 1], [], []>} : vector<256x8xbf16>, vector<8x64xbf16>, vector<256x64xf32> -> vector<256x64xf32>
    %14 = arith.addf %7, %13 : vector<256x64xf32>
    %c0_14 = arith.constant 0 : index
    %c0_15 = arith.constant 0 : index
    %c2 = arith.constant 2 : index
    %c0_16 = arith.constant 0 : index
    %15 = vector.load %arg1[%c0_14, %c0_15, %c2, %c0_16] : memref<1x18x18x8xbf16, #tpu.memory_space<vmem>>, vector<1x16x16x8xbf16>
    %16 = vector.shape_cast %15 : vector<1x16x16x8xbf16> to vector<16x16x8xbf16>
    %17 = vector.shape_cast %16 : vector<16x16x8xbf16> to vector<256x8xbf16>
    %c2_17 = arith.constant 2 : index
    %c0_18 = arith.constant 0 : index
    %c0_19 = arith.constant 0 : index
    %18 = vector.load %arg2[%c2_17, %c0_18, %c0_19] : memref<9x8x64xbf16, #tpu.memory_space<vmem>>, vector<1x8x64xbf16>
    %19 = vector.shape_cast %18 : vector<1x8x64xbf16> to vector<8x64xbf16>
    %cst_20 = arith.constant dense<0.000000e+00> : vector<256x64xf32>
    %20 = tpu.matmul %17, %19, %cst_20 {dimension_numbers = #tpu.dot_dimension_numbers<[1], [0], [0], [1], [0, 0, 1, 1], [], []>} : vector<256x8xbf16>, vector<8x64xbf16>, vector<256x64xf32> -> vector<256x64xf32>
    %21 = arith.addf %14, %20 : vector<256x64xf32>
    %c0_21 = arith.constant 0 : index
    %c1_22 = arith.constant 1 : index
    %c0_23 = arith.constant 0 : index
    %c0_24 = arith.constant 0 : index
    %22 = vector.load %arg1[%c0_21, %c1_22, %c0_23, %c0_24] : memref<1x18x18x8xbf16, #tpu.memory_space<vmem>>, vector<1x16x16x8xbf16>
    %23 = vector.shape_cast %22 : vector<1x16x16x8xbf16> to vector<16x16x8xbf16>
    %24 = vector.shape_cast %23 : vector<16x16x8xbf16> to vector<256x8xbf16>
    %c3 = arith.constant 3 : index
    %c0_25 = arith.constant 0 : index
    %c0_26 = arith.constant 0 : index
    %25 = vector.load %arg2[%c3, %c0_25, %c0_26] : memref<9x8x64xbf16, #tpu.memory_space<vmem>>, vector<1x8x64xbf16>
    %26 = vector.shape_cast %25 : vector<1x8x64xbf16> to vector<8x64xbf16>
    %cst_27 = arith.constant dense<0.000000e+00> : vector<256x64xf32>
    %27 = tpu.matmul %24, %26, %cst_27 {dimension_numbers = #tpu.dot_dimension_numbers<[1], [0], [0], [1], [0, 0, 1, 1], [], []>} : vector<256x8xbf16>, vector<8x64xbf16>, vector<256x64xf32> -> vector<256x64xf32>
    %28 = arith.addf %21, %27 : vector<256x64xf32>
    %c0_28 = arith.constant 0 : index
    %c1_29 = arith.constant 1 : index
    %c1_30 = arith.constant 1 : index
    %c0_31 = arith.constant 0 : index
    %29 = vector.load %arg1[%c0_28, %c1_29, %c1_30, %c0_31] : memref<1x18x18x8xbf16, #tpu.memory_space<vmem>>, vector<1x16x16x8xbf16>
    %30 = vector.shape_cast %29 : vector<1x16x16x8xbf16> to vector<16x16x8xbf16>
    %31 = vector.shape_cast %30 : vector<16x16x8xbf16> to vector<256x8xbf16>
    %c4 = arith.constant 4 : index
    %c0_32 = arith.constant 0 : index
    %c0_33 = arith.constant 0 : index
    %32 = vector.load %arg2[%c4, %c0_32, %c0_33] : memref<9x8x64xbf16, #tpu.memory_space<vmem>>, vector<1x8x64xbf16>
    %33 = vector.shape_cast %32 : vector<1x8x64xbf16> to vector<8x64xbf16>
    %cst_34 = arith.constant dense<0.000000e+00> : vector<256x64xf32>
    %34 = tpu.matmul %31, %33, %cst_34 {dimension_numbers = #tpu.dot_dimension_numbers<[1], [0], [0], [1], [0, 0, 1, 1], [], []>} : vector<256x8xbf16>, vector<8x64xbf16>, vector<256x64xf32> -> vector<256x64xf32>
    %35 = arith.addf %28, %34 : vector<256x64xf32>
    %c0_35 = arith.constant 0 : index
    %c1_36 = arith.constant 1 : index
    %c2_37 = arith.constant 2 : index
    %c0_38 = arith.constant 0 : index
    %36 = vector.load %arg1[%c0_35, %c1_36, %c2_37, %c0_38] : memref<1x18x18x8xbf16, #tpu.memory_space<vmem>>, vector<1x16x16x8xbf16>
    %37 = vector.shape_cast %36 : vector<1x16x16x8xbf16> to vector<16x16x8xbf16>
    %38 = vector.shape_cast %37 : vector<16x16x8xbf16> to vector<256x8xbf16>
    %c5 = arith.constant 5 : index
    %c0_39 = arith.constant 0 : index
    %c0_40 = arith.constant 0 : index
    %39 = vector.load %arg2[%c5, %c0_39, %c0_40] : memref<9x8x64xbf16, #tpu.memory_space<vmem>>, vector<1x8x64xbf16>
    %40 = vector.shape_cast %39 : vector<1x8x64xbf16> to vector<8x64xbf16>
    %cst_41 = arith.constant dense<0.000000e+00> : vector<256x64xf32>
    %41 = tpu.matmul %38, %40, %cst_41 {dimension_numbers = #tpu.dot_dimension_numbers<[1], [0], [0], [1], [0, 0, 1, 1], [], []>} : vector<256x8xbf16>, vector<8x64xbf16>, vector<256x64xf32> -> vector<256x64xf32>
    %42 = arith.addf %35, %41 : vector<256x64xf32>
    %c0_42 = arith.constant 0 : index
    %c2_43 = arith.constant 2 : index
    %c0_44 = arith.constant 0 : index
    %c0_45 = arith.constant 0 : index
    %43 = vector.load %arg1[%c0_42, %c2_43, %c0_44, %c0_45] : memref<1x18x18x8xbf16, #tpu.memory_space<vmem>>, vector<1x16x16x8xbf16>
    %44 = vector.shape_cast %43 : vector<1x16x16x8xbf16> to vector<16x16x8xbf16>
    %45 = vector.shape_cast %44 : vector<16x16x8xbf16> to vector<256x8xbf16>
    %c6 = arith.constant 6 : index
    %c0_46 = arith.constant 0 : index
    %c0_47 = arith.constant 0 : index
    %46 = vector.load %arg2[%c6, %c0_46, %c0_47] : memref<9x8x64xbf16, #tpu.memory_space<vmem>>, vector<1x8x64xbf16>
    %47 = vector.shape_cast %46 : vector<1x8x64xbf16> to vector<8x64xbf16>
    %cst_48 = arith.constant dense<0.000000e+00> : vector<256x64xf32>
    %48 = tpu.matmul %45, %47, %cst_48 {dimension_numbers = #tpu.dot_dimension_numbers<[1], [0], [0], [1], [0, 0, 1, 1], [], []>} : vector<256x8xbf16>, vector<8x64xbf16>, vector<256x64xf32> -> vector<256x64xf32>
    %49 = arith.addf %42, %48 : vector<256x64xf32>
    %c0_49 = arith.constant 0 : index
    %c2_50 = arith.constant 2 : index
    %c1_51 = arith.constant 1 : index
    %c0_52 = arith.constant 0 : index
    %50 = vector.load %arg1[%c0_49, %c2_50, %c1_51, %c0_52] : memref<1x18x18x8xbf16, #tpu.memory_space<vmem>>, vector<1x16x16x8xbf16>
    %51 = vector.shape_cast %50 : vector<1x16x16x8xbf16> to vector<16x16x8xbf16>
    %52 = vector.shape_cast %51 : vector<16x16x8xbf16> to vector<256x8xbf16>
    %c7 = arith.constant 7 : index
    %c0_53 = arith.constant 0 : index
    %c0_54 = arith.constant 0 : index
    %53 = vector.load %arg2[%c7, %c0_53, %c0_54] : memref<9x8x64xbf16, #tpu.memory_space<vmem>>, vector<1x8x64xbf16>
    %54 = vector.shape_cast %53 : vector<1x8x64xbf16> to vector<8x64xbf16>
    %cst_55 = arith.constant dense<0.000000e+00> : vector<256x64xf32>
    %55 = tpu.matmul %52, %54, %cst_55 {dimension_numbers = #tpu.dot_dimension_numbers<[1], [0], [0], [1], [0, 0, 1, 1], [], []>} : vector<256x8xbf16>, vector<8x64xbf16>, vector<256x64xf32> -> vector<256x64xf32>
    %56 = arith.addf %49, %55 : vector<256x64xf32>
    %c0_56 = arith.constant 0 : index
    %c2_57 = arith.constant 2 : index
    %c2_58 = arith.constant 2 : index
    %c0_59 = arith.constant 0 : index
    %57 = vector.load %arg1[%c0_56, %c2_57, %c2_58, %c0_59] : memref<1x18x18x8xbf16, #tpu.memory_space<vmem>>, vector<1x16x16x8xbf16>
    %58 = vector.shape_cast %57 : vector<1x16x16x8xbf16> to vector<16x16x8xbf16>
    %59 = vector.shape_cast %58 : vector<16x16x8xbf16> to vector<256x8xbf16>
    %c8 = arith.constant 8 : index
    %c0_60 = arith.constant 0 : index
    %c0_61 = arith.constant 0 : index
    %60 = vector.load %arg2[%c8, %c0_60, %c0_61] : memref<9x8x64xbf16, #tpu.memory_space<vmem>>, vector<1x8x64xbf16>
    %61 = vector.shape_cast %60 : vector<1x8x64xbf16> to vector<8x64xbf16>
    %cst_62 = arith.constant dense<0.000000e+00> : vector<256x64xf32>
    %62 = tpu.matmul %59, %61, %cst_62 {dimension_numbers = #tpu.dot_dimension_numbers<[1], [0], [0], [1], [0, 0, 1, 1], [], []>} : vector<256x8xbf16>, vector<8x64xbf16>, vector<256x64xf32> -> vector<256x64xf32>
    %63 = arith.addf %56, %62 : vector<256x64xf32>
    %c0_63 = arith.constant 0 : index
    %c0_64 = arith.constant 0 : index
    %64 = vector.load %arg3[%c0_63, %c0_64] : memref<1x64xf32, #tpu.memory_space<vmem>>, vector<1x64xf32>
    %65 = vector.broadcast %64 : vector<1x64xf32> to vector<256x64xf32>
    %66 = arith.addf %63, %65 : vector<256x64xf32>
    %cst_65 = arith.constant 0.000000e+00 : f32
    %67 = vector.broadcast %cst_65 : f32 to vector<256x64xf32>
    %68 = arith.maximumf %66, %67 : vector<256x64xf32>
    %69 = vector.shape_cast %68 : vector<256x64xf32> to vector<16x16x64xf32>
    %c0_66 = arith.constant 0 : index
    %c0_67 = arith.constant 0 : index
    %c0_68 = arith.constant 0 : index
    %c0_69 = arith.constant 0 : index
    %70 = vector.load %arg4[%c0_66, %c0_67, %c0_68, %c0_69] : memref<1x16x16x64xf32, #tpu.memory_space<vmem>>, vector<1x16x16x64xf32>
    %71 = vector.shape_cast %70 : vector<1x16x16x64xf32> to vector<16x16x64xf32>
    %72 = vector.shape_cast %69 : vector<16x16x64xf32> to vector<1x16x16x64xf32>
    tpu.vector_store %arg4[%c0_66, %c0_67, %c0_68, %c0_69], %72 {strides = array<i32>} : memref<1x16x16x64xf32, #tpu.memory_space<vmem>>, vector<1x16x16x64xf32>,
    return
  }
  func.func @transform_0(%arg0: i32) -> (i32, i32, i32, i32) {
    %c0_i32 = arith.constant 0 : i32
    %c0_i32_0 = arith.constant 0 : i32
    %c0_i32_1 = arith.constant 0 : i32
    %c0_i32_2 = arith.constant 0 : i32
    return %arg0, %c0_i32, %c0_i32_0, %c0_i32_1 : i32, i32, i32, i32
  }
  func.func @transform_1(%arg0: i32) -> (i32, i32, i32) {
    %c0_i32 = arith.constant 0 : i32
    %c0_i32_0 = arith.constant 0 : i32
    %c0_i32_1 = arith.constant 0 : i32
    %c0_i32_2 = arith.constant 0 : i32
    return %c0_i32, %c0_i32_0, %c0_i32_1 : i32, i32, i32
  }
  func.func @transform_2(%arg0: i32) -> (i32, i32) {
    %c0_i32 = arith.constant 0 : i32
    %c0_i32_0 = arith.constant 0 : i32
    %c0_i32_1 = arith.constant 0 : i32
    return %c0_i32, %c0_i32_0 : i32, i32
  }
  func.func @transform_3(%arg0: i32) -> (i32, i32, i32, i32) {
    %c0_i32 = arith.constant 0 : i32
    %c0_i32_0 = arith.constant 0 : i32
    %c0_i32_1 = arith.constant 0 : i32
    %c0_i32_2 = arith.constant 0 : i32
    return %arg0, %c0_i32, %c0_i32_0, %c0_i32_1 : i32, i32, i32, i32
  }
}

</mosaic_0001>

<llo_original>
// kernel: tpu_custom_call.1
$region0: #{tpu_custom_call.1}
  #allocation0 [shape = 'u32[]', space=smem, size = 0x4, offset = 0x4, fixed_abs, tag = 'smem constant byte address 0x4 - core index']
  #allocation1 [shape = 'u32[144,128]{1,0:T(1,128)}', space=vmem, size = 0x12000, scoped, tag = 'internal scratch']
  %s0 = inlined_call_operand.vmem [shape: bf16[2,18,18,8], index: 0, kind: input, shape index: {}]
  %s1 = inlined_call_operand.vmem [shape: bf16[9,8,64], index: 1, kind: input, shape index: {}]
  %s2 = inlined_call_operand.vmem [shape: f32[1,64], index: 2, kind: input, shape index: {}]
  %s3 = inlined_call_operand.hbm [shape: f32[2,16,16,64], index: 3, kind: output, shape index: {}]
  %s4 = sld [smem:[#allocation0]]
  $region45: #{tpu_custom_call.1} parent=0
    _
  %s6 = ssub.s32 1, %s4
  %s7 = scalar_select 0, %s6, %s4
  $region1: #{tpu_custom_call.1} parent=0
    #allocation2 [shape = 'u8[262144]{0}', space=vmem, size = 0x40000, scoped, tag = 'output window, operand 0']
    #allocation3 [shape = 's32[2]{0}', space=sflag, size = 0x8, scoped, tag = 'scoped memory for tpu_custom_call.1']
    %8 = vsyncpa [#allocation3], 0
    %s9 = scalar_lea.sflag [#allocation3], 1
    %10 = vsyncpa %s9, 0
    loop: start=0, step=1, limit=4
    $region2: #{tpu_custom_call.1} parent=1 // loop_pre_header
      _
    $region3: #{tpu_custom_call.1} parent=1 // loop_header
      %s12 = sphi 0, %s16
      %p13 = scmp.ge.s32.totalorder %s12, 4
      %s22 = sphi 0, %s24
      %s25 = sphi 0, %s22
      %s26 = sphi 0, %s25
      %s42 = sphi 0, %s26
      %s46 = sphi 0, %s46
      %s48 = sphi 0, %s46
      %s49 = sphi 0, %s48
      %s63 = sphi 0, %s49
      %s67 = sphi 0, %s67
      %s69 = sphi 0, %s67
      %s70 = sphi 0, %s69
      %s84 = sphi 0, %s70
      %s90 = sphi 0, %s92
      %s93 = sphi 0, %s90
      %s94 = sphi 0, %s93
      %s110 = sphi 0, %s94
    $region4: #{tpu_custom_call.1} parent=1 // loop_header_branch
      %15 = sbr.rel (%p13) target = $region8
    $region5: #{tpu_custom_call.1} parent=1 // loop_body
      %s17 = ssub.s32 %s12, 1
      %s18 = ssub.s32 %s12, 2
      %s19 = sadd.s32 %s12, 1
      %s20 = ssub.s32 %s12, %s19
      %p21 = scmp.eq.s32.totalorder %s20, 0
      %s23 = sadd.s32 %s22, 1
      %s24 = scalar_select %p21, %s22, %s23
      %p27 = pneg %p21
      %p28 = scmp.eq.s32.totalorder %s12, 1
      %p29 = por %p27, %p28
      %p30 = scmp.ne.s32.totalorder %s22, %s25
      %p31 = scmp.eq.s32.totalorder %s12, 0
      %p32 = por %p30, %p31
      %p33 = scmp.ne.s32.totalorder %s22, %s25
      %p34 = scmp.eq.s32.totalorder %s17, 1
      %p35 = por %p33, %p34
      %p36 = scmp.ne.s32.totalorder %s25, %s26
      %p37 = scmp.eq.s32.totalorder %s17, 0
      %p38 = por %p36, %p37
      %p39 = scmp.ne.s32.totalorder %s25, %s26
      %p40 = scmp.eq.s32.totalorder %s18, 1
      %p41 = por %p39, %p40
      %p43 = scmp.ne.s32.totalorder %s26, %s42
      %p44 = scmp.eq.s32.totalorder %s18, 0
      %p45 = por %p43, %p44
      %s47 = sadd.s32 %s46, 1
      %p50 = scmp.eq.s32.totalorder %s12, 1
      %p51 = scmp.ne.s32.totalorder %s46, %s48
      %p52 = scmp.eq.s32.totalorder %s12, 0
      %p53 = por %p51, %p52
      %p54 = scmp.ne.s32.totalorder %s46, %s48
      %p55 = scmp.eq.s32.totalorder %s17, 1
      %p56 = por %p54, %p55
      %p57 = scmp.ne.s32.totalorder %s48, %s49
      %p58 = scmp.eq.s32.totalorder %s17, 0
      %p59 = por %p57, %p58
      %p60 = scmp.ne.s32.totalorder %s48, %s49
      %p61 = scmp.eq.s32.totalorder %s18, 1
      %p62 = por %p60, %p61
      %p64 = scmp.ne.s32.totalorder %s49, %s63
      %p65 = scmp.eq.s32.totalorder %s18, 0
      %p66 = por %p64, %p65
      %s68 = sadd.s32 %s67, 1
      %p71 = scmp.eq.s32.totalorder %s12, 1
      %p72 = scmp.ne.s32.totalorder %s67, %s69
      %p73 = scmp.eq.s32.totalorder %s12, 0
      %p74 = por %p72, %p73
      %p75 = scmp.ne.s32.totalorder %s67, %s69
      %p76 = scmp.eq.s32.totalorder %s17, 1
      %p77 = por %p75, %p76
      %p78 = scmp.ne.s32.totalorder %s69, %s70
      %p79 = scmp.eq.s32.totalorder %s17, 0
      %p80 = por %p78, %p79
      %p81 = scmp.ne.s32.totalorder %s69, %s70
      %p82 = scmp.eq.s32.totalorder %s18, 1
      %p83 = por %p81, %p82
      %p85 = scmp.ne.s32.totalorder %s70, %s84
      %p86 = scmp.eq.s32.totalorder %s18, 0
      %p87 = por %p85, %p86
      %s88 = ssub.s32 %s12, %s19
      %p89 = scmp.eq.s32.totalorder %s88, 0
      %s91 = sadd.s32 %s90, 1
      %s92 = scalar_select %p89, %s90, %s91
      %p95 = pneg %p89
      %p96 = scmp.eq.s32.totalorder %s12, 1
      %p97 = por %p95, %p96
      %p98 = scmp.ne.s32.totalorder %s90, %s93
      %p99 = scmp.eq.s32.totalorder %s12, 0
      %p100 = por %p98, %p99
      %p101 = scmp.ne.s32.totalorder %s90, %s93
      %p102 = scmp.eq.s32.totalorder %s17, 1
      %p103 = por %p101, %p102
      %p104 = scmp.ne.s32.totalorder %s93, %s94
      %p105 = scmp.eq.s32.totalorder %s17, 0
      %p106 = por %p104, %p105
      %p107 = scmp.ne.s32.totalorder %s93, %s94
      %p108 = scmp.eq.s32.totalorder %s18, 1
      %p109 = por %p107, %p108
      %p111 = scmp.ne.s32.totalorder %s94, %s110
      %p112 = scmp.eq.s32.totalorder %s18, 0
      %p113 = por %p111, %p112
      %p114 = scmp.le.s32.totalorder 1, %s12
      %p115 = scmp.lt.s32.totalorder %s12, 3
      %p116 = pnand %p114, %p115
      %p117 = pneg %p116
      // Predicated region
      $region9: #{tpu_custom_call.1} parent=5 // pred_check
        _
      $region10: #{tpu_custom_call.1} parent=5 // pred_check_branch
        %119 = sbr.rel (%p116) target = $region12
      $region11: #{tpu_custom_call.1} parent=5 // pred_region
        %s120 = ssub.s32 %s12, 1
        // Predicated region
        $region13: #{tpu_custom_call.1} parent=11 // pred_check
          %p121 = pneg %p59
        $region14: #{tpu_custom_call.1} parent=11 // pred_check_branch
          %123 = sbr.rel (%p121) target = $region16
        $region15: #{tpu_custom_call.1} parent=11 // pred_region
          _
        $region16: #{tpu_custom_call.1} parent=11 // pred_fallthru
          _
        // Predicated region
        $region17: #{tpu_custom_call.1} parent=11 // pred_check
          %p124 = pneg %p80
        $region18: #{tpu_custom_call.1} parent=11 // pred_check_branch
          %126 = sbr.rel (%p124) target = $region20
        $region19: #{tpu_custom_call.1} parent=11 // pred_region
          _
        $region20: #{tpu_custom_call.1} parent=11 // pred_fallthru
          _
      $region12: #{tpu_custom_call.1} parent=5 // pred_fallthru
        _
      %p127 = scmp.lt.s32.totalorder %s12, 2
      // Predicated region
      $region21: #{tpu_custom_call.1} parent=5 // pred_check
        %p128 = pneg %p127
      $region22: #{tpu_custom_call.1} parent=5 // pred_check_branch
        %130 = sbr.rel (%p128) target = $region24
      $region23: #{tpu_custom_call.1} parent=5 // pred_region
        // Predicated region
        $region25: #{tpu_custom_call.1} parent=23 // pred_check
          %p131 = pneg %p32
        $region26: #{tpu_custom_call.1} parent=23 // pred_check_branch
          %133 = sbr.rel (%p131) target = $region28
        $region27: #{tpu_custom_call.1} parent=23 // pred_region
          %p134 = scmp.lt.s32.totalorder %s12, 1
          %s135 = scalar_select %p134, %s12, 1
          %s136 = smul.addr %s135, 54
          %s137 = smul.addr %s136, 4
          %s138 = scalar_lea.vmem %s0, %s137
        $region28: #{tpu_custom_call.1} parent=23 // pred_fallthru
          _
      $region24: #{tpu_custom_call.1} parent=5 // pred_fallthru
        _
      %p139 = scmp.le.s32.totalorder 1, %s12
      %p140 = scmp.lt.s32.totalorder %s12, 3
      %p141 = pnand %p139, %p140
      %p142 = pneg %p141
      // Predicated region
      $region29: #{tpu_custom_call.1} parent=5 // pred_check
        _
      $region30: #{tpu_custom_call.1} parent=5 // pred_check_branch
        %144 = sbr.rel (%p141) target = $region32
      $region31: #{tpu_custom_call.1} parent=5 // pred_region
        %s145 = ssub.s32 %s12, 1
        %p146 = scmp.lt.s32.totalorder %s17, 1
        %s147 = scalar_select %p146, %s17, 1
        %s148 = smul.addr %s147, 54
        %s149 = smul.addr %s148, 4
        %s150 = scalar_lea.vmem %s0, %s149
        %p151 = pneg %p38
        %p152 = pneg %p35
        %p153 = pneg %p59
        %p154 = pneg %p56
        %p155 = pneg %p80
        %p156 = pneg %p77
        %p157 = pneg %p106
        %p158 = pneg %p103
        %s159 = sand.u32 %s93, 1
        %s160 = scalar_lea.sflag [#allocation3], %s159
        %s161 = sand.u32 %s93, 1
        %s162 = smul.addr %s161, 256
        %s163 = scalar_lea.vmem [#allocation2], %s162
        %p164 = scmp.lt.s32.totalorder %s17, 1
        %s165 = scalar_select %p164, %s17, 1
        %s166 = smul.addr %s165, 54
        %s167 = smul.addr %s166, 4
        %s168 = scalar_lea.vmem %s0, %s167
        %v170 = vld [vmem:[%s168] sm:$0xf]
        %v171 = vld [vmem:[%s168 + $0x4] sm:$0xf]
        %v172 = vld [vmem:[%s168 + $0xc] sm:$0xf]
        %v173 = vld [vmem:[%s168 + $0x10] sm:$0xf]
        %v174 = vld [vmem:[%s168 + $0x18] sm:$0xf]
        %v175 = vld [vmem:[%s168 + $0x1c] sm:$0xf]
        %v176 = vld [vmem:[%s168 + $0x24] sm:$0xf]
        %v177 = vld [vmem:[%s168 + $0x28] sm:$0xf]
        %v178 = vld [vmem:[%s168 + $0x30] sm:$0xf]
        %v179 = vld [vmem:[%s168 + $0x34] sm:$0xf]
        %v180 = vld [vmem:[%s168 + $0x3c] sm:$0xf]
        %v181 = vld [vmem:[%s168 + $0x40] sm:$0xf]
        %v182 = vld [vmem:[%s168 + $0x48] sm:$0xf]
        %v183 = vld [vmem:[%s168 + $0x4c] sm:$0xf]
        %v184 = vld [vmem:[%s168 + $0x54] sm:$0xf]
        %v185 = vld [vmem:[%s168 + $0x58] sm:$0xf]
        %v186 = vld [vmem:[%s168 + $0x60] sm:$0xf]
        %v187 = vld [vmem:[%s168 + $0x64] sm:$0xf]
        %v188 = vld [vmem:[%s168 + $0x6c] sm:$0xf]
        %v189 = vld [vmem:[%s168 + $0x70] sm:$0xf]
        %v190 = vld [vmem:[%s168 + $0x78] sm:$0xf]
        %v191 = vld [vmem:[%s168 + $0x7c] sm:$0xf]
        %v192 = vld [vmem:[%s168 + $0x84] sm:$0xf]
        %v193 = vld [vmem:[%s168 + $0x88] sm:$0xf]
        %v194 = vld [vmem:[%s168 + $0x90] sm:$0xf]
        %v195 = vld [vmem:[%s168 + $0x94] sm:$0xf]
        %v196 = vld [vmem:[%s168 + $0x9c] sm:$0xf]
        %v197 = vld [vmem:[%s168 + $0xa0] sm:$0xf]
        %v198 = vld [vmem:[%s168 + $0xa8] sm:$0xf]
        %v199 = vld [vmem:[%s168 + $0xac] sm:$0xf]
        %v200 = vld [vmem:[%s168 + $0xb4] sm:$0xf]
        %v201 = vld [vmem:[%s168 + $0xb8] sm:$0xf]
        %v202 = vld [vmem:[%s1] sm:$0xf]
        %v203 = vld [vmem:[%s168 + $0x8] sm:$0x1]
        %v204 = vld [vmem:[%s168 + $0x14] sm:$0x1]
        %v205 = vld [vmem:[%s168 + $0x20] sm:$0x1]
        %v206 = vld [vmem:[%s168 + $0x2c] sm:$0x1]
        %v207 = vld [vmem:[%s168 + $0x38] sm:$0x1]
        %v208 = vld [vmem:[%s168 + $0x44] sm:$0x1]
        %v209 = vld [vmem:[%s168 + $0x50] sm:$0x1]
        %v210 = vld [vmem:[%s168 + $0x5c] sm:$0x1]
        %v211 = vld [vmem:[%s168 + $0x68] sm:$0x1]
        %v212 = vld [vmem:[%s168 + $0x74] sm:$0x1]
        %v213 = vld [vmem:[%s168 + $0x80] sm:$0x1]
        %v214 = vld [vmem:[%s168 + $0x8c] sm:$0x1]
        %v215 = vld [vmem:[%s168 + $0x98] sm:$0x1]
        %v216 = vld [vmem:[%s168 + $0xa4] sm:$0x1]
        %v217 = vld [vmem:[%s168 + $0xb0] sm:$0x1]
        %v218 = vld [vmem:[%s168 + $0xbc] sm:$0x1]
        %vm219 = vsmask.f32 3328
        %vm220 = vsmask.f32 7440
        %vm221 = vmor %vm219, %vm220
        %v223 = vshrl.u32 %v170, 16
        %v225 = vrot.slane %v223, 4
        %v226 = vshll.u32 %v170, 16
        %v228 = vrot.slane %v226, 5
        %v229 = vor.u32 %v225, %v228
        %v230 = vrot.slane %v229, 4
        %v232 = vshll.u32 %v171, 16
        %v234 = vrot.slane %v232, 5
        %v235 = vsel %vm221, %v230, %v234
        %v236 = vshrl.u32 %v171, 16
        %v238 = vrot.slane %v236, 4
        %v239 = vor.u32 %v238, %v234
        %v240 = vrot.slane %v239, 4
        %v242 = vshll.u32 %v203, 16
        %v244 = vrot.slane %v242, 5
        %v245 = vsel %vm221, %v240, %v244
        %v247 = vshrl.u32 %v172, 16
        %v249 = vrot.slane %v247, 4
        %v250 = vshll.u32 %v172, 16
        %v252 = vrot.slane %v250, 5
        %v253 = vor.u32 %v249, %v252
        %v254 = vrot.slane %v253, 4
        %v256 = vshll.u32 %v173, 16
        %v258 = vrot.slane %v256, 5
        %v259 = vsel %vm221, %v254, %v258
        %v260 = vshrl.u32 %v173, 16
        %v262 = vrot.slane %v260, 4
        %v263 = vor.u32 %v262, %v258
        %v264 = vrot.slane %v263, 4
        %v266 = vshll.u32 %v204, 16
        %v268 = vrot.slane %v266, 5
        %v269 = vsel %vm221, %v264, %v268
        %v271 = vshrl.u32 %v174, 16
        %v273 = vrot.slane %v271, 4
        %v274 = vshll.u32 %v174, 16
        %v276 = vrot.slane %v274, 5
        %v277 = vor.u32 %v273, %v276
        %v278 = vrot.slane %v277, 4
        %v280 = vshll.u32 %v175, 16
        %v282 = vrot.slane %v280, 5
        %v283 = vsel %vm221, %v278, %v282
        %v284 = vshrl.u32 %v175, 16
        %v286 = vrot.slane %v284, 4
        %v287 = vor.u32 %v286, %v282
        %v288 = vrot.slane %v287, 4
        %v290 = vshll.u32 %v205, 16
        %v292 = vrot.slane %v290, 5
        %v293 = vsel %vm221, %v288, %v292
        %v295 = vshrl.u32 %v176, 16
        %v297 = vrot.slane %v295, 4
        %v298 = vshll.u32 %v176, 16
        %v300 = vrot.slane %v298, 5
        %v301 = vor.u32 %v297, %v300
        %v302 = vrot.slane %v301, 4
        %v304 = vshll.u32 %v177, 16
        %v306 = vrot.slane %v304, 5
        %v307 = vsel %vm221, %v302, %v306
        %v308 = vshrl.u32 %v177, 16
        %v310 = vrot.slane %v308, 4
        %v311 = vor.u32 %v310, %v306
        %v312 = vrot.slane %v311, 4
        %v314 = vshll.u32 %v206, 16
        %v316 = vrot.slane %v314, 5
        %v317 = vsel %vm221, %v312, %v316
        %v319 = vshrl.u32 %v178, 16
        %v321 = vrot.slane %v319, 4
        %v322 = vshll.u32 %v178, 16
        %v324 = vrot.slane %v322, 5
        %v325 = vor.u32 %v321, %v324
        %v326 = vrot.slane %v325, 4
        %v328 = vshll.u32 %v179, 16
        %v330 = vrot.slane %v328, 5
        %v331 = vsel %vm221, %v326, %v330
        %v332 = vshrl.u32 %v179, 16
        %v334 = vrot.slane %v332, 4
        %v335 = vor.u32 %v334, %v330
        %v336 = vrot.slane %v335, 4
        %v338 = vshll.u32 %v207, 16
        %v340 = vrot.slane %v338, 5
        %v341 = vsel %vm221, %v336, %v340
        %v343 = vshrl.u32 %v180, 16
        %v345 = vrot.slane %v343, 4
        %v346 = vshll.u32 %v180, 16
        %v348 = vrot.slane %v346, 5
        %v349 = vor.u32 %v345, %v348
        %v350 = vrot.slane %v349, 4
        %v352 = vshll.u32 %v181, 16
        %v354 = vrot.slane %v352, 5
        %v355 = vsel %vm221, %v350, %v354
        %v356 = vshrl.u32 %v181, 16
        %v358 = vrot.slane %v356, 4
        %v359 = vor.u32 %v358, %v354
        %v360 = vrot.slane %v359, 4
        %v362 = vshll.u32 %v208, 16
        %v364 = vrot.slane %v362, 5
        %v365 = vsel %vm221, %v360, %v364
        %v367 = vshrl.u32 %v182, 16
        %v369 = vrot.slane %v367, 4
        %v370 = vshll.u32 %v182, 16
        %v372 = vrot.slane %v370, 5
        %v373 = vor.u32 %v369, %v372
        %v374 = vrot.slane %v373, 4
        %v376 = vshll.u32 %v183, 16
        %v378 = vrot.slane %v376, 5
        %v379 = vsel %vm221, %v374, %v378
        %v380 = vshrl.u32 %v183, 16
        %v382 = vrot.slane %v380, 4
        %v383 = vor.u32 %v382, %v378
        %v384 = vrot.slane %v383, 4
        %v386 = vshll.u32 %v209, 16
        %v388 = vrot.slane %v386, 5
        %v389 = vsel %vm221, %v384, %v388
        %v391 = vshrl.u32 %v184, 16
        %v393 = vrot.slane %v391, 4
        %v394 = vshll.u32 %v184, 16
        %v396 = vrot.slane %v394, 5
        %v397 = vor.u32 %v393, %v396
        %v398 = vrot.slane %v397, 4
        %v400 = vshll.u32 %v185, 16
        %v402 = vrot.slane %v400, 5
        %v403 = vsel %vm221, %v398, %v402
        %v404 = vshrl.u32 %v185, 16
        %v406 = vrot.slane %v404, 4
        %v407 = vor.u32 %v406, %v402
        %v408 = vrot.slane %v407, 4
        %v410 = vshll.u32 %v210, 16
        %v412 = vrot.slane %v410, 5
        %v413 = vsel %vm221, %v408, %v412
        %v415 = vshrl.u32 %v186, 16
        %v417 = vrot.slane %v415, 4
        %v418 = vshll.u32 %v186, 16
        %v420 = vrot.slane %v418, 5
        %v421 = vor.u32 %v417, %v420
        %v422 = vrot.slane %v421, 4
        %v424 = vshll.u32 %v187, 16
        %v426 = vrot.slane %v424, 5
        %v427 = vsel %vm221, %v422, %v426
        %v428 = vshrl.u32 %v187, 16
        %v430 = vrot.slane %v428, 4
        %v431 = vor.u32 %v430, %v426
        %v432 = vrot.slane %v431, 4
        %v434 = vshll.u32 %v211, 16
        %v436 = vrot.slane %v434, 5
        %v437 = vsel %vm221, %v432, %v436
        %v439 = vshrl.u32 %v188, 16
        %v441 = vrot.slane %v439, 4
        %v442 = vshll.u32 %v188, 16
        %v444 = vrot.slane %v442, 5
        %v445 = vor.u32 %v441, %v444
        %v446 = vrot.slane %v445, 4
        %v448 = vshll.u32 %v189, 16
        %v450 = vrot.slane %v448, 5
        %v451 = vsel %vm221, %v446, %v450
        %v452 = vshrl.u32 %v189, 16
        %v454 = vrot.slane %v452, 4
        %v455 = vor.u32 %v454, %v450
        %v456 = vrot.slane %v455, 4
        %v458 = vshll.u32 %v212, 16
        %v460 = vrot.slane %v458, 5
        %v461 = vsel %vm221, %v456, %v460
        %v463 = vshrl.u32 %v190, 16
        %v465 = vrot.slane %v463, 4
        %v466 = vshll.u32 %v190, 16
        %v468 = vrot.slane %v466, 5
        %v469 = vor.u32 %v465, %v468
        %v470 = vrot.slane %v469, 4
        %v472 = vshll.u32 %v191, 16
        %v474 = vrot.slane %v472, 5
        %v475 = vsel %vm221, %v470, %v474
        %v476 = vshrl.u32 %v191, 16
        %v478 = vrot.slane %v476, 4
        %v479 = vor.u32 %v478, %v474
        %v480 = vrot.slane %v479, 4
        %v482 = vshll.u32 %v213, 16
        %v484 = vrot.slane %v482, 5
        %v485 = vsel %vm221, %v480, %v484
        %v487 = vshrl.u32 %v192, 16
        %v489 = vrot.slane %v487, 4
        %v490 = vshll.u32 %v192, 16
        %v492 = vrot.slane %v490, 5
        %v493 = vor.u32 %v489, %v492
        %v494 = vrot.slane %v493, 4
        %v496 = vshll.u32 %v193, 16
        %v498 = vrot.slane %v496, 5
        %v499 = vsel %vm221, %v494, %v498
        %v500 = vshrl.u32 %v193, 16
        %v502 = vrot.slane %v500, 4
        %v503 = vor.u32 %v502, %v498
        %v504 = vrot.slane %v503, 4
        %v506 = vshll.u32 %v214, 16
        %v508 = vrot.slane %v506, 5
        %v509 = vsel %vm221, %v504, %v508
        %v511 = vshrl.u32 %v194, 16
        %v513 = vrot.slane %v511, 4
        %v514 = vshll.u32 %v194, 16
        %v516 = vrot.slane %v514, 5
        %v517 = vor.u32 %v513, %v516
        %v518 = vrot.slane %v517, 4
        %v520 = vshll.u32 %v195, 16
        %v522 = vrot.slane %v520, 5
        %v523 = vsel %vm221, %v518, %v522
        %v524 = vshrl.u32 %v195, 16
        %v526 = vrot.slane %v524, 4
        %v527 = vor.u32 %v526, %v522
        %v528 = vrot.slane %v527, 4
        %v530 = vshll.u32 %v215, 16
        %v532 = vrot.slane %v530, 5
        %v533 = vsel %vm221, %v528, %v532
        %v535 = vshrl.u32 %v196, 16
        %v537 = vrot.slane %v535, 4
        %v538 = vshll.u32 %v196, 16
        %v540 = vrot.slane %v538, 5
        %v541 = vor.u32 %v537, %v540
        %v542 = vrot.slane %v541, 4
        %v544 = vshll.u32 %v197, 16
        %v546 = vrot.slane %v544, 5
        %v547 = vsel %vm221, %v542, %v546
        %v548 = vshrl.u32 %v197, 16
        %v550 = vrot.slane %v548, 4
        %v551 = vor.u32 %v550, %v546
        %v552 = vrot.slane %v551, 4
        %v554 = vshll.u32 %v216, 16
        %v556 = vrot.slane %v554, 5
        %v557 = vsel %vm221, %v552, %v556
        %v559 = vshrl.u32 %v198, 16
        %v561 = vrot.slane %v559, 4
        %v562 = vshll.u32 %v198, 16
        %v564 = vrot.slane %v562, 5
        %v565 = vor.u32 %v561, %v564
        %v566 = vrot.slane %v565, 4
        %v568 = vshll.u32 %v199, 16
        %v570 = vrot.slane %v568, 5
        %v571 = vsel %vm221, %v566, %v570
        %v572 = vshrl.u32 %v199, 16
        %v574 = vrot.slane %v572, 4
        %v575 = vor.u32 %v574, %v570
        %v576 = vrot.slane %v575, 4
        %v578 = vshll.u32 %v217, 16
        %v580 = vrot.slane %v578, 5
        %v581 = vsel %vm221, %v576, %v580
        %v583 = vshrl.u32 %v200, 16
        %v585 = vrot.slane %v583, 4
        %v586 = vshll.u32 %v200, 16
        %v588 = vrot.slane %v586, 5
        %v589 = vor.u32 %v585, %v588
        %v590 = vrot.slane %v589, 4
        %v592 = vshll.u32 %v201, 16
        %v594 = vrot.slane %v592, 5
        %v595 = vsel %vm221, %v590, %v594
        %v596 = vshrl.u32 %v201, 16
        %v598 = vrot.slane %v596, 4
        %v599 = vor.u32 %v598, %v594
        %v600 = vrot.slane %v599, 4
        %v602 = vshll.u32 %v218, 16
        %v604 = vrot.slane %v602, 5
        %v605 = vsel %vm221, %v600, %v604
        %s606 = scalar_lea.vmem %s1, 4
        %v607 = vld [vmem:[%s606] sm:$0xf]
        %v608 = vunpack.c.l.b16 %v235
        %v609 = vunpack.c.l.b16 %v245
        %v610 = vunpack.c.l.b16 %v259
        %v611 = vunpack.c.l.b16 %v269
        %v612 = vunpack.c.l.b16 %v283
        %v613 = vunpack.c.l.b16 %v293
        %v614 = vunpack.c.l.b16 %v307
        %v615 = vunpack.c.l.b16 %v317
        %v616 = vunpack.c.l.b16 %v331
        %v617 = vunpack.c.l.b16 %v341
        %v618 = vunpack.c.l.b16 %v355
        %v619 = vunpack.c.l.b16 %v365
        %v620 = vunpack.c.l.b16 %v379
        %v621 = vunpack.c.l.b16 %v389
        %v622 = vunpack.c.l.b16 %v403
        %v623 = vunpack.c.l.b16 %v413
        %v624 = vunpack.c.l.b16 %v427
        %v625 = vunpack.c.l.b16 %v437
        %v626 = vunpack.c.l.b16 %v451
        %v627 = vunpack.c.l.b16 %v461
        %v628 = vunpack.c.l.b16 %v475
        %v629 = vunpack.c.l.b16 %v485
        %v630 = vunpack.c.l.b16 %v499
        %v631 = vunpack.c.l.b16 %v509
        %v632 = vunpack.c.l.b16 %v523
        %v633 = vunpack.c.l.b16 %v533
        %v634 = vunpack.c.l.b16 %v547
        %v635 = vunpack.c.l.b16 %v557
        %v636 = vunpack.c.l.b16 %v571
        %v637 = vunpack.c.l.b16 %v581
        %v638 = vunpack.c.l.b16 %v595
        %v639 = vunpack.c.l.b16 %v605
        %v640 = vpack.c.b16 %v609, %v608
        %v641 = vpack.c.b16 %v611, %v610
        %v642 = vpack.c.b16 %v613, %v612
        %v643 = vpack.c.b16 %v615, %v614
        %v644 = vpack.c.b16 %v617, %v616
        %v645 = vpack.c.b16 %v619, %v618
        %v646 = vpack.c.b16 %v621, %v620
        %v647 = vpack.c.b16 %v623, %v622
        %v648 = vpack.c.b16 %v625, %v624
        %v649 = vpack.c.b16 %v627, %v626
        %v650 = vpack.c.b16 %v629, %v628
        %v651 = vpack.c.b16 %v631, %v630
        %v652 = vpack.c.b16 %v633, %v632
        %v653 = vpack.c.b16 %v635, %v634
        %v654 = vpack.c.b16 %v637, %v636
        %v655 = vpack.c.b16 %v639, %v638
        %vm656 = vcmask 64512
        %v658 = vsel %vm656, %v640, 0
        %v661 = vsel %vm656, %v641, 0
        %v664 = vsel %vm656, %v642, 0
        %v667 = vsel %vm656, %v643, 0
        %v670 = vsel %vm656, %v644, 0
        %v673 = vsel %vm656, %v645, 0
        %v676 = vsel %vm656, %v646, 0
        %v679 = vsel %vm656, %v647, 0
        %v682 = vsel %vm656, %v648, 0
        %v685 = vsel %vm656, %v649, 0
        %v688 = vsel %vm656, %v650, 0
        %v691 = vsel %vm656, %v651, 0
        %v694 = vsel %vm656, %v652, 0
        %v697 = vsel %vm656, %v653, 0
        %v700 = vsel %vm656, %v654, 0
        %v703 = vsel %vm656, %v655, 0
        %vm705 = vcmask 1043456
        %v707 = vsel %vm705, %v607, 0
        %709 = vmatprep.subr.bf16.mxu0 0
        %710 = vmatpush1.bf16.msra.mxu0 %v707
        %711 = vmatprep.subr.bf16.mxu0 0
        %712 = vmatpush1.bf16.msra.mxu0 0
        %713 = vmatprep.subr.bf16.mxu0 0
        %714 = vmatpush1.bf16.msra.mxu0 0
        %715 = vmatprep.subr.bf16.mxu0 0
        %716 = vmatpush1.bf16.msra.mxu0 0
        %717 = vmatprep.subr.bf16.mxu0 0
        %718 = vmatpush1.bf16.msra.mxu0 0
        %719 = vmatprep.subr.bf16.mxu0 0
        %720 = vmatpush1.bf16.msra.mxu0 0
        %721 = vmatprep.subr.bf16.mxu0 0
        %722 = vmatpush1.bf16.msra.mxu0 0
        %723 = vmatprep.subr.bf16.mxu0 0
        %724 = vmatpush1.bf16.msra.mxu0 0
        %725 = vmatprep.subr.bf16.mxu0 0
        %726 = vmatpush1.bf16.msra.mxu0 0
        %727 = vmatprep.subr.bf16.mxu0 0
        %728 = vmatpush1.bf16.msra.mxu0 0
        %729 = vmatprep.subr.bf16.mxu0 0
        %730 = vmatpush1.bf16.msra.mxu0 0
        %731 = vmatprep.subr.bf16.mxu0 0
        %732 = vmatpush1.bf16.msra.mxu0 0
        %733 = vmatprep.subr.bf16.mxu0 0
        %734 = vmatpush1.bf16.msra.mxu0 0
        %735 = vmatprep.subr.bf16.mxu0 0
        %736 = vmatpush1.bf16.msra.mxu0 0
        %737 = vmatprep.subr.bf16.mxu0 0
        %738 = vmatpush1.bf16.msra.mxu0 0
        %739 = vmatprep.subr.bf16.mxu0 0
        %740 = vmatpush1.bf16.msra.mxu0 0
        %741 = vmatprep.mubr.bf16.mxu0 0
        %742 = vmatmul.mubr.bf16.gmra.mrb[0].mxu0 %v658
        %v743 = vpop.f32.mrb[0].mxu0
        %v744 = vadd.f32 0.0, %v743
        %v745 = vpop.f32.mrb[0].mxu0
        %v746 = vpop.f32.mrb[0].mxu0
        %v747 = vadd.f32 0.0, %v746
        %v748 = vpop.f32.mrb[0].mxu0
        %749 = vmatprep.mubr.bf16.mxu0 0
        %750 = vmatmul.mubr.bf16.gmra.mrb[0].mxu0 %v661
        %v751 = vpop.f32.mrb[0].mxu0
        %v752 = vadd.f32 0.0, %v751
        %v753 = vpop.f32.mrb[0].mxu0
        %v754 = vpop.f32.mrb[0].mxu0
        %v755 = vadd.f32 0.0, %v754
        %v756 = vpop.f32.mrb[0].mxu0
        %757 = vmatprep.mubr.bf16.mxu0 0
        %758 = vmatmul.mubr.bf16.gmra.mrb[0].mxu0 %v664
        %v759 = vpop.f32.mrb[0].mxu0
        %v760 = vadd.f32 0.0, %v759
        %v761 = vpop.f32.mrb[0].mxu0
        %v762 = vpop.f32.mrb[0].mxu0
        %v763 = vadd.f32 0.0, %v762
        %v764 = vpop.f32.mrb[0].mxu0
        %765 = vmatprep.mubr.bf16.mxu0 0
        %766 = vmatmul.mubr.bf16.gmra.mrb[0].mxu0 %v667
        %v767 = vpop.f32.mrb[0].mxu0
        %v768 = vadd.f32 0.0, %v767
        %v769 = vpop.f32.mrb[0].mxu0
        %v770 = vpop.f32.mrb[0].mxu0
        %v771 = vadd.f32 0.0, %v770
        %v772 = vpop.f32.mrb[0].mxu0
        %773 = vmatprep.mubr.bf16.mxu0 0
        %774 = vmatmul.mubr.bf16.gmra.mrb[0].mxu0 %v670
        %v775 = vpop.f32.mrb[0].mxu0
        %v776 = vadd.f32 0.0, %v775
        %v777 = vpop.f32.mrb[0].mxu0
        %v778 = vpop.f32.mrb[0].mxu0
        %v779 = vadd.f32 0.0, %v778
        %v780 = vpop.f32.mrb[0].mxu0
        %781 = vmatprep.mubr.bf16.mxu0 0
        %782 = vmatmul.mubr.bf16.gmra.mrb[0].mxu0 %v673
        %v783 = vpop.f32.mrb[0].mxu0
        %v784 = vadd.f32 0.0, %v783
        %v785 = vpop.f32.mrb[0].mxu0
        %v786 = vpop.f32.mrb[0].mxu0
        %v787 = vadd.f32 0.0, %v786
        %v788 = vpop.f32.mrb[0].mxu0
        %789 = vmatprep.mubr.bf16.mxu0 0
        %790 = vmatmul.mubr.bf16.gmra.mrb[0].mxu0 %v676
        %v791 = vpop.f32.mrb[0].mxu0
        %v792 = vadd.f32 0.0, %v791
        %v793 = vpop.f32.mrb[0].mxu0
        %v794 = vpop.f32.mrb[0].mxu0
        %v795 = vadd.f32 0.0, %v794
        %v796 = vpop.f32.mrb[0].mxu0
        %797 = vmatprep.mubr.bf16.mxu0 0
        %798 = vmatmul.mubr.bf16.gmra.mrb[0].mxu0 %v679
        %v799 = vpop.f32.mrb[0].mxu0
        %v800 = vadd.f32 0.0, %v799
        %v801 = vpop.f32.mrb[0].mxu0
        %v802 = vpop.f32.mrb[0].mxu0
        %v803 = vadd.f32 0.0, %v802
        %v804 = vpop.f32.mrb[0].mxu0
        %805 = vmatprep.mubr.bf16.mxu0 0
        %806 = vmatmul.mubr.bf16.gmra.mrb[0].mxu0 %v682
        %v807 = vpop.f32.mrb[0].mxu0
        %v808 = vadd.f32 0.0, %v807
        %v809 = vpop.f32.mrb[0].mxu0
        %v810 = vpop.f32.mrb[0].mxu0
        %v811 = vadd.f32 0.0, %v810
        %v812 = vpop.f32.mrb[0].mxu0
        %813 = vmatprep.mubr.bf16.mxu0 0
        %814 = vmatmul.mubr.bf16.gmra.mrb[0].mxu0 %v685
        %v815 = vpop.f32.mrb[0].mxu0
        %v816 = vadd.f32 0.0, %v815
        %v817 = vpop.f32.mrb[0].mxu0
        %v818 = vpop.f32.mrb[0].mxu0
        %v819 = vadd.f32 0.0, %v818
        %v820 = vpop.f32.mrb[0].mxu0
        %821 = vmatprep.mubr.bf16.mxu0 0
        %822 = vmatmul.mubr.bf16.gmra.mrb[0].mxu0 %v688
        %v823 = vpop.f32.mrb[0].mxu0
        %v824 = vadd.f32 0.0, %v823
        %v825 = vpop.f32.mrb[0].mxu0
        %v826 = vpop.f32.mrb[0].mxu0
        %v827 = vadd.f32 0.0, %v826
        %v828 = vpop.f32.mrb[0].mxu0
        %829 = vmatprep.mubr.bf16.mxu0 0
        %830 = vmatmul.mubr.bf16.gmra.mrb[0].mxu0 %v691
        %v831 = vpop.f32.mrb[0].mxu0
        %v832 = vadd.f32 0.0, %v831
        %v833 = vpop.f32.mrb[0].mxu0
        %v834 = vpop.f32.mrb[0].mxu0
        %v835 = vadd.f32 0.0, %v834
        %v836 = vpop.f32.mrb[0].mxu0
        %837 = vmatprep.mubr.bf16.mxu0 0
        %838 = vmatmul.mubr.bf16.gmra.mrb[0].mxu0 %v694
        %v839 = vpop.f32.mrb[0].mxu0
        %v840 = vadd.f32 0.0, %v839
        %v841 = vpop.f32.mrb[0].mxu0
        %v842 = vpop.f32.mrb[0].mxu0
        %v843 = vadd.f32 0.0, %v842
        %v844 = vpop.f32.mrb[0].mxu0
        %845 = vmatprep.mubr.bf16.mxu0 0
        %846 = vmatmul.mubr.bf16.gmra.mrb[0].mxu0 %v697
        %v847 = vpop.f32.mrb[0].mxu0
        %v848 = vadd.f32 0.0, %v847
        %v849 = vpop.f32.mrb[0].mxu0
        %v850 = vpop.f32.mrb[0].mxu0
        %v851 = vadd.f32 0.0, %v850
        %v852 = vpop.f32.mrb[0].mxu0
        %853 = vmatprep.mubr.bf16.mxu0 0
        %854 = vmatmul.mubr.bf16.gmra.mrb[0].mxu0 %v700
        %v855 = vpop.f32.mrb[0].mxu0
        %v856 = vadd.f32 0.0, %v855
        %v857 = vpop.f32.mrb[0].mxu0
        %v858 = vpop.f32.mrb[0].mxu0
        %v859 = vadd.f32 0.0, %v858
        %v860 = vpop.f32.mrb[0].mxu0
        %861 = vmatprep.mubr.bf16.mxu0 0
        %862 = vmatmul.mubr.bf16.gmra.mrb[0].mxu0 %v703
        %v863 = vpop.f32.mrb[0].mxu0
        %v864 = vadd.f32 0.0, %v863
        %v865 = vpop.f32.mrb[0].mxu0
        %v866 = vpop.f32.mrb[0].mxu0
        %v867 = vadd.f32 0.0, %v866
        %v868 = vpop.f32.mrb[0].mxu0
        %869 = vdwg.mxu0
        %v902 = vunpack.c.l.b16 %v170
        %v903 = vunpack.c.l.b16 %v171
        %v904 = vunpack.c.l.b16 %v172
        %v905 = vunpack.c.l.b16 %v173
        %v906 = vunpack.c.l.b16 %v174
        %v907 = vunpack.c.l.b16 %v175
        %v908 = vunpack.c.l.b16 %v176
        %v909 = vunpack.c.l.b16 %v177
        %v910 = vunpack.c.l.b16 %v178
        %v911 = vunpack.c.l.b16 %v179
        %v912 = vunpack.c.l.b16 %v180
        %v913 = vunpack.c.l.b16 %v181
        %v914 = vunpack.c.l.b16 %v182
        %v915 = vunpack.c.l.b16 %v183
        %v916 = vunpack.c.l.b16 %v184
        %v917 = vunpack.c.l.b16 %v185
        %v918 = vunpack.c.l.b16 %v186
        %v919 = vunpack.c.l.b16 %v187
        %v920 = vunpack.c.l.b16 %v188
        %v921 = vunpack.c.l.b16 %v189
        %v922 = vunpack.c.l.b16 %v190
        %v923 = vunpack.c.l.b16 %v191
        %v924 = vunpack.c.l.b16 %v192
        %v925 = vunpack.c.l.b16 %v193
        %v926 = vunpack.c.l.b16 %v194
        %v927 = vunpack.c.l.b16 %v195
        %v928 = vunpack.c.l.b16 %v196
        %v929 = vunpack.c.l.b16 %v197
        %v930 = vunpack.c.l.b16 %v198
        %v931 = vunpack.c.l.b16 %v199
        %v932 = vunpack.c.l.b16 %v200
        %v933 = vunpack.c.l.b16 %v201
        %v934 = vpack.c.b16 %v903, %v902
        %v935 = vpack.c.b16 %v905, %v904
        %v936 = vpack.c.b16 %v907, %v906
        %v937 = vpack.c.b16 %v909, %v908
        %v938 = vpack.c.b16 %v911, %v910
        %v939 = vpack.c.b16 %v913, %v912
        %v940 = vpack.c.b16 %v915, %v914
        %v941 = vpack.c.b16 %v917, %v916
        %v942 = vpack.c.b16 %v919, %v918
        %v943 = vpack.c.b16 %v921, %v920
        %v944 = vpack.c.b16 %v923, %v922
        %v945 = vpack.c.b16 %v925, %v924
        %v946 = vpack.c.b16 %v927, %v926
        %v947 = vpack.c.b16 %v929, %v928
        %v948 = vpack.c.b16 %v931, %v930
        %v949 = vpack.c.b16 %v933, %v932
        %v951 = vsel %vm656, %v934, 0
        %v954 = vsel %vm656, %v935, 0
        %v957 = vsel %vm656, %v936, 0
        %v960 = vsel %vm656, %v937, 0
        %v963 = vsel %vm656, %v938, 0
        %v966 = vsel %vm656, %v939, 0
        %v969 = vsel %vm656, %v940, 0
        %v972 = vsel %vm656, %v941, 0
        %v975 = vsel %vm656, %v942, 0
        %v978 = vsel %vm656, %v943, 0
        %v981 = vsel %vm656, %v944, 0
        %v984 = vsel %vm656, %v945, 0
        %v987 = vsel %vm656, %v946, 0
        %v990 = vsel %vm656, %v947, 0
        %v993 = vsel %vm656, %v948, 0
        %v996 = vsel %vm656, %v949, 0
        %v999 = vsel %vm705, %v202, 0
        %1001 = vmatprep.subr.bf16.mxu0 0
        %1002 = vmatpush1.bf16.msra.mxu0 %v999
        %1003 = vmatprep.subr.bf16.mxu0 0
        %1004 = vmatpush1.bf16.msra.mxu0 0
        %1005 = vmatprep.subr.bf16.mxu0 0
        %1006 = vmatpush1.bf16.msra.mxu0 0
        %1007 = vmatprep.subr.bf16.mxu0 0
        %1008 = vmatpush1.bf16.msra.mxu0 0
        %1009 = vmatprep.subr.bf16.mxu0 0
        %1010 = vmatpush1.bf16.msra.mxu0 0
        %1011 = vmatprep.subr.bf16.mxu0 0
        %1012 = vmatpush1.bf16.msra.mxu0 0
        %1013 = vmatprep.subr.bf16.mxu0 0
        %1014 = vmatpush1.bf16.msra.mxu0 0
        %1015 = vmatprep.subr.bf16.mxu0 0
        %1016 = vmatpush1.bf16.msra.mxu0 0
        %1017 = vmatprep.subr.bf16.mxu0 0
        %1018 = vmatpush1.bf16.msra.mxu0 0
        %1019 = vmatprep.subr.bf16.mxu0 0
        %1020 = vmatpush1.bf16.msra.mxu0 0
        %1021 = vmatprep.subr.bf16.mxu0 0
        %1022 = vmatpush1.bf16.msra.mxu0 0
        %1023 = vmatprep.subr.bf16.mxu0 0
        %1024 = vmatpush1.bf16.msra.mxu0 0
        %1025 = vmatprep.subr.bf16.mxu0 0
        %1026 = vmatpush1.bf16.msra.mxu0 0
        %1027 = vmatprep.subr.bf16.mxu0 0
        %1028 = vmatpush1.bf16.msra.mxu0 0
        %1029 = vmatprep.subr.bf16.mxu0 0
        %1030 = vmatpush1.bf16.msra.mxu0 0
        %1031 = vmatprep.subr.bf16.mxu0 0
        %1032 = vmatpush1.bf16.msra.mxu0 0
        %1033 = vmatprep.mubr.bf16.mxu0 0
        %1034 = vmatmul.mubr.bf16.gmra.mrb[0].mxu0 %v951
        %v1035 = vpop.f32.mrb[0].mxu0
        %v1036 = vadd.f32 %v744, %v1035
        %v1037 = vpop.f32.mrb[0].mxu0
        %v1038 = vpop.f32.mrb[0].mxu0
        %v1039 = vadd.f32 %v747, %v1038
        %v1040 = vpop.f32.mrb[0].mxu0
        %1041 = vmatprep.mubr.bf16.mxu0 0
        %1042 = vmatmul.mubr.bf16.gmra.mrb[0].mxu0 %v954
        %v1043 = vpop.f32.mrb[0].mxu0
        %v1044 = vadd.f32 %v752, %v1043
        %v1045 = vpop.f32.mrb[0].mxu0
        %v1046 = vpop.f32.mrb[0].mxu0
        %v1047 = vadd.f32 %v755, %v1046
        %v1048 = vpop.f32.mrb[0].mxu0
        %1049 = vmatprep.mubr.bf16.mxu0 0
        %1050 = vmatmul.mubr.bf16.gmra.mrb[0].mxu0 %v957
        %v1051 = vpop.f32.mrb[0].mxu0
        %v1052 = vadd.f32 %v760, %v1051
        %v1053 = vpop.f32.mrb[0].mxu0
        %v1054 = vpop.f32.mrb[0].mxu0
        %v1055 = vadd.f32 %v763, %v1054
        %v1056 = vpop.f32.mrb[0].mxu0
        %1057 = vmatprep.mubr.bf16.mxu0 0
        %1058 = vmatmul.mubr.bf16.gmra.mrb[0].mxu0 %v960
        %v1059 = vpop.f32.mrb[0].mxu0
        %v1060 = vadd.f32 %v768, %v1059
        %v1061 = vpop.f32.mrb[0].mxu0
        %v1062 = vpop.f32.mrb[0].mxu0
        %v1063 = vadd.f32 %v771, %v1062
        %v1064 = vpop.f32.mrb[0].mxu0
        %1065 = vmatprep.mubr.bf16.mxu0 0
        %1066 = vmatmul.mubr.bf16.gmra.mrb[0].mxu0 %v963
        %v1067 = vpop.f32.mrb[0].mxu0
        %v1068 = vadd.f32 %v776, %v1067
        %v1069 = vpop.f32.mrb[0].mxu0
        %v1070 = vpop.f32.mrb[0].mxu0
        %v1071 = vadd.f32 %v779, %v1070
        %v1072 = vpop.f32.mrb[0].mxu0
        %1073 = vmatprep.mubr.bf16.mxu0 0
        %1074 = vmatmul.mubr.bf16.gmra.mrb[0].mxu0 %v966
        %v1075 = vpop.f32.mrb[0].mxu0
        %v1076 = vadd.f32 %v784, %v1075
        %v1077 = vpop.f32.mrb[0].mxu0
        %v1078 = vpop.f32.mrb[0].mxu0
        %v1079 = vadd.f32 %v787, %v1078
        %v1080 = vpop.f32.mrb[0].mxu0
        %1081 = vmatprep.mubr.bf16.mxu0 0
        %1082 = vmatmul.mubr.bf16.gmra.mrb[0].mxu0 %v969
        %v1083 = vpop.f32.mrb[0].mxu0
        %v1084 = vadd.f32 %v792, %v1083
        %v1085 = vpop.f32.mrb[0].mxu0
        %v1086 = vpop.f32.mrb[0].mxu0
        %v1087 = vadd.f32 %v795, %v1086
        %v1088 = vpop.f32.mrb[0].mxu0
        %1089 = vmatprep.mubr.bf16.mxu0 0
        %1090 = vmatmul.mubr.bf16.gmra.mrb[0].mxu0 %v972
        %v1091 = vpop.f32.mrb[0].mxu0
        %v1092 = vadd.f32 %v800, %v1091
        %v1093 = vpop.f32.mrb[0].mxu0
        %v1094 = vpop.f32.mrb[0].mxu0
        %v1095 = vadd.f32 %v803, %v1094
        %v1096 = vpop.f32.mrb[0].mxu0
        %1097 = vmatprep.mubr.bf16.mxu0 0
        %1098 = vmatmul.mubr.bf16.gmra.mrb[0].mxu0 %v975
        %v1099 = vpop.f32.mrb[0].mxu0
        %v1100 = vadd.f32 %v808, %v1099
        %v1101 = vpop.f32.mrb[0].mxu0
        %v1102 = vpop.f32.mrb[0].mxu0
        %v1103 = vadd.f32 %v811, %v1102
        %v1104 = vpop.f32.mrb[0].mxu0
        %1105 = vmatprep.mubr.bf16.mxu0 0
        %1106 = vmatmul.mubr.bf16.gmra.mrb[0].mxu0 %v978
        %v1107 = vpop.f32.mrb[0].mxu0
        %v1108 = vadd.f32 %v816, %v1107
        %v1109 = vpop.f32.mrb[0].mxu0
        %v1110 = vpop.f32.mrb[0].mxu0
        %v1111 = vadd.f32 %v819, %v1110
        %v1112 = vpop.f32.mrb[0].mxu0
        %1113 = vmatprep.mubr.bf16.mxu0 0
        %1114 = vmatmul.mubr.bf16.gmra.mrb[0].mxu0 %v981
        %v1115 = vpop.f32.mrb[0].mxu0
        %v1116 = vadd.f32 %v824, %v1115
        %v1117 = vpop.f32.mrb[0].mxu0
        %v1118 = vpop.f32.mrb[0].mxu0
        %v1119 = vadd.f32 %v827, %v1118
        %v1120 = vpop.f32.mrb[0].mxu0
        %1121 = vmatprep.mubr.bf16.mxu0 0
        %1122 = vmatmul.mubr.bf16.gmra.mrb[0].mxu0 %v984
        %v1123 = vpop.f32.mrb[0].mxu0
        %v1124 = vadd.f32 %v832, %v1123
        %v1125 = vpop.f32.mrb[0].mxu0
        %v1126 = vpop.f32.mrb[0].mxu0
        %v1127 = vadd.f32 %v835, %v1126
        %v1128 = vpop.f32.mrb[0].mxu0
        %1129 = vmatprep.mubr.bf16.mxu0 0
        %1130 = vmatmul.mubr.bf16.gmra.mrb[0].mxu0 %v987
        %v1131 = vpop.f32.mrb[0].mxu0
        %v1132 = vadd.f32 %v840, %v1131
        %v1133 = vpop.f32.mrb[0].mxu0
        %v1134 = vpop.f32.mrb[0].mxu0
        %v1135 = vadd.f32 %v843, %v1134
        %v1136 = vpop.f32.mrb[0].mxu0
        %1137 = vmatprep.mubr.bf16.mxu0 0
        %1138 = vmatmul.mubr.bf16.gmra.mrb[0].mxu0 %v990
        %v1139 = vpop.f32.mrb[0].mxu0
        %v1140 = vadd.f32 %v848, %v1139
        %v1141 = vpop.f32.mrb[0].mxu0
        %v1142 = vpop.f32.mrb[0].mxu0
        %v1143 = vadd.f32 %v851, %v1142
        %v1144 = vpop.f32.mrb[0].mxu0
        %1145 = vmatprep.mubr.bf16.mxu0 0
        %1146 = vmatmul.mubr.bf16.gmra.mrb[0].mxu0 %v993
        %v1147 = vpop.f32.mrb[0].mxu0
        %v1148 = vadd.f32 %v856, %v1147
        %v1149 = vpop.f32.mrb[0].mxu0
        %v1150 = vpop.f32.mrb[0].mxu0
        %v1151 = vadd.f32 %v859, %v1150
        %v1152 = vpop.f32.mrb[0].mxu0
        %1153 = vmatprep.mubr.bf16.mxu0 0
        %1154 = vmatmul.mubr.bf16.gmra.mrb[0].mxu0 %v996
        %v1155 = vpop.f32.mrb[0].mxu0
        %v1156 = vadd.f32 %v864, %v1155
        %v1157 = vpop.f32.mrb[0].mxu0
        %v1158 = vpop.f32.mrb[0].mxu0
        %v1159 = vadd.f32 %v867, %v1158
        %v1160 = vpop.f32.mrb[0].mxu0
        %1161 = vdwg.mxu0
        %v1162 = vld [vmem:[%s168] sm:$0xe]
        %v1163 = vld [vmem:[%s168 + $0xc] sm:$0xe]
        %v1164 = vld [vmem:[%s168 + $0x18] sm:$0xe]
        %v1165 = vld [vmem:[%s168 + $0x24] sm:$0xe]
        %v1166 = vld [vmem:[%s168 + $0x30] sm:$0xe]
        %v1167 = vld [vmem:[%s168 + $0x3c] sm:$0xe]
        %v1168 = vld [vmem:[%s168 + $0x48] sm:$0xe]
        %v1169 = vld [vmem:[%s168 + $0x54] sm:$0xe]
        %v1170 = vld [vmem:[%s168 + $0x60] sm:$0xe]
        %v1171 = vld [vmem:[%s168 + $0x6c] sm:$0xe]
        %v1172 = vld [vmem:[%s168 + $0x78] sm:$0xe]
        %v1173 = vld [vmem:[%s168 + $0x84] sm:$0xe]
        %v1174 = vld [vmem:[%s168 + $0x90] sm:$0xe]
        %v1175 = vld [vmem:[%s168 + $0x9c] sm:$0xe]
        %v1176 = vld [vmem:[%s168 + $0xa8] sm:$0xe]
        %v1177 = vld [vmem:[%s168 + $0xb4] sm:$0xe]
        %vm1210 = vcmask 1042432
        %vm1211 = vcmask 1046532
        %vm1212 = vmor %vm1210, %vm1211
        %v1213 = vrot.slane %v1162, 5
        %v1214 = vrot.slane %v1213, 4
        %v1215 = vrot.slane %v171, 5
        %v1216 = vsel %vm1212, %v1214, %v1215
        %v1217 = vrot.slane %v1215, 4
        %v1218 = vrot.slane %v203, 5
        %v1219 = vsel %vm1212, %v1217, %v1218
        %v1220 = vrot.slane %v1163, 5
        %v1221 = vrot.slane %v1220, 4
        %v1222 = vrot.slane %v173, 5
        %v1223 = vsel %vm1212, %v1221, %v1222
        %v1224 = vrot.slane %v1222, 4
        %v1225 = vrot.slane %v204, 5
        %v1226 = vsel %vm1212, %v1224, %v1225
        %v1227 = vrot.slane %v1164, 5
        %v1228 = vrot.slane %v1227, 4
        %v1229 = vrot.slane %v175, 5
        %v1230 = vsel %vm1212, %v1228, %v1229
        %v1231 = vrot.slane %v1229, 4
        %v1232 = vrot.slane %v205, 5
        %v1233 = vsel %vm1212, %v1231, %v1232
        %v1234 = vrot.slane %v1165, 5
        %v1235 = vrot.slane %v1234, 4
        %v1236 = vrot.slane %v177, 5
        %v1237 = vsel %vm1212, %v1235, %v1236
        %v1238 = vrot.slane %v1236, 4
        %v1239 = vrot.slane %v206, 5
        %v1240 = vsel %vm1212, %v1238, %v1239
        %v1241 = vrot.slane %v1166, 5
        %v1242 = vrot.slane %v1241, 4
        %v1243 = vrot.slane %v179, 5
        %v1244 = vsel %vm1212, %v1242, %v1243
        %v1245 = vrot.slane %v1243, 4
        %v1246 = vrot.slane %v207, 5
        %v1247 = vsel %vm1212, %v1245, %v1246
        %v1248 = vrot.slane %v1167, 5
        %v1249 = vrot.slane %v1248, 4
        %v1250 = vrot.slane %v181, 5
        %v1251 = vsel %vm1212, %v1249, %v1250
        %v1252 = vrot.slane %v1250, 4
        %v1253 = vrot.slane %v208, 5
        %v1254 = vsel %vm1212, %v1252, %v1253
        %v1255 = vrot.slane %v1168, 5
        %v1256 = vrot.slane %v1255, 4
        %v1257 = vrot.slane %v183, 5
        %v1258 = vsel %vm1212, %v1256, %v1257
        %v1259 = vrot.slane %v1257, 4
        %v1260 = vrot.slane %v209, 5
        %v1261 = vsel %vm1212, %v1259, %v1260
        %v1262 = vrot.slane %v1169, 5
        %v1263 = vrot.slane %v1262, 4
        %v1264 = vrot.slane %v185, 5
        %v1265 = vsel %vm1212, %v1263, %v1264
        %v1266 = vrot.slane %v1264, 4
        %v1267 = vrot.slane %v210, 5
        %v1268 = vsel %vm1212, %v1266, %v1267
        %v1269 = vrot.slane %v1170, 5
        %v1270 = vrot.slane %v1269, 4
        %v1271 = vrot.slane %v187, 5
        %v1272 = vsel %vm1212, %v1270, %v1271
        %v1273 = vrot.slane %v1271, 4
        %v1274 = vrot.slane %v211, 5
        %v1275 = vsel %vm1212, %v1273, %v1274
        %v1276 = vrot.slane %v1171, 5
        %v1277 = vrot.slane %v1276, 4
        %v1278 = vrot.slane %v189, 5
        %v1279 = vsel %vm1212, %v1277, %v1278
        %v1280 = vrot.slane %v1278, 4
        %v1281 = vrot.slane %v212, 5
        %v1282 = vsel %vm1212, %v1280, %v1281
        %v1283 = vrot.slane %v1172, 5
        %v1284 = vrot.slane %v1283, 4
        %v1285 = vrot.slane %v191, 5
        %v1286 = vsel %vm1212, %v1284, %v1285
        %v1287 = vrot.slane %v1285, 4
        %v1288 = vrot.slane %v213, 5
        %v1289 = vsel %vm1212, %v1287, %v1288
        %v1290 = vrot.slane %v1173, 5
        %v1291 = vrot.slane %v1290, 4
        %v1292 = vrot.slane %v193, 5
        %v1293 = vsel %vm1212, %v1291, %v1292
        %v1294 = vrot.slane %v1292, 4
        %v1295 = vrot.slane %v214, 5
        %v1296 = vsel %vm1212, %v1294, %v1295
        %v1297 = vrot.slane %v1174, 5
        %v1298 = vrot.slane %v1297, 4
        %v1299 = vrot.slane %v195, 5
        %v1300 = vsel %vm1212, %v1298, %v1299
        %v1301 = vrot.slane %v1299, 4
        %v1302 = vrot.slane %v215, 5
        %v1303 = vsel %vm1212, %v1301, %v1302
        %v1304 = vrot.slane %v1175, 5
        %v1305 = vrot.slane %v1304, 4
        %v1306 = vrot.slane %v197, 5
        %v1307 = vsel %vm1212, %v1305, %v1306
        %v1308 = vrot.slane %v1306, 4
        %v1309 = vrot.slane %v216, 5
        %v1310 = vsel %vm1212, %v1308, %v1309
        %v1311 = vrot.slane %v1176, 5
        %v1312 = vrot.slane %v1311, 4
        %v1313 = vrot.slane %v199, 5
        %v1314 = vsel %vm1212, %v1312, %v1313
        %v1315 = vrot.slane %v1313, 4
        %v1316 = vrot.slane %v217, 5
        %v1317 = vsel %vm1212, %v1315, %v1316
        %v1318 = vrot.slane %v1177, 5
        %v1319 = vrot.slane %v1318, 4
        %v1320 = vrot.slane %v201, 5
        %v1321 = vsel %vm1212, %v1319, %v1320
        %v1322 = vrot.slane %v1320, 4
        %v1323 = vrot.slane %v218, 5
        %v1324 = vsel %vm1212, %v1322, %v1323
        %s1325 = scalar_lea.vmem %s1, 8
        %v1326 = vld [vmem:[%s1325] sm:$0xf]
        %v1327 = vunpack.c.l.b16 %v1216
        %v1328 = vunpack.c.l.b16 %v1219
        %v1329 = vunpack.c.l.b16 %v1223
        %v1330 = vunpack.c.l.b16 %v1226
        %v1331 = vunpack.c.l.b16 %v1230
        %v1332 = vunpack.c.l.b16 %v1233
        %v1333 = vunpack.c.l.b16 %v1237
        %v1334 = vunpack.c.l.b16 %v1240
        %v1335 = vunpack.c.l.b16 %v1244
        %v1336 = vunpack.c.l.b16 %v1247
        %v1337 = vunpack.c.l.b16 %v1251
        %v1338 = vunpack.c.l.b16 %v1254
        %v1339 = vunpack.c.l.b16 %v1258
        %v1340 = vunpack.c.l.b16 %v1261
        %v1341 = vunpack.c.l.b16 %v1265
        %v1342 = vunpack.c.l.b16 %v1268
        %v1343 = vunpack.c.l.b16 %v1272
        %v1344 = vunpack.c.l.b16 %v1275
        %v1345 = vunpack.c.l.b16 %v1279
        %v1346 = vunpack.c.l.b16 %v1282
        %v1347 = vunpack.c.l.b16 %v1286
        %v1348 = vunpack.c.l.b16 %v1289
        %v1349 = vunpack.c.l.b16 %v1293
        %v1350 = vunpack.c.l.b16 %v1296
        %v1351 = vunpack.c.l.b16 %v1300
        %v1352 = vunpack.c.l.b16 %v1303
        %v1353 = vunpack.c.l.b16 %v1307
        %v1354 = vunpack.c.l.b16 %v1310
        %v1355 = vunpack.c.l.b16 %v1314
        %v1356 = vunpack.c.l.b16 %v1317
        %v1357 = vunpack.c.l.b16 %v1321
        %v1358 = vunpack.c.l.b16 %v1324
        %v1359 = vpack.c.b16 %v1328, %v1327
        %v1360 = vpack.c.b16 %v1330, %v1329
        %v1361 = vpack.c.b16 %v1332, %v1331
        %v1362 = vpack.c.b16 %v1334, %v1333
        %v1363 = vpack.c.b16 %v1336, %v1335
        %v1364 = vpack.c.b16 %v1338, %v1337
        %v1365 = vpack.c.b16 %v1340, %v1339
        %v1366 = vpack.c.b16 %v1342, %v1341
        %v1367 = vpack.c.b16 %v1344, %v1343
        %v1368 = vpack.c.b16 %v1346, %v1345
        %v1369 = vpack.c.b16 %v1348, %v1347
        %v1370 = vpack.c.b16 %v1350, %v1349
        %v1371 = vpack.c.b16 %v1352, %v1351
        %v1372 = vpack.c.b16 %v1354, %v1353
        %v1373 = vpack.c.b16 %v1356, %v1355
        %v1374 = vpack.c.b16 %v1358, %v1357
        %v1376 = vsel %vm656, %v1359, 0
        %v1379 = vsel %vm656, %v1360, 0
        %v1382 = vsel %vm656, %v1361, 0
        %v1385 = vsel %vm656, %v1362, 0
        %v1388 = vsel %vm656, %v1363, 0
        %v1391 = vsel %vm656, %v1364, 0
        %v1394 = vsel %vm656, %v1365, 0
        %v1397 = vsel %vm656, %v1366, 0
        %v1400 = vsel %vm656, %v1367, 0
        %v1403 = vsel %vm656, %v1368, 0
        %v1406 = vsel %vm656, %v1369, 0
        %v1409 = vsel %vm656, %v1370, 0
        %v1412 = vsel %vm656, %v1371, 0
        %v1415 = vsel %vm656, %v1372, 0
        %v1418 = vsel %vm656, %v1373, 0
        %v1421 = vsel %vm656, %v1374, 0
        %v1424 = vsel %vm705, %v1326, 0
        %1426 = vmatprep.subr.bf16.mxu0 0
        %1427 = vmatpush1.bf16.msra.mxu0 %v1424
        %1428 = vmatprep.subr.bf16.mxu0 0
        %1429 = vmatpush1.bf16.msra.mxu0 0
        %1430 = vmatprep.subr.bf16.mxu0 0
        %1431 = vmatpush1.bf16.msra.mxu0 0
        %1432 = vmatprep.subr.bf16.mxu0 0
        %1433 = vmatpush1.bf16.msra.mxu0 0
        %1434 = vmatprep.subr.bf16.mxu0 0
        %1435 = vmatpush1.bf16.msra.mxu0 0
        %1436 = vmatprep.subr.bf16.mxu0 0
        %1437 = vmatpush1.bf16.msra.mxu0 0
        %1438 = vmatprep.subr.bf16.mxu0 0
        %1439 = vmatpush1.bf16.msra.mxu0 0
        %1440 = vmatprep.subr.bf16.mxu0 0
        %1441 = vmatpush1.bf16.msra.mxu0 0
        %1442 = vmatprep.subr.bf16.mxu0 0
        %1443 = vmatpush1.bf16.msra.mxu0 0
        %1444 = vmatprep.subr.bf16.mxu0 0
        %1445 = vmatpush1.bf16.msra.mxu0 0
        %1446 = vmatprep.subr.bf16.mxu0 0
        %1447 = vmatpush1.bf16.msra.mxu0 0
        %1448 = vmatprep.subr.bf16.mxu0 0
        %1449 = vmatpush1.bf16.msra.mxu0 0
        %1450 = vmatprep.subr.bf16.mxu0 0
        %1451 = vmatpush1.bf16.msra.mxu0 0
        %1452 = vmatprep.subr.bf16.mxu0 0
        %1453 = vmatpush1.bf16.msra.mxu0 0
        %1454 = vmatprep.subr.bf16.mxu0 0
        %1455 = vmatpush1.bf16.msra.mxu0 0
        %1456 = vmatprep.subr.bf16.mxu0 0
        %1457 = vmatpush1.bf16.msra.mxu0 0
        %1458 = vmatprep.mubr.bf16.mxu0 0
        %1459 = vmatmul.mubr.bf16.gmra.mrb[0].mxu0 %v1376
        %v1460 = vpop.f32.mrb[0].mxu0
        %v1461 = vadd.f32 0.0, %v1460
        %v1462 = vpop.f32.mrb[0].mxu0
        %v1463 = vpop.f32.mrb[0].mxu0
        %v1464 = vadd.f32 0.0, %v1463
        %v1465 = vpop.f32.mrb[0].mxu0
        %1466 = vmatprep.mubr.bf16.mxu0 0
        %1467 = vmatmul.mubr.bf16.gmra.mrb[0].mxu0 %v1379
        %v1468 = vpop.f32.mrb[0].mxu0
        %v1469 = vadd.f32 0.0, %v1468
        %v1470 = vpop.f32.mrb[0].mxu0
        %v1471 = vpop.f32.mrb[0].mxu0
        %v1472 = vadd.f32 0.0, %v1471
        %v1473 = vpop.f32.mrb[0].mxu0
        %1474 = vmatprep.mubr.bf16.mxu0 0
        %1475 = vmatmul.mubr.bf16.gmra.mrb[0].mxu0 %v1382
        %v1476 = vpop.f32.mrb[0].mxu0
        %v1477 = vadd.f32 0.0, %v1476
        %v1478 = vpop.f32.mrb[0].mxu0
        %v1479 = vpop.f32.mrb[0].mxu0
        %v1480 = vadd.f32 0.0, %v1479
        %v1481 = vpop.f32.mrb[0].mxu0
        %1482 = vmatprep.mubr.bf16.mxu0 0
        %1483 = vmatmul.mubr.bf16.gmra.mrb[0].mxu0 %v1385
        %v1484 = vpop.f32.mrb[0].mxu0
        %v1485 = vadd.f32 0.0, %v1484
        %v1486 = vpop.f32.mrb[0].mxu0
        %v1487 = vpop.f32.mrb[0].mxu0
        %v1488 = vadd.f32 0.0, %v1487
        %v1489 = vpop.f32.mrb[0].mxu0
        %1490 = vmatprep.mubr.bf16.mxu0 0
        %1491 = vmatmul.mubr.bf16.gmra.mrb[0].mxu0 %v1388
        %v1492 = vpop.f32.mrb[0].mxu0
        %v1493 = vadd.f32 0.0, %v1492
        %v1494 = vpop.f32.mrb[0].mxu0
        %v1495 = vpop.f32.mrb[0].mxu0
        %v1496 = vadd.f32 0.0, %v1495
        %v1497 = vpop.f32.mrb[0].mxu0
        %1498 = vmatprep.mubr.bf16.mxu0 0
        %1499 = vmatmul.mubr.bf16.gmra.mrb[0].mxu0 %v1391
        %v1500 = vpop.f32.mrb[0].mxu0
        %v1501 = vadd.f32 0.0, %v1500
        %v1502 = vpop.f32.mrb[0].mxu0
        %v1503 = vpop.f32.mrb[0].mxu0
        %v1504 = vadd.f32 0.0, %v1503
        %v1505 = vpop.f32.mrb[0].mxu0
        %1506 = vmatprep.mubr.bf16.mxu0 0
        %1507 = vmatmul.mubr.bf16.gmra.mrb[0].mxu0 %v1394
        %v1508 = vpop.f32.mrb[0].mxu0
        %v1509 = vadd.f32 0.0, %v1508
        %v1510 = vpop.f32.mrb[0].mxu0
        %v1511 = vpop.f32.mrb[0].mxu0
        %v1512 = vadd.f32 0.0, %v1511
        %v1513 = vpop.f32.mrb[0].mxu0
        %1514 = vmatprep.mubr.bf16.mxu0 0
        %1515 = vmatmul.mubr.bf16.gmra.mrb[0].mxu0 %v1397
        %v1516 = vpop.f32.mrb[0].mxu0
        %v1517 = vadd.f32 0.0, %v1516
        %v1518 = vpop.f32.mrb[0].mxu0
        %v1519 = vpop.f32.mrb[0].mxu0
        %v1520 = vadd.f32 0.0, %v1519
        %v1521 = vpop.f32.mrb[0].mxu0
        %1522 = vmatprep.mubr.bf16.mxu0 0
        %1523 = vmatmul.mubr.bf16.gmra.mrb[0].mxu0 %v1400
        %v1524 = vpop.f32.mrb[0].mxu0
        %v1525 = vadd.f32 0.0, %v1524
        %v1526 = vpop.f32.mrb[0].mxu0
        %v1527 = vpop.f32.mrb[0].mxu0
        %v1528 = vadd.f32 0.0, %v1527
        %v1529 = vpop.f32.mrb[0].mxu0
        %1530 = vmatprep.mubr.bf16.mxu0 0
        %1531 = vmatmul.mubr.bf16.gmra.mrb[0].mxu0 %v1403
        %v1532 = vpop.f32.mrb[0].mxu0
        %v1533 = vadd.f32 0.0, %v1532
        %v1534 = vpop.f32.mrb[0].mxu0
        %v1535 = vpop.f32.mrb[0].mxu0
        %v1536 = vadd.f32 0.0, %v1535
        %v1537 = vpop.f32.mrb[0].mxu0
        %1538 = vmatprep.mubr.bf16.mxu0 0
        %1539 = vmatmul.mubr.bf16.gmra.mrb[0].mxu0 %v1406
        %v1540 = vpop.f32.mrb[0].mxu0
        %v1541 = vadd.f32 0.0, %v1540
        %v1542 = vpop.f32.mrb[0].mxu0
        %v1543 = vpop.f32.mrb[0].mxu0
        %v1544 = vadd.f32 0.0, %v1543
        %v1545 = vpop.f32.mrb[0].mxu0
        %1546 = vmatprep.mubr.bf16.mxu0 0
        %1547 = vmatmul.mubr.bf16.gmra.mrb[0].mxu0 %v1409
        %v1548 = vpop.f32.mrb[0].mxu0
        %v1549 = vadd.f32 0.0, %v1548
        %v1550 = vpop.f32.mrb[0].mxu0
        %v1551 = vpop.f32.mrb[0].mxu0
        %v1552 = vadd.f32 0.0, %v1551
        %v1553 = vpop.f32.mrb[0].mxu0
        %1554 = vmatprep.mubr.bf16.mxu0 0
        %1555 = vmatmul.mubr.bf16.gmra.mrb[0].mxu0 %v1412
        %v1556 = vpop.f32.mrb[0].mxu0
        %v1557 = vadd.f32 0.0, %v1556
        %v1558 = vpop.f32.mrb[0].mxu0
        %v1559 = vpop.f32.mrb[0].mxu0
        %v1560 = vadd.f32 0.0, %v1559
        %v1561 = vpop.f32.mrb[0].mxu0
        %1562 = vmatprep.mubr.bf16.mxu0 0
        %1563 = vmatmul.mubr.bf16.gmra.mrb[0].mxu0 %v1415
        %v1564 = vpop.f32.mrb[0].mxu0
        %v1565 = vadd.f32 0.0, %v1564
        %v1566 = vpop.f32.mrb[0].mxu0
        %v1567 = vpop.f32.mrb[0].mxu0
        %v1568 = vadd.f32 0.0, %v1567
        %v1569 = vpop.f32.mrb[0].mxu0
        %1570 = vmatprep.mubr.bf16.mxu0 0
        %1571 = vmatmul.mubr.bf16.gmra.mrb[0].mxu0 %v1418
        %v1572 = vpop.f32.mrb[0].mxu0
        %v1573 = vadd.f32 0.0, %v1572
        %v1574 = vpop.f32.mrb[0].mxu0
        %v1575 = vpop.f32.mrb[0].mxu0
        %v1576 = vadd.f32 0.0, %v1575
        %v1577 = vpop.f32.mrb[0].mxu0
        %1578 = vmatprep.mubr.bf16.mxu0 0
        %1579 = vmatmul.mubr.bf16.gmra.mrb[0].mxu0 %v1421
        %v1580 = vpop.f32.mrb[0].mxu0
        %v1581 = vadd.f32 0.0, %v1580
        %v1582 = vpop.f32.mrb[0].mxu0
        %v1583 = vpop.f32.mrb[0].mxu0
        %v1584 = vadd.f32 0.0, %v1583
        %v1585 = vpop.f32.mrb[0].mxu0
        %1586 = vdwg.mxu0
        %v1587 = vadd.f32 %v1036, %v1461
        %v1588 = vadd.f32 %v1039, %v1464
        %v1589 = vadd.f32 %v1044, %v1469
        %v1590 = vadd.f32 %v1047, %v1472
        %v1591 = vadd.f32 %v1052, %v1477
        %v1592 = vadd.f32 %v1055, %v1480
        %v1593 = vadd.f32 %v1060, %v1485
        %v1594 = vadd.f32 %v1063, %v1488
        %v1595 = vadd.f32 %v1068, %v1493
        %v1596 = vadd.f32 %v1071, %v1496
        %v1597 = vadd.f32 %v1076, %v1501
        %v1598 = vadd.f32 %v1079, %v1504
        %v1599 = vadd.f32 %v1084, %v1509
        %v1600 = vadd.f32 %v1087, %v1512
        %v1601 = vadd.f32 %v1092, %v1517
        %v1602 = vadd.f32 %v1095, %v1520
        %v1603 = vadd.f32 %v1100, %v1525
        %v1604 = vadd.f32 %v1103, %v1528
        %v1605 = vadd.f32 %v1108, %v1533
        %v1606 = vadd.f32 %v1111, %v1536
        %v1607 = vadd.f32 %v1116, %v1541
        %v1608 = vadd.f32 %v1119, %v1544
        %v1609 = vadd.f32 %v1124, %v1549
        %v1610 = vadd.f32 %v1127, %v1552
        %v1611 = vadd.f32 %v1132, %v1557
        %v1612 = vadd.f32 %v1135, %v1560
        %v1613 = vadd.f32 %v1140, %v1565
        %v1614 = vadd.f32 %v1143, %v1568
        %v1615 = vadd.f32 %v1148, %v1573
        %v1616 = vadd.f32 %v1151, %v1576
        %v1617 = vadd.f32 %v1156, %v1581
        %v1618 = vadd.f32 %v1159, %v1584
        %s1619 = scalar_lea.vmem %s168, 12
        %v1620 = vld [vmem:[%s1619] sm:$0xf]
        %v1621 = vld [vmem:[%s1619 + $0x4] sm:$0xf]
        %v1622 = vld [vmem:[%s1619 + $0xc] sm:$0xf]
        %v1623 = vld [vmem:[%s1619 + $0x10] sm:$0xf]
        %v1624 = vld [vmem:[%s1619 + $0x18] sm:$0xf]
        %v1625 = vld [vmem:[%s1619 + $0x1c] sm:$0xf]
        %v1626 = vld [vmem:[%s1619 + $0x24] sm:$0xf]
        %v1627 = vld [vmem:[%s1619 + $0x28] sm:$0xf]
        %v1628 = vld [vmem:[%s1619 + $0x30] sm:$0xf]
        %v1629 = vld [vmem:[%s1619 + $0x34] sm:$0xf]
        %v1630 = vld [vmem:[%s1619 + $0x3c] sm:$0xf]
        %v1631 = vld [vmem:[%s1619 + $0x40] sm:$0xf]
        %v1632 = vld [vmem:[%s1619 + $0x48] sm:$0xf]
        %v1633 = vld [vmem:[%s1619 + $0x4c] sm:$0xf]
        %v1634 = vld [vmem:[%s1619 + $0x54] sm:$0xf]
        %v1635 = vld [vmem:[%s1619 + $0x58] sm:$0xf]
        %v1636 = vld [vmem:[%s1619 + $0x60] sm:$0xf]
        %v1637 = vld [vmem:[%s1619 + $0x64] sm:$0xf]
        %v1638 = vld [vmem:[%s1619 + $0x6c] sm:$0xf]
        %v1639 = vld [vmem:[%s1619 + $0x70] sm:$0xf]
        %v1640 = vld [vmem:[%s1619 + $0x78] sm:$0xf]
        %v1641 = vld [vmem:[%s1619 + $0x7c] sm:$0xf]
        %v1642 = vld [vmem:[%s1619 + $0x84] sm:$0xf]
        %v1643 = vld [vmem:[%s1619 + $0x88] sm:$0xf]
        %v1644 = vld [vmem:[%s1619 + $0x90] sm:$0xf]
        %v1645 = vld [vmem:[%s1619 + $0x94] sm:$0xf]
        %v1646 = vld [vmem:[%s1619 + $0x9c] sm:$0xf]
        %v1647 = vld [vmem:[%s1619 + $0xa0] sm:$0xf]
        %v1648 = vld [vmem:[%s1619 + $0xa8] sm:$0xf]
        %v1649 = vld [vmem:[%s1619 + $0xac] sm:$0xf]
        %v1650 = vld [vmem:[%s1619 + $0xb4] sm:$0xf]
        %v1651 = vld [vmem:[%s1619 + $0xb8] sm:$0xf]
        %s1652 = scalar_lea.vmem %s1, 12
        %v1653 = vld [vmem:[%s1652] sm:$0xf]
        %v1686 = vunpack.c.l.b16 %v1620
        %v1687 = vunpack.c.l.b16 %v1621
        %v1688 = vunpack.c.l.b16 %v1622
        %v1689 = vunpack.c.l.b16 %v1623
        %v1690 = vunpack.c.l.b16 %v1624
        %v1691 = vunpack.c.l.b16 %v1625
        %v1692 = vunpack.c.l.b16 %v1626
        %v1693 = vunpack.c.l.b16 %v1627
        %v1694 = vunpack.c.l.b16 %v1628
        %v1695 = vunpack.c.l.b16 %v1629
        %v1696 = vunpack.c.l.b16 %v1630
        %v1697 = vunpack.c.l.b16 %v1631
        %v1698 = vunpack.c.l.b16 %v1632
        %v1699 = vunpack.c.l.b16 %v1633
        %v1700 = vunpack.c.l.b16 %v1634
        %v1701 = vunpack.c.l.b16 %v1635
        %v1702 = vunpack.c.l.b16 %v1636
        %v1703 = vunpack.c.l.b16 %v1637
        %v1704 = vunpack.c.l.b16 %v1638
        %v1705 = vunpack.c.l.b16 %v1639
        %v1706 = vunpack.c.l.b16 %v1640
        %v1707 = vunpack.c.l.b16 %v1641
        %v1708 = vunpack.c.l.b16 %v1642
        %v1709 = vunpack.c.l.b16 %v1643
        %v1710 = vunpack.c.l.b16 %v1644
        %v1711 = vunpack.c.l.b16 %v1645
        %v1712 = vunpack.c.l.b16 %v1646
        %v1713 = vunpack.c.l.b16 %v1647
        %v1714 = vunpack.c.l.b16 %v1648
        %v1715 = vunpack.c.l.b16 %v1649
        %v1716 = vunpack.c.l.b16 %v1650
        %v1717 = vunpack.c.l.b16 %v1651
        %v1718 = vpack.c.b16 %v1687, %v1686
        %v1719 = vpack.c.b16 %v1689, %v1688
        %v1720 = vpack.c.b16 %v1691, %v1690
        %v1721 = vpack.c.b16 %v1693, %v1692
        %v1722 = vpack.c.b16 %v1695, %v1694
        %v1723 = vpack.c.b16 %v1697, %v1696
        %v1724 = vpack.c.b16 %v1699, %v1698
        %v1725 = vpack.c.b16 %v1701, %v1700
        %v1726 = vpack.c.b16 %v1703, %v1702
        %v1727 = vpack.c.b16 %v1705, %v1704
        %v1728 = vpack.c.b16 %v1707, %v1706
        %v1729 = vpack.c.b16 %v1709, %v1708
        %v1730 = vpack.c.b16 %v1711, %v1710
        %v1731 = vpack.c.b16 %v1713, %v1712
        %v1732 = vpack.c.b16 %v1715, %v1714
        %v1733 = vpack.c.b16 %v1717, %v1716
        %v1735 = vsel %vm656, %v1718, 0
        %v1738 = vsel %vm656, %v1719, 0
        %v1741 = vsel %vm656, %v1720, 0
        %v1744 = vsel %vm656, %v1721, 0
        %v1747 = vsel %vm656, %v1722, 0
        %v1750 = vsel %vm656, %v1723, 0
        %v1753 = vsel %vm656, %v1724, 0
        %v1756 = vsel %vm656, %v1725, 0
        %v1759 = vsel %vm656, %v1726, 0
        %v1762 = vsel %vm656, %v1727, 0
        %v1765 = vsel %vm656, %v1728, 0
        %v1768 = vsel %vm656, %v1729, 0
        %v1771 = vsel %vm656, %v1730, 0
        %v1774 = vsel %vm656, %v1731, 0
        %v1777 = vsel %vm656, %v1732, 0
        %v1780 = vsel %vm656, %v1733, 0
        %v1783 = vsel %vm705, %v1653, 0
        %1785 = vmatprep.subr.bf16.mxu0 0
        %1786 = vmatpush1.bf16.msra.mxu0 %v1783
        %1787 = vmatprep.subr.bf16.mxu0 0
        %1788 = vmatpush1.bf16.msra.mxu0 0
        %1789 = vmatprep.subr.bf16.mxu0 0
        %1790 = vmatpush1.bf16.msra.mxu0 0
        %1791 = vmatprep.subr.bf16.mxu0 0
        %1792 = vmatpush1.bf16.msra.mxu0 0
        %1793 = vmatprep.subr.bf16.mxu0 0
        %1794 = vmatpush1.bf16.msra.mxu0 0
        %1795 = vmatprep.subr.bf16.mxu0 0
        %1796 = vmatpush1.bf16.msra.mxu0 0
        %1797 = vmatprep.subr.bf16.mxu0 0
        %1798 = vmatpush1.bf16.msra.mxu0 0
        %1799 = vmatprep.subr.bf16.mxu0 0
        %1800 = vmatpush1.bf16.msra.mxu0 0
        %1801 = vmatprep.subr.bf16.mxu0 0
        %1802 = vmatpush1.bf16.msra.mxu0 0
        %1803 = vmatprep.subr.bf16.mxu0 0
        %1804 = vmatpush1.bf16.msra.mxu0 0
        %1805 = vmatprep.subr.bf16.mxu0 0
        %1806 = vmatpush1.bf16.msra.mxu0 0
        %1807 = vmatprep.subr.bf16.mxu0 0
        %1808 = vmatpush1.bf16.msra.mxu0 0
        %1809 = vmatprep.subr.bf16.mxu0 0
        %1810 = vmatpush1.bf16.msra.mxu0 0
        %1811 = vmatprep.subr.bf16.mxu0 0
        %1812 = vmatpush1.bf16.msra.mxu0 0
        %1813 = vmatprep.subr.bf16.mxu0 0
        %1814 = vmatpush1.bf16.msra.mxu0 0
        %1815 = vmatprep.subr.bf16.mxu0 0
        %1816 = vmatpush1.bf16.msra.mxu0 0
        %1817 = vmatprep.mubr.bf16.mxu0 0
        %1818 = vmatmul.mubr.bf16.gmra.mrb[0].mxu0 %v1735
        %v1819 = vpop.f32.mrb[0].mxu0
        %v1820 = vadd.f32 0.0, %v1819
        %v1821 = vpop.f32.mrb[0].mxu0
        %v1822 = vpop.f32.mrb[0].mxu0
        %v1823 = vadd.f32 0.0, %v1822
        %v1824 = vpop.f32.mrb[0].mxu0
        %1825 = vmatprep.mubr.bf16.mxu0 0
        %1826 = vmatmul.mubr.bf16.gmra.mrb[0].mxu0 %v1738
        %v1827 = vpop.f32.mrb[0].mxu0
        %v1828 = vadd.f32 0.0, %v1827
        %v1829 = vpop.f32.mrb[0].mxu0
        %v1830 = vpop.f32.mrb[0].mxu0
        %v1831 = vadd.f32 0.0, %v1830
        %v1832 = vpop.f32.mrb[0].mxu0
        %1833 = vmatprep.mubr.bf16.mxu0 0
        %1834 = vmatmul.mubr.bf16.gmra.mrb[0].mxu0 %v1741
        %v1835 = vpop.f32.mrb[0].mxu0
        %v1836 = vadd.f32 0.0, %v1835
        %v1837 = vpop.f32.mrb[0].mxu0
        %v1838 = vpop.f32.mrb[0].mxu0
        %v1839 = vadd.f32 0.0, %v1838
        %v1840 = vpop.f32.mrb[0].mxu0
        %1841 = vmatprep.mubr.bf16.mxu0 0
        %1842 = vmatmul.mubr.bf16.gmra.mrb[0].mxu0 %v1744
        %v1843 = vpop.f32.mrb[0].mxu0
        %v1844 = vadd.f32 0.0, %v1843
        %v1845 = vpop.f32.mrb[0].mxu0
        %v1846 = vpop.f32.mrb[0].mxu0
        %v1847 = vadd.f32 0.0, %v1846
        %v1848 = vpop.f32.mrb[0].mxu0
        %1849 = vmatprep.mubr.bf16.mxu0 0
        %1850 = vmatmul.mubr.bf16.gmra.mrb[0].mxu0 %v1747
        %v1851 = vpop.f32.mrb[0].mxu0
        %v1852 = vadd.f32 0.0, %v1851
        %v1853 = vpop.f32.mrb[0].mxu0
        %v1854 = vpop.f32.mrb[0].mxu0
        %v1855 = vadd.f32 0.0, %v1854
        %v1856 = vpop.f32.mrb[0].mxu0
        %1857 = vmatprep.mubr.bf16.mxu0 0
        %1858 = vmatmul.mubr.bf16.gmra.mrb[0].mxu0 %v1750
        %v1859 = vpop.f32.mrb[0].mxu0
        %v1860 = vadd.f32 0.0, %v1859
        %v1861 = vpop.f32.mrb[0].mxu0
        %v1862 = vpop.f32.mrb[0].mxu0
        %v1863 = vadd.f32 0.0, %v1862
        %v1864 = vpop.f32.mrb[0].mxu0
        %1865 = vmatprep.mubr.bf16.mxu0 0
        %1866 = vmatmul.mubr.bf16.gmra.mrb[0].mxu0 %v1753
        %v1867 = vpop.f32.mrb[0].mxu0
        %v1868 = vadd.f32 0.0, %v1867
        %v1869 = vpop.f32.mrb[0].mxu0
        %v1870 = vpop.f32.mrb[0].mxu0
        %v1871 = vadd.f32 0.0, %v1870
        %v1872 = vpop.f32.mrb[0].mxu0
        %1873 = vmatprep.mubr.bf16.mxu0 0
        %1874 = vmatmul.mubr.bf16.gmra.mrb[0].mxu0 %v1756
        %v1875 = vpop.f32.mrb[0].mxu0
        %v1876 = vadd.f32 0.0, %v1875
        %v1877 = vpop.f32.mrb[0].mxu0
        %v1878 = vpop.f32.mrb[0].mxu0
        %v1879 = vadd.f32 0.0, %v1878
        %v1880 = vpop.f32.mrb[0].mxu0
        %1881 = vmatprep.mubr.bf16.mxu0 0
        %1882 = vmatmul.mubr.bf16.gmra.mrb[0].mxu0 %v1759
        %v1883 = vpop.f32.mrb[0].mxu0
        %v1884 = vadd.f32 0.0, %v1883
        %v1885 = vpop.f32.mrb[0].mxu0
        %v1886 = vpop.f32.mrb[0].mxu0
        %v1887 = vadd.f32 0.0, %v1886
        %v1888 = vpop.f32.mrb[0].mxu0
        %1889 = vmatprep.mubr.bf16.mxu0 0
        %1890 = vmatmul.mubr.bf16.gmra.mrb[0].mxu0 %v1762
        %v1891 = vpop.f32.mrb[0].mxu0
        %v1892 = vadd.f32 0.0, %v1891
        %v1893 = vpop.f32.mrb[0].mxu0
        %v1894 = vpop.f32.mrb[0].mxu0
        %v1895 = vadd.f32 0.0, %v1894
        %v1896 = vpop.f32.mrb[0].mxu0
        %1897 = vmatprep.mubr.bf16.mxu0 0
        %1898 = vmatmul.mubr.bf16.gmra.mrb[0].mxu0 %v1765
        %v1899 = vpop.f32.mrb[0].mxu0
        %v1900 = vadd.f32 0.0, %v1899
        %v1901 = vpop.f32.mrb[0].mxu0
        %v1902 = vpop.f32.mrb[0].mxu0
        %v1903 = vadd.f32 0.0, %v1902
        %v1904 = vpop.f32.mrb[0].mxu0
        %1905 = vmatprep.mubr.bf16.mxu0 0
        %1906 = vmatmul.mubr.bf16.gmra.mrb[0].mxu0 %v1768
        %v1907 = vpop.f32.mrb[0].mxu0
        %v1908 = vadd.f32 0.0, %v1907
        %v1909 = vpop.f32.mrb[0].mxu0
        %v1910 = vpop.f32.mrb[0].mxu0
        %v1911 = vadd.f32 0.0, %v1910
        %v1912 = vpop.f32.mrb[0].mxu0
        %1913 = vmatprep.mubr.bf16.mxu0 0
        %1914 = vmatmul.mubr.bf16.gmra.mrb[0].mxu0 %v1771
        %v1915 = vpop.f32.mrb[0].mxu0
        %v1916 = vadd.f32 0.0, %v1915
        %v1917 = vpop.f32.mrb[0].mxu0
        %v1918 = vpop.f32.mrb[0].mxu0
        %v1919 = vadd.f32 0.0, %v1918
        %v1920 = vpop.f32.mrb[0].mxu0
        %1921 = vmatprep.mubr.bf16.mxu0 0
        %1922 = vmatmul.mubr.bf16.gmra.mrb[0].mxu0 %v1774
        %v1923 = vpop.f32.mrb[0].mxu0
        %v1924 = vadd.f32 0.0, %v1923
        %v1925 = vpop.f32.mrb[0].mxu0
        %v1926 = vpop.f32.mrb[0].mxu0
        %v1927 = vadd.f32 0.0, %v1926
        %v1928 = vpop.f32.mrb[0].mxu0
        %1929 = vmatprep.mubr.bf16.mxu0 0
        %1930 = vmatmul.mubr.bf16.gmra.mrb[0].mxu0 %v1777
        %v1931 = vpop.f32.mrb[0].mxu0
        %v1932 = vadd.f32 0.0, %v1931
        %v1933 = vpop.f32.mrb[0].mxu0
        %v1934 = vpop.f32.mrb[0].mxu0
        %v1935 = vadd.f32 0.0, %v1934
        %v1936 = vpop.f32.mrb[0].mxu0
        %1937 = vmatprep.mubr.bf16.mxu0 0
        %1938 = vmatmul.mubr.bf16.gmra.mrb[0].mxu0 %v1780
        %v1939 = vpop.f32.mrb[0].mxu0
        %v1940 = vadd.f32 0.0, %v1939
        %v1941 = vpop.f32.mrb[0].mxu0
        %v1942 = vpop.f32.mrb[0].mxu0
        %v1943 = vadd.f32 0.0, %v1942
        %v1944 = vpop.f32.mrb[0].mxu0
        %1945 = vdwg.mxu0
        %v1946 = vadd.f32 %v1587, %v1820
        %v1947 = vadd.f32 %v1588, %v1823
        %v1948 = vadd.f32 %v1589, %v1828
        %v1949 = vadd.f32 %v1590, %v1831
        %v1950 = vadd.f32 %v1591, %v1836
        %v1951 = vadd.f32 %v1592, %v1839
        %v1952 = vadd.f32 %v1593, %v1844
        %v1953 = vadd.f32 %v1594, %v1847
        %v1954 = vadd.f32 %v1595, %v1852
        %v1955 = vadd.f32 %v1596, %v1855
        %v1956 = vadd.f32 %v1597, %v1860
        %v1957 = vadd.f32 %v1598, %v1863
        %v1958 = vadd.f32 %v1599, %v1868
        %v1959 = vadd.f32 %v1600, %v1871
        %v1960 = vadd.f32 %v1601, %v1876
        %v1961 = vadd.f32 %v1602, %v1879
        %v1962 = vadd.f32 %v1603, %v1884
        %v1963 = vadd.f32 %v1604, %v1887
        %v1964 = vadd.f32 %v1605, %v1892
        %v1965 = vadd.f32 %v1606, %v1895
        %v1966 = vadd.f32 %v1607, %v1900
        %v1967 = vadd.f32 %v1608, %v1903
        %v1968 = vadd.f32 %v1609, %v1908
        %v1969 = vadd.f32 %v1610, %v1911
        %v1970 = vadd.f32 %v1611, %v1916
        %v1971 = vadd.f32 %v1612, %v1919
        %v1972 = vadd.f32 %v1613, %v1924
        %v1973 = vadd.f32 %v1614, %v1927
        %v1974 = vadd.f32 %v1615, %v1932
        %v1975 = vadd.f32 %v1616, %v1935
        %v1976 = vadd.f32 %v1617, %v1940
        %v1977 = vadd.f32 %v1618, %v1943
        %v1978 = vld [vmem:[%s1619] sm:$0xf]
        %v1979 = vld [vmem:[%s1619 + $0x4] sm:$0xf]
        %v1980 = vld [vmem:[%s1619 + $0x8] sm:$0x1]
        %v1981 = vld [vmem:[%s1619 + $0xc] sm:$0xf]
        %v1982 = vld [vmem:[%s1619 + $0x10] sm:$0xf]
        %v1983 = vld [vmem:[%s1619 + $0x14] sm:$0x1]
        %v1984 = vld [vmem:[%s1619 + $0x18] sm:$0xf]
        %v1985 = vld [vmem:[%s1619 + $0x1c] sm:$0xf]
        %v1986 = vld [vmem:[%s1619 + $0x20] sm:$0x1]
        %v1987 = vld [vmem:[%s1619 + $0x24] sm:$0xf]
        %v1988 = vld [vmem:[%s1619 + $0x28] sm:$0xf]
        %v1989 = vld [vmem:[%s1619 + $0x2c] sm:$0x1]
        %v1990 = vld [vmem:[%s1619 + $0x30] sm:$0xf]
        %v1991 = vld [vmem:[%s1619 + $0x34] sm:$0xf]
        %v1992 = vld [vmem:[%s1619 + $0x38] sm:$0x1]
        %v1993 = vld [vmem:[%s1619 + $0x3c] sm:$0xf]
        %v1994 = vld [vmem:[%s1619 + $0x40] sm:$0xf]
        %v1995 = vld [vmem:[%s1619 + $0x44] sm:$0x1]
        %v1996 = vld [vmem:[%s1619 + $0x48] sm:$0xf]
        %v1997 = vld [vmem:[%s1619 + $0x4c] sm:$0xf]
        %v1998 = vld [vmem:[%s1619 + $0x50] sm:$0x1]
        %v1999 = vld [vmem:[%s1619 + $0x54] sm:$0xf]
        %v2000 = vld [vmem:[%s1619 + $0x58] sm:$0xf]
        %v2001 = vld [vmem:[%s1619 + $0x5c] sm:$0x1]
        %v2002 = vld [vmem:[%s1619 + $0x60] sm:$0xf]
        %v2003 = vld [vmem:[%s1619 + $0x64] sm:$0xf]
        %v2004 = vld [vmem:[%s1619 + $0x68] sm:$0x1]
        %v2005 = vld [vmem:[%s1619 + $0x6c] sm:$0xf]
        %v2006 = vld [vmem:[%s1619 + $0x70] sm:$0xf]
        %v2007 = vld [vmem:[%s1619 + $0x74] sm:$0x1]
        %v2008 = vld [vmem:[%s1619 + $0x78] sm:$0xf]
        %v2009 = vld [vmem:[%s1619 + $0x7c] sm:$0xf]
        %v2010 = vld [vmem:[%s1619 + $0x80] sm:$0x1]
        %v2011 = vld [vmem:[%s1619 + $0x84] sm:$0xf]
        %v2012 = vld [vmem:[%s1619 + $0x88] sm:$0xf]
        %v2013 = vld [vmem:[%s1619 + $0x8c] sm:$0x1]
        %v2014 = vld [vmem:[%s1619 + $0x90] sm:$0xf]
        %v2015 = vld [vmem:[%s1619 + $0x94] sm:$0xf]
        %v2016 = vld [vmem:[%s1619 + $0x98] sm:$0x1]
        %v2017 = vld [vmem:[%s1619 + $0x9c] sm:$0xf]
        %v2018 = vld [vmem:[%s1619 + $0xa0] sm:$0xf]
        %v2019 = vld [vmem:[%s1619 + $0xa4] sm:$0x1]
        %v2020 = vld [vmem:[%s1619 + $0xa8] sm:$0xf]
        %v2021 = vld [vmem:[%s1619 + $0xac] sm:$0xf]
        %v2022 = vld [vmem:[%s1619 + $0xb0] sm:$0x1]
        %v2023 = vld [vmem:[%s1619 + $0xb4] sm:$0xf]
        %v2024 = vld [vmem:[%s1619 + $0xb8] sm:$0xf]
        %v2025 = vld [vmem:[%s1619 + $0xbc] sm:$0x1]
        %v2027 = vshrl.u32 %v1978, 16
        %v2029 = vrot.slane %v2027, 4
        %v2030 = vshll.u32 %v1978, 16
        %v2032 = vrot.slane %v2030, 5
        %v2033 = vor.u32 %v2029, %v2032
        %v2034 = vrot.slane %v2033, 4
        %v2036 = vshll.u32 %v1979, 16
        %v2038 = vrot.slane %v2036, 5
        %v2039 = vsel %vm221, %v2034, %v2038
        %v2040 = vshrl.u32 %v1979, 16
        %v2042 = vrot.slane %v2040, 4
        %v2043 = vor.u32 %v2042, %v2038
        %v2044 = vrot.slane %v2043, 4
        %v2046 = vshll.u32 %v1980, 16
        %v2048 = vrot.slane %v2046, 5
        %v2049 = vsel %vm221, %v2044, %v2048
        %v2051 = vshrl.u32 %v1981, 16
        %v2053 = vrot.slane %v2051, 4
        %v2054 = vshll.u32 %v1981, 16
        %v2056 = vrot.slane %v2054, 5
        %v2057 = vor.u32 %v2053, %v2056
        %v2058 = vrot.slane %v2057, 4
        %v2060 = vshll.u32 %v1982, 16
        %v2062 = vrot.slane %v2060, 5
        %v2063 = vsel %vm221, %v2058, %v2062
        %v2064 = vshrl.u32 %v1982, 16
        %v2066 = vrot.slane %v2064, 4
        %v2067 = vor.u32 %v2066, %v2062
        %v2068 = vrot.slane %v2067, 4
        %v2070 = vshll.u32 %v1983, 16
        %v2072 = vrot.slane %v2070, 5
        %v2073 = vsel %vm221, %v2068, %v2072
        %v2075 = vshrl.u32 %v1984, 16
        %v2077 = vrot.slane %v2075, 4
        %v2078 = vshll.u32 %v1984, 16
        %v2080 = vrot.slane %v2078, 5
        %v2081 = vor.u32 %v2077, %v2080
        %v2082 = vrot.slane %v2081, 4
        %v2084 = vshll.u32 %v1985, 16
        %v2086 = vrot.slane %v2084, 5
        %v2087 = vsel %vm221, %v2082, %v2086
        %v2088 = vshrl.u32 %v1985, 16
        %v2090 = vrot.slane %v2088, 4
        %v2091 = vor.u32 %v2090, %v2086
        %v2092 = vrot.slane %v2091, 4
        %v2094 = vshll.u32 %v1986, 16
        %v2096 = vrot.slane %v2094, 5
        %v2097 = vsel %vm221, %v2092, %v2096
        %v2099 = vshrl.u32 %v1987, 16
        %v2101 = vrot.slane %v2099, 4
        %v2102 = vshll.u32 %v1987, 16
        %v2104 = vrot.slane %v2102, 5
        %v2105 = vor.u32 %v2101, %v2104
        %v2106 = vrot.slane %v2105, 4
        %v2108 = vshll.u32 %v1988, 16
        %v2110 = vrot.slane %v2108, 5
        %v2111 = vsel %vm221, %v2106, %v2110
        %v2112 = vshrl.u32 %v1988, 16
        %v2114 = vrot.slane %v2112, 4
        %v2115 = vor.u32 %v2114, %v2110
        %v2116 = vrot.slane %v2115, 4
        %v2118 = vshll.u32 %v1989, 16
        %v2120 = vrot.slane %v2118, 5
        %v2121 = vsel %vm221, %v2116, %v2120
        %v2123 = vshrl.u32 %v1990, 16
        %v2125 = vrot.slane %v2123, 4
        %v2126 = vshll.u32 %v1990, 16
        %v2128 = vrot.slane %v2126, 5
        %v2129 = vor.u32 %v2125, %v2128
        %v2130 = vrot.slane %v2129, 4
        %v2132 = vshll.u32 %v1991, 16
        %v2134 = vrot.slane %v2132, 5
        %v2135 = vsel %vm221, %v2130, %v2134
        %v2136 = vshrl.u32 %v1991, 16
        %v2138 = vrot.slane %v2136, 4
        %v2139 = vor.u32 %v2138, %v2134
        %v2140 = vrot.slane %v2139, 4
        %v2142 = vshll.u32 %v1992, 16
        %v2144 = vrot.slane %v2142, 5
        %v2145 = vsel %vm221, %v2140, %v2144
        %v2147 = vshrl.u32 %v1993, 16
        %v2149 = vrot.slane %v2147, 4
        %v2150 = vshll.u32 %v1993, 16
        %v2152 = vrot.slane %v2150, 5
        %v2153 = vor.u32 %v2149, %v2152
        %v2154 = vrot.slane %v2153, 4
        %v2156 = vshll.u32 %v1994, 16
        %v2158 = vrot.slane %v2156, 5
        %v2159 = vsel %vm221, %v2154, %v2158
        %v2160 = vshrl.u32 %v1994, 16
        %v2162 = vrot.slane %v2160, 4
        %v2163 = vor.u32 %v2162, %v2158
        %v2164 = vrot.slane %v2163, 4
        %v2166 = vshll.u32 %v1995, 16
        %v2168 = vrot.slane %v2166, 5
        %v2169 = vsel %vm221, %v2164, %v2168
        %v2171 = vshrl.u32 %v1996, 16
        %v2173 = vrot.slane %v2171, 4
        %v2174 = vshll.u32 %v1996, 16
        %v2176 = vrot.slane %v2174, 5
        %v2177 = vor.u32 %v2173, %v2176
        %v2178 = vrot.slane %v2177, 4
        %v2180 = vshll.u32 %v1997, 16
        %v2182 = vrot.slane %v2180, 5
        %v2183 = vsel %vm221, %v2178, %v2182
        %v2184 = vshrl.u32 %v1997, 16
        %v2186 = vrot.slane %v2184, 4
        %v2187 = vor.u32 %v2186, %v2182
        %v2188 = vrot.slane %v2187, 4
        %v2190 = vshll.u32 %v1998, 16
        %v2192 = vrot.slane %v2190, 5
        %v2193 = vsel %vm221, %v2188, %v2192
        %v2195 = vshrl.u32 %v1999, 16
        %v2197 = vrot.slane %v2195, 4
        %v2198 = vshll.u32 %v1999, 16
        %v2200 = vrot.slane %v2198, 5
        %v2201 = vor.u32 %v2197, %v2200
        %v2202 = vrot.slane %v2201, 4
        %v2204 = vshll.u32 %v2000, 16
        %v2206 = vrot.slane %v2204, 5
        %v2207 = vsel %vm221, %v2202, %v2206
        %v2208 = vshrl.u32 %v2000, 16
        %v2210 = vrot.slane %v2208, 4
        %v2211 = vor.u32 %v2210, %v2206
        %v2212 = vrot.slane %v2211, 4
        %v2214 = vshll.u32 %v2001, 16
        %v2216 = vrot.slane %v2214, 5
        %v2217 = vsel %vm221, %v2212, %v2216
        %v2219 = vshrl.u32 %v2002, 16
        %v2221 = vrot.slane %v2219, 4
        %v2222 = vshll.u32 %v2002, 16
        %v2224 = vrot.slane %v2222, 5
        %v2225 = vor.u32 %v2221, %v2224
        %v2226 = vrot.slane %v2225, 4
        %v2228 = vshll.u32 %v2003, 16
        %v2230 = vrot.slane %v2228, 5
        %v2231 = vsel %vm221, %v2226, %v2230
        %v2232 = vshrl.u32 %v2003, 16
        %v2234 = vrot.slane %v2232, 4
        %v2235 = vor.u32 %v2234, %v2230
        %v2236 = vrot.slane %v2235, 4
        %v2238 = vshll.u32 %v2004, 16
        %v2240 = vrot.slane %v2238, 5
        %v2241 = vsel %vm221, %v2236, %v2240
        %v2243 = vshrl.u32 %v2005, 16
        %v2245 = vrot.slane %v2243, 4
        %v2246 = vshll.u32 %v2005, 16
        %v2248 = vrot.slane %v2246, 5
        %v2249 = vor.u32 %v2245, %v2248
        %v2250 = vrot.slane %v2249, 4
        %v2252 = vshll.u32 %v2006, 16
        %v2254 = vrot.slane %v2252, 5
        %v2255 = vsel %vm221, %v2250, %v2254
        %v2256 = vshrl.u32 %v2006, 16
        %v2258 = vrot.slane %v2256, 4
        %v2259 = vor.u32 %v2258, %v2254
        %v2260 = vrot.slane %v2259, 4
        %v2262 = vshll.u32 %v2007, 16
        %v2264 = vrot.slane %v2262, 5
        %v2265 = vsel %vm221, %v2260, %v2264
        %v2267 = vshrl.u32 %v2008, 16
        %v2269 = vrot.slane %v2267, 4
        %v2270 = vshll.u32 %v2008, 16
        %v2272 = vrot.slane %v2270, 5
        %v2273 = vor.u32 %v2269, %v2272
        %v2274 = vrot.slane %v2273, 4
        %v2276 = vshll.u32 %v2009, 16
        %v2278 = vrot.slane %v2276, 5
        %v2279 = vsel %vm221, %v2274, %v2278
        %v2280 = vshrl.u32 %v2009, 16
        %v2282 = vrot.slane %v2280, 4
        %v2283 = vor.u32 %v2282, %v2278
        %v2284 = vrot.slane %v2283, 4
        %v2286 = vshll.u32 %v2010, 16
        %v2288 = vrot.slane %v2286, 5
        %v2289 = vsel %vm221, %v2284, %v2288
        %v2291 = vshrl.u32 %v2011, 16
        %v2293 = vrot.slane %v2291, 4
        %v2294 = vshll.u32 %v2011, 16
        %v2296 = vrot.slane %v2294, 5
        %v2297 = vor.u32 %v2293, %v2296
        %v2298 = vrot.slane %v2297, 4
        %v2300 = vshll.u32 %v2012, 16
        %v2302 = vrot.slane %v2300, 5
        %v2303 = vsel %vm221, %v2298, %v2302
        %v2304 = vshrl.u32 %v2012, 16
        %v2306 = vrot.slane %v2304, 4
        %v2307 = vor.u32 %v2306, %v2302
        %v2308 = vrot.slane %v2307, 4
        %v2310 = vshll.u32 %v2013, 16
        %v2312 = vrot.slane %v2310, 5
        %v2313 = vsel %vm221, %v2308, %v2312
        %v2315 = vshrl.u32 %v2014, 16
        %v2317 = vrot.slane %v2315, 4
        %v2318 = vshll.u32 %v2014, 16
        %v2320 = vrot.slane %v2318, 5
        %v2321 = vor.u32 %v2317, %v2320
        %v2322 = vrot.slane %v2321, 4
        %v2324 = vshll.u32 %v2015, 16
        %v2326 = vrot.slane %v2324, 5
        %v2327 = vsel %vm221, %v2322, %v2326
        %v2328 = vshrl.u32 %v2015, 16
        %v2330 = vrot.slane %v2328, 4
        %v2331 = vor.u32 %v2330, %v2326
        %v2332 = vrot.slane %v2331, 4
        %v2334 = vshll.u32 %v2016, 16
        %v2336 = vrot.slane %v2334, 5
        %v2337 = vsel %vm221, %v2332, %v2336
        %v2339 = vshrl.u32 %v2017, 16
        %v2341 = vrot.slane %v2339, 4
        %v2342 = vshll.u32 %v2017, 16
        %v2344 = vrot.slane %v2342, 5
        %v2345 = vor.u32 %v2341, %v2344
        %v2346 = vrot.slane %v2345, 4
        %v2348 = vshll.u32 %v2018, 16
        %v2350 = vrot.slane %v2348, 5
        %v2351 = vsel %vm221, %v2346, %v2350
        %v2352 = vshrl.u32 %v2018, 16
        %v2354 = vrot.slane %v2352, 4
        %v2355 = vor.u32 %v2354, %v2350
        %v2356 = vrot.slane %v2355, 4
        %v2358 = vshll.u32 %v2019, 16
        %v2360 = vrot.slane %v2358, 5
        %v2361 = vsel %vm221, %v2356, %v2360
        %v2363 = vshrl.u32 %v2020, 16
        %v2365 = vrot.slane %v2363, 4
        %v2366 = vshll.u32 %v2020, 16
        %v2368 = vrot.slane %v2366, 5
        %v2369 = vor.u32 %v2365, %v2368
        %v2370 = vrot.slane %v2369, 4
        %v2372 = vshll.u32 %v2021, 16
        %v2374 = vrot.slane %v2372, 5
        %v2375 = vsel %vm221, %v2370, %v2374
        %v2376 = vshrl.u32 %v2021, 16
        %v2378 = vrot.slane %v2376, 4
        %v2379 = vor.u32 %v2378, %v2374
        %v2380 = vrot.slane %v2379, 4
        %v2382 = vshll.u32 %v2022, 16
        %v2384 = vrot.slane %v2382, 5
        %v2385 = vsel %vm221, %v2380, %v2384
        %v2387 = vshrl.u32 %v2023, 16
        %v2389 = vrot.slane %v2387, 4
        %v2390 = vshll.u32 %v2023, 16
        %v2392 = vrot.slane %v2390, 5
        %v2393 = vor.u32 %v2389, %v2392
        %v2394 = vrot.slane %v2393, 4
        %v2396 = vshll.u32 %v2024, 16
        %v2398 = vrot.slane %v2396, 5
        %v2399 = vsel %vm221, %v2394, %v2398
        %v2400 = vshrl.u32 %v2024, 16
        %v2402 = vrot.slane %v2400, 4
        %v2403 = vor.u32 %v2402, %v2398
        %v2404 = vrot.slane %v2403, 4
        %v2406 = vshll.u32 %v2025, 16
        %v2408 = vrot.slane %v2406, 5
        %v2409 = vsel %vm221, %v2404, %v2408
        %s2410 = scalar_lea.vmem %s1, 16
        %v2411 = vld [vmem:[%s2410] sm:$0xf]
        %v2412 = vunpack.c.l.b16 %v2039
        %v2413 = vunpack.c.l.b16 %v2049
        %v2414 = vunpack.c.l.b16 %v2063
        %v2415 = vunpack.c.l.b16 %v2073
        %v2416 = vunpack.c.l.b16 %v2087
        %v2417 = vunpack.c.l.b16 %v2097
        %v2418 = vunpack.c.l.b16 %v2111
        %v2419 = vunpack.c.l.b16 %v2121
        %v2420 = vunpack.c.l.b16 %v2135
        %v2421 = vunpack.c.l.b16 %v2145
        %v2422 = vunpack.c.l.b16 %v2159
        %v2423 = vunpack.c.l.b16 %v2169
        %v2424 = vunpack.c.l.b16 %v2183
        %v2425 = vunpack.c.l.b16 %v2193
        %v2426 = vunpack.c.l.b16 %v2207
        %v2427 = vunpack.c.l.b16 %v2217
        %v2428 = vunpack.c.l.b16 %v2231
        %v2429 = vunpack.c.l.b16 %v2241
        %v2430 = vunpack.c.l.b16 %v2255
        %v2431 = vunpack.c.l.b16 %v2265
        %v2432 = vunpack.c.l.b16 %v2279
        %v2433 = vunpack.c.l.b16 %v2289
        %v2434 = vunpack.c.l.b16 %v2303
        %v2435 = vunpack.c.l.b16 %v2313
        %v2436 = vunpack.c.l.b16 %v2327
        %v2437 = vunpack.c.l.b16 %v2337
        %v2438 = vunpack.c.l.b16 %v2351
        %v2439 = vunpack.c.l.b16 %v2361
        %v2440 = vunpack.c.l.b16 %v2375
        %v2441 = vunpack.c.l.b16 %v2385
        %v2442 = vunpack.c.l.b16 %v2399
        %v2443 = vunpack.c.l.b16 %v2409
        %v2444 = vpack.c.b16 %v2413, %v2412
        %v2445 = vpack.c.b16 %v2415, %v2414
        %v2446 = vpack.c.b16 %v2417, %v2416
        %v2447 = vpack.c.b16 %v2419, %v2418
        %v2448 = vpack.c.b16 %v2421, %v2420
        %v2449 = vpack.c.b16 %v2423, %v2422
        %v2450 = vpack.c.b16 %v2425, %v2424
        %v2451 = vpack.c.b16 %v2427, %v2426
        %v2452 = vpack.c.b16 %v2429, %v2428
        %v2453 = vpack.c.b16 %v2431, %v2430
        %v2454 = vpack.c.b16 %v2433, %v2432
        %v2455 = vpack.c.b16 %v2435, %v2434
        %v2456 = vpack.c.b16 %v2437, %v2436
        %v2457 = vpack.c.b16 %v2439, %v2438
        %v2458 = vpack.c.b16 %v2441, %v2440
        %v2459 = vpack.c.b16 %v2443, %v2442
        %v2461 = vsel %vm656, %v2444, 0
        %v2464 = vsel %vm656, %v2445, 0
        %v2467 = vsel %vm656, %v2446, 0
        %v2470 = vsel %vm656, %v2447, 0
        %v2473 = vsel %vm656, %v2448, 0
        %v2476 = vsel %vm656, %v2449, 0
        %v2479 = vsel %vm656, %v2450, 0
        %v2482 = vsel %vm656, %v2451, 0
        %v2485 = vsel %vm656, %v2452, 0
        %v2488 = vsel %vm656, %v2453, 0
        %v2491 = vsel %vm656, %v2454, 0
        %v2494 = vsel %vm656, %v2455, 0
        %v2497 = vsel %vm656, %v2456, 0
        %v2500 = vsel %vm656, %v2457, 0
        %v2503 = vsel %vm656, %v2458, 0
        %v2506 = vsel %vm656, %v2459, 0
        %v2509 = vsel %vm705, %v2411, 0
        %2511 = vmatprep.subr.bf16.mxu0 0
        %2512 = vmatpush1.bf16.msra.mxu0 %v2509
        %2513 = vmatprep.subr.bf16.mxu0 0
        %2514 = vmatpush1.bf16.msra.mxu0 0
        %2515 = vmatprep.subr.bf16.mxu0 0
        %2516 = vmatpush1.bf16.msra.mxu0 0
        %2517 = vmatprep.subr.bf16.mxu0 0
        %2518 = vmatpush1.bf16.msra.mxu0 0
        %2519 = vmatprep.subr.bf16.mxu0 0
        %2520 = vmatpush1.bf16.msra.mxu0 0
        %2521 = vmatprep.subr.bf16.mxu0 0
        %2522 = vmatpush1.bf16.msra.mxu0 0
        %2523 = vmatprep.subr.bf16.mxu0 0
        %2524 = vmatpush1.bf16.msra.mxu0 0
        %2525 = vmatprep.subr.bf16.mxu0 0
        %2526 = vmatpush1.bf16.msra.mxu0 0
        %2527 = vmatprep.subr.bf16.mxu0 0
        %2528 = vmatpush1.bf16.msra.mxu0 0
        %2529 = vmatprep.subr.bf16.mxu0 0
        %2530 = vmatpush1.bf16.msra.mxu0 0
        %2531 = vmatprep.subr.bf16.mxu0 0
        %2532 = vmatpush1.bf16.msra.mxu0 0
        %2533 = vmatprep.subr.bf16.mxu0 0
        %2534 = vmatpush1.bf16.msra.mxu0 0
        %2535 = vmatprep.subr.bf16.mxu0 0
        %2536 = vmatpush1.bf16.msra.mxu0 0
        %2537 = vmatprep.subr.bf16.mxu0 0
        %2538 = vmatpush1.bf16.msra.mxu0 0
        %2539 = vmatprep.subr.bf16.mxu0 0
        %2540 = vmatpush1.bf16.msra.mxu0 0
        %2541 = vmatprep.subr.bf16.mxu0 0
        %2542 = vmatpush1.bf16.msra.mxu0 0
        %2543 = vmatprep.mubr.bf16.mxu0 0
        %2544 = vmatmul.mubr.bf16.gmra.mrb[0].mxu0 %v2461
        %v2545 = vpop.f32.mrb[0].mxu0
        %v2546 = vadd.f32 0.0, %v2545
        %v2547 = vpop.f32.mrb[0].mxu0
        %v2548 = vpop.f32.mrb[0].mxu0
        %v2549 = vadd.f32 0.0, %v2548
        %v2550 = vpop.f32.mrb[0].mxu0
        %2551 = vmatprep.mubr.bf16.mxu0 0
        %2552 = vmatmul.mubr.bf16.gmra.mrb[0].mxu0 %v2464
        %v2553 = vpop.f32.mrb[0].mxu0
        %v2554 = vadd.f32 0.0, %v2553
        %v2555 = vpop.f32.mrb[0].mxu0
        %v2556 = vpop.f32.mrb[0].mxu0
        %v2557 = vadd.f32 0.0, %v2556
        %v2558 = vpop.f32.mrb[0].mxu0
        %2559 = vmatprep.mubr.bf16.mxu0 0
        %2560 = vmatmul.mubr.bf16.gmra.mrb[0].mxu0 %v2467
        %v2561 = vpop.f32.mrb[0].mxu0
        %v2562 = vadd.f32 0.0, %v2561
        %v2563 = vpop.f32.mrb[0].mxu0
        %v2564 = vpop.f32.mrb[0].mxu0
        %v2565 = vadd.f32 0.0, %v2564
        %v2566 = vpop.f32.mrb[0].mxu0
        %2567 = vmatprep.mubr.bf16.mxu0 0
        %2568 = vmatmul.mubr.bf16.gmra.mrb[0].mxu0 %v2470
        %v2569 = vpop.f32.mrb[0].mxu0
        %v2570 = vadd.f32 0.0, %v2569
        %v2571 = vpop.f32.mrb[0].mxu0
        %v2572 = vpop.f32.mrb[0].mxu0
        %v2573 = vadd.f32 0.0, %v2572
        %v2574 = vpop.f32.mrb[0].mxu0
        %2575 = vmatprep.mubr.bf16.mxu0 0
        %2576 = vmatmul.mubr.bf16.gmra.mrb[0].mxu0 %v2473
        %v2577 = vpop.f32.mrb[0].mxu0
        %v2578 = vadd.f32 0.0, %v2577
        %v2579 = vpop.f32.mrb[0].mxu0
        %v2580 = vpop.f32.mrb[0].mxu0
        %v2581 = vadd.f32 0.0, %v2580
        %v2582 = vpop.f32.mrb[0].mxu0
        %2583 = vmatprep.mubr.bf16.mxu0 0
        %2584 = vmatmul.mubr.bf16.gmra.mrb[0].mxu0 %v2476
        %v2585 = vpop.f32.mrb[0].mxu0
        %v2586 = vadd.f32 0.0, %v2585
        %v2587 = vpop.f32.mrb[0].mxu0
        %v2588 = vpop.f32.mrb[0].mxu0
        %v2589 = vadd.f32 0.0, %v2588
        %v2590 = vpop.f32.mrb[0].mxu0
        %2591 = vmatprep.mubr.bf16.mxu0 0
        %2592 = vmatmul.mubr.bf16.gmra.mrb[0].mxu0 %v2479
        %v2593 = vpop.f32.mrb[0].mxu0
        %v2594 = vadd.f32 0.0, %v2593
        %v2595 = vpop.f32.mrb[0].mxu0
        %v2596 = vpop.f32.mrb[0].mxu0
        %v2597 = vadd.f32 0.0, %v2596
        %v2598 = vpop.f32.mrb[0].mxu0
        %2599 = vmatprep.mubr.bf16.mxu0 0
        %2600 = vmatmul.mubr.bf16.gmra.mrb[0].mxu0 %v2482
        %v2601 = vpop.f32.mrb[0].mxu0
        %v2602 = vadd.f32 0.0, %v2601
        %v2603 = vpop.f32.mrb[0].mxu0
        %v2604 = vpop.f32.mrb[0].mxu0
        %v2605 = vadd.f32 0.0, %v2604
        %v2606 = vpop.f32.mrb[0].mxu0
        %2607 = vmatprep.mubr.bf16.mxu0 0
        %2608 = vmatmul.mubr.bf16.gmra.mrb[0].mxu0 %v2485
        %v2609 = vpop.f32.mrb[0].mxu0
        %v2610 = vadd.f32 0.0, %v2609
        %v2611 = vpop.f32.mrb[0].mxu0
        %v2612 = vpop.f32.mrb[0].mxu0
        %v2613 = vadd.f32 0.0, %v2612
        %v2614 = vpop.f32.mrb[0].mxu0
        %2615 = vmatprep.mubr.bf16.mxu0 0
        %2616 = vmatmul.mubr.bf16.gmra.mrb[0].mxu0 %v2488
        %v2617 = vpop.f32.mrb[0].mxu0
        %v2618 = vadd.f32 0.0, %v2617
        %v2619 = vpop.f32.mrb[0].mxu0
        %v2620 = vpop.f32.mrb[0].mxu0
        %v2621 = vadd.f32 0.0, %v2620
        %v2622 = vpop.f32.mrb[0].mxu0
        %2623 = vmatprep.mubr.bf16.mxu0 0
        %2624 = vmatmul.mubr.bf16.gmra.mrb[0].mxu0 %v2491
        %v2625 = vpop.f32.mrb[0].mxu0
        %v2626 = vadd.f32 0.0, %v2625
        %v2627 = vpop.f32.mrb[0].mxu0
        %v2628 = vpop.f32.mrb[0].mxu0
        %v2629 = vadd.f32 0.0, %v2628
        %v2630 = vpop.f32.mrb[0].mxu0
        %2631 = vmatprep.mubr.bf16.mxu0 0
        %2632 = vmatmul.mubr.bf16.gmra.mrb[0].mxu0 %v2494
        %v2633 = vpop.f32.mrb[0].mxu0
        %v2634 = vadd.f32 0.0, %v2633
        %v2635 = vpop.f32.mrb[0].mxu0
        %v2636 = vpop.f32.mrb[0].mxu0
        %v2637 = vadd.f32 0.0, %v2636
        %v2638 = vpop.f32.mrb[0].mxu0
        %2639 = vmatprep.mubr.bf16.mxu0 0
        %2640 = vmatmul.mubr.bf16.gmra.mrb[0].mxu0 %v2497
        %v2641 = vpop.f32.mrb[0].mxu0
        %v2642 = vadd.f32 0.0, %v2641
        %v2643 = vpop.f32.mrb[0].mxu0
        %v2644 = vpop.f32.mrb[0].mxu0
        %v2645 = vadd.f32 0.0, %v2644
        %v2646 = vpop.f32.mrb[0].mxu0
        %2647 = vmatprep.mubr.bf16.mxu0 0
        %2648 = vmatmul.mubr.bf16.gmra.mrb[0].mxu0 %v2500
        %v2649 = vpop.f32.mrb[0].mxu0
        %v2650 = vadd.f32 0.0, %v2649
        %v2651 = vpop.f32.mrb[0].mxu0
        %v2652 = vpop.f32.mrb[0].mxu0
        %v2653 = vadd.f32 0.0, %v2652
        %v2654 = vpop.f32.mrb[0].mxu0
        %2655 = vmatprep.mubr.bf16.mxu0 0
        %2656 = vmatmul.mubr.bf16.gmra.mrb[0].mxu0 %v2503
        %v2657 = vpop.f32.mrb[0].mxu0
        %v2658 = vadd.f32 0.0, %v2657
        %v2659 = vpop.f32.mrb[0].mxu0
        %v2660 = vpop.f32.mrb[0].mxu0
        %v2661 = vadd.f32 0.0, %v2660
        %v2662 = vpop.f32.mrb[0].mxu0
        %2663 = vmatprep.mubr.bf16.mxu0 0
        %2664 = vmatmul.mubr.bf16.gmra.mrb[0].mxu0 %v2506
        %v2665 = vpop.f32.mrb[0].mxu0
        %v2666 = vadd.f32 0.0, %v2665
        %v2667 = vpop.f32.mrb[0].mxu0
        %v2668 = vpop.f32.mrb[0].mxu0
        %v2669 = vadd.f32 0.0, %v2668
        %v2670 = vpop.f32.mrb[0].mxu0
        %2671 = vdwg.mxu0
        %v2672 = vadd.f32 %v1946, %v2546
        %v2673 = vadd.f32 %v1947, %v2549
        %v2674 = vadd.f32 %v1948, %v2554
        %v2675 = vadd.f32 %v1949, %v2557
        %v2676 = vadd.f32 %v1950, %v2562
        %v2677 = vadd.f32 %v1951, %v2565
        %v2678 = vadd.f32 %v1952, %v2570
        %v2679 = vadd.f32 %v1953, %v2573
        %v2680 = vadd.f32 %v1954, %v2578
        %v2681 = vadd.f32 %v1955, %v2581
        %v2682 = vadd.f32 %v1956, %v2586
        %v2683 = vadd.f32 %v1957, %v2589
        %v2684 = vadd.f32 %v1958, %v2594
        %v2685 = vadd.f32 %v1959, %v2597
        %v2686 = vadd.f32 %v1960, %v2602
        %v2687 = vadd.f32 %v1961, %v2605
        %v2688 = vadd.f32 %v1962, %v2610
        %v2689 = vadd.f32 %v1963, %v2613
        %v2690 = vadd.f32 %v1964, %v2618
        %v2691 = vadd.f32 %v1965, %v2621
        %v2692 = vadd.f32 %v1966, %v2626
        %v2693 = vadd.f32 %v1967, %v2629
        %v2694 = vadd.f32 %v1968, %v2634
        %v2695 = vadd.f32 %v1969, %v2637
        %v2696 = vadd.f32 %v1970, %v2642
        %v2697 = vadd.f32 %v1971, %v2645
        %v2698 = vadd.f32 %v1972, %v2650
        %v2699 = vadd.f32 %v1973, %v2653
        %v2700 = vadd.f32 %v1974, %v2658
        %v2701 = vadd.f32 %v1975, %v2661
        %v2702 = vadd.f32 %v1976, %v2666
        %v2703 = vadd.f32 %v1977, %v2669
        %v2704 = vld [vmem:[%s1619] sm:$0xe]
        %v2705 = vld [vmem:[%s1619 + $0xc] sm:$0xe]
        %v2706 = vld [vmem:[%s1619 + $0x18] sm:$0xe]
        %v2707 = vld [vmem:[%s1619 + $0x24] sm:$0xe]
        %v2708 = vld [vmem:[%s1619 + $0x30] sm:$0xe]
        %v2709 = vld [vmem:[%s1619 + $0x3c] sm:$0xe]
        %v2710 = vld [vmem:[%s1619 + $0x48] sm:$0xe]
        %v2711 = vld [vmem:[%s1619 + $0x54] sm:$0xe]
        %v2712 = vld [vmem:[%s1619 + $0x60] sm:$0xe]
        %v2713 = vld [vmem:[%s1619 + $0x6c] sm:$0xe]
        %v2714 = vld [vmem:[%s1619 + $0x78] sm:$0xe]
        %v2715 = vld [vmem:[%s1619 + $0x84] sm:$0xe]
        %v2716 = vld [vmem:[%s1619 + $0x90] sm:$0xe]
        %v2717 = vld [vmem:[%s1619 + $0x9c] sm:$0xe]
        %v2718 = vld [vmem:[%s1619 + $0xa8] sm:$0xe]
        %v2719 = vld [vmem:[%s1619 + $0xb4] sm:$0xe]
        %v2768 = vrot.slane %v2704, 5
        %v2769 = vrot.slane %v2768, 4
        %v2770 = vrot.slane %v1979, 5
        %v2771 = vsel %vm1212, %v2769, %v2770
        %v2772 = vrot.slane %v2770, 4
        %v2773 = vrot.slane %v1980, 5
        %v2774 = vsel %vm1212, %v2772, %v2773
        %v2775 = vrot.slane %v2705, 5
        %v2776 = vrot.slane %v2775, 4
        %v2777 = vrot.slane %v1982, 5
        %v2778 = vsel %vm1212, %v2776, %v2777
        %v2779 = vrot.slane %v2777, 4
        %v2780 = vrot.slane %v1983, 5
        %v2781 = vsel %vm1212, %v2779, %v2780
        %v2782 = vrot.slane %v2706, 5
        %v2783 = vrot.slane %v2782, 4
        %v2784 = vrot.slane %v1985, 5
        %v2785 = vsel %vm1212, %v2783, %v2784
        %v2786 = vrot.slane %v2784, 4
        %v2787 = vrot.slane %v1986, 5
        %v2788 = vsel %vm1212, %v2786, %v2787
        %v2789 = vrot.slane %v2707, 5
        %v2790 = vrot.slane %v2789, 4
        %v2791 = vrot.slane %v1988, 5
        %v2792 = vsel %vm1212, %v2790, %v2791
        %v2793 = vrot.slane %v2791, 4
        %v2794 = vrot.slane %v1989, 5
        %v2795 = vsel %vm1212, %v2793, %v2794
        %v2796 = vrot.slane %v2708, 5
        %v2797 = vrot.slane %v2796, 4
        %v2798 = vrot.slane %v1991, 5
        %v2799 = vsel %vm1212, %v2797, %v2798
        %v2800 = vrot.slane %v2798, 4
        %v2801 = vrot.slane %v1992, 5
        %v2802 = vsel %vm1212, %v2800, %v2801
        %v2803 = vrot.slane %v2709, 5
        %v2804 = vrot.slane %v2803, 4
        %v2805 = vrot.slane %v1994, 5
        %v2806 = vsel %vm1212, %v2804, %v2805
        %v2807 = vrot.slane %v2805, 4
        %v2808 = vrot.slane %v1995, 5
        %v2809 = vsel %vm1212, %v2807, %v2808
        %v2810 = vrot.slane %v2710, 5
        %v2811 = vrot.slane %v2810, 4
        %v2812 = vrot.slane %v1997, 5
        %v2813 = vsel %vm1212, %v2811, %v2812
        %v2814 = vrot.slane %v2812, 4
        %v2815 = vrot.slane %v1998, 5
        %v2816 = vsel %vm1212, %v2814, %v2815
        %v2817 = vrot.slane %v2711, 5
        %v2818 = vrot.slane %v2817, 4
        %v2819 = vrot.slane %v2000, 5
        %v2820 = vsel %vm1212, %v2818, %v2819
        %v2821 = vrot.slane %v2819, 4
        %v2822 = vrot.slane %v2001, 5
        %v2823 = vsel %vm1212, %v2821, %v2822
        %v2824 = vrot.slane %v2712, 5
        %v2825 = vrot.slane %v2824, 4
        %v2826 = vrot.slane %v2003, 5
        %v2827 = vsel %vm1212, %v2825, %v2826
        %v2828 = vrot.slane %v2826, 4
        %v2829 = vrot.slane %v2004, 5
        %v2830 = vsel %vm1212, %v2828, %v2829
        %v2831 = vrot.slane %v2713, 5
        %v2832 = vrot.slane %v2831, 4
        %v2833 = vrot.slane %v2006, 5
        %v2834 = vsel %vm1212, %v2832, %v2833
        %v2835 = vrot.slane %v2833, 4
        %v2836 = vrot.slane %v2007, 5
        %v2837 = vsel %vm1212, %v2835, %v2836
        %v2838 = vrot.slane %v2714, 5
        %v2839 = vrot.slane %v2838, 4
        %v2840 = vrot.slane %v2009, 5
        %v2841 = vsel %vm1212, %v2839, %v2840
        %v2842 = vrot.slane %v2840, 4
        %v2843 = vrot.slane %v2010, 5
        %v2844 = vsel %vm1212, %v2842, %v2843
        %v2845 = vrot.slane %v2715, 5
        %v2846 = vrot.slane %v2845, 4
        %v2847 = vrot.slane %v2012, 5
        %v2848 = vsel %vm1212, %v2846, %v2847
        %v2849 = vrot.slane %v2847, 4
        %v2850 = vrot.slane %v2013, 5
        %v2851 = vsel %vm1212, %v2849, %v2850
        %v2852 = vrot.slane %v2716, 5
        %v2853 = vrot.slane %v2852, 4
        %v2854 = vrot.slane %v2015, 5
        %v2855 = vsel %vm1212, %v2853, %v2854
        %v2856 = vrot.slane %v2854, 4
        %v2857 = vrot.slane %v2016, 5
        %v2858 = vsel %vm1212, %v2856, %v2857
        %v2859 = vrot.slane %v2717, 5
        %v2860 = vrot.slane %v2859, 4
        %v2861 = vrot.slane %v2018, 5
        %v2862 = vsel %vm1212, %v2860, %v2861
        %v2863 = vrot.slane %v2861, 4
        %v2864 = vrot.slane %v2019, 5
        %v2865 = vsel %vm1212, %v2863, %v2864
        %v2866 = vrot.slane %v2718, 5
        %v2867 = vrot.slane %v2866, 4
        %v2868 = vrot.slane %v2021, 5
        %v2869 = vsel %vm1212, %v2867, %v2868
        %v2870 = vrot.slane %v2868, 4
        %v2871 = vrot.slane %v2022, 5
        %v2872 = vsel %vm1212, %v2870, %v2871
        %v2873 = vrot.slane %v2719, 5
        %v2874 = vrot.slane %v2873, 4
        %v2875 = vrot.slane %v2024, 5
        %v2876 = vsel %vm1212, %v2874, %v2875
        %v2877 = vrot.slane %v2875, 4
        %v2878 = vrot.slane %v2025, 5
        %v2879 = vsel %vm1212, %v2877, %v2878
        %s2880 = scalar_lea.vmem %s1, 20
        %v2881 = vld [vmem:[%s2880] sm:$0xf]
        %v2882 = vunpack.c.l.b16 %v2771
        %v2883 = vunpack.c.l.b16 %v2774
        %v2884 = vunpack.c.l.b16 %v2778
        %v2885 = vunpack.c.l.b16 %v2781
        %v2886 = vunpack.c.l.b16 %v2785
        %v2887 = vunpack.c.l.b16 %v2788
        %v2888 = vunpack.c.l.b16 %v2792
        %v2889 = vunpack.c.l.b16 %v2795
        %v2890 = vunpack.c.l.b16 %v2799
        %v2891 = vunpack.c.l.b16 %v2802
        %v2892 = vunpack.c.l.b16 %v2806
        %v2893 = vunpack.c.l.b16 %v2809
        %v2894 = vunpack.c.l.b16 %v2813
        %v2895 = vunpack.c.l.b16 %v2816
        %v2896 = vunpack.c.l.b16 %v2820
        %v2897 = vunpack.c.l.b16 %v2823
        %v2898 = vunpack.c.l.b16 %v2827
        %v2899 = vunpack.c.l.b16 %v2830
        %v2900 = vunpack.c.l.b16 %v2834
        %v2901 = vunpack.c.l.b16 %v2837
        %v2902 = vunpack.c.l.b16 %v2841
        %v2903 = vunpack.c.l.b16 %v2844
        %v2904 = vunpack.c.l.b16 %v2848
        %v2905 = vunpack.c.l.b16 %v2851
        %v2906 = vunpack.c.l.b16 %v2855
        %v2907 = vunpack.c.l.b16 %v2858
        %v2908 = vunpack.c.l.b16 %v2862
        %v2909 = vunpack.c.l.b16 %v2865
        %v2910 = vunpack.c.l.b16 %v2869
        %v2911 = vunpack.c.l.b16 %v2872
        %v2912 = vunpack.c.l.b16 %v2876
        %v2913 = vunpack.c.l.b16 %v2879
        %v2914 = vpack.c.b16 %v2883, %v2882
        %v2915 = vpack.c.b16 %v2885, %v2884
        %v2916 = vpack.c.b16 %v2887, %v2886
        %v2917 = vpack.c.b16 %v2889, %v2888
        %v2918 = vpack.c.b16 %v2891, %v2890
        %v2919 = vpack.c.b16 %v2893, %v2892
        %v2920 = vpack.c.b16 %v2895, %v2894
        %v2921 = vpack.c.b16 %v2897, %v2896
        %v2922 = vpack.c.b16 %v2899, %v2898
        %v2923 = vpack.c.b16 %v2901, %v2900
        %v2924 = vpack.c.b16 %v2903, %v2902
        %v2925 = vpack.c.b16 %v2905, %v2904
        %v2926 = vpack.c.b16 %v2907, %v2906
        %v2927 = vpack.c.b16 %v2909, %v2908
        %v2928 = vpack.c.b16 %v2911, %v2910
        %v2929 = vpack.c.b16 %v2913, %v2912
        %v2931 = vsel %vm656, %v2914, 0
        %v2934 = vsel %vm656, %v2915, 0
        %v2937 = vsel %vm656, %v2916, 0
        %v2940 = vsel %vm656, %v2917, 0
        %v2943 = vsel %vm656, %v2918, 0
        %v2946 = vsel %vm656, %v2919, 0
        %v2949 = vsel %vm656, %v2920, 0
        %v2952 = vsel %vm656, %v2921, 0
        %v2955 = vsel %vm656, %v2922, 0
        %v2958 = vsel %vm656, %v2923, 0
        %v2961 = vsel %vm656, %v2924, 0
        %v2964 = vsel %vm656, %v2925, 0
        %v2967 = vsel %vm656, %v2926, 0
        %v2970 = vsel %vm656, %v2927, 0
        %v2973 = vsel %vm656, %v2928, 0
        %v2976 = vsel %vm656, %v2929, 0
        %v2979 = vsel %vm705, %v2881, 0
        %2981 = vmatprep.subr.bf16.mxu0 0
        %2982 = vmatpush1.bf16.msra.mxu0 %v2979
        %2983 = vmatprep.subr.bf16.mxu0 0
        %2984 = vmatpush1.bf16.msra.mxu0 0
        %2985 = vmatprep.subr.bf16.mxu0 0
        %2986 = vmatpush1.bf16.msra.mxu0 0
        %2987 = vmatprep.subr.bf16.mxu0 0
        %2988 = vmatpush1.bf16.msra.mxu0 0
        %2989 = vmatprep.subr.bf16.mxu0 0
        %2990 = vmatpush1.bf16.msra.mxu0 0
        %2991 = vmatprep.subr.bf16.mxu0 0
        %2992 = vmatpush1.bf16.msra.mxu0 0
        %2993 = vmatprep.subr.bf16.mxu0 0
        %2994 = vmatpush1.bf16.msra.mxu0 0
        %2995 = vmatprep.subr.bf16.mxu0 0
        %2996 = vmatpush1.bf16.msra.mxu0 0
        %2997 = vmatprep.subr.bf16.mxu0 0
        %2998 = vmatpush1.bf16.msra.mxu0 0
        %2999 = vmatprep.subr.bf16.mxu0 0
        %3000 = vmatpush1.bf16.msra.mxu0 0
        %3001 = vmatprep.subr.bf16.mxu0 0
        %3002 = vmatpush1.bf16.msra.mxu0 0
        %3003 = vmatprep.subr.bf16.mxu0 0
        %3004 = vmatpush1.bf16.msra.mxu0 0
        %3005 = vmatprep.subr.bf16.mxu0 0
        %3006 = vmatpush1.bf16.msra.mxu0 0
        %3007 = vmatprep.subr.bf16.mxu0 0
        %3008 = vmatpush1.bf16.msra.mxu0 0
        %3009 = vmatprep.subr.bf16.mxu0 0
        %3010 = vmatpush1.bf16.msra.mxu0 0
        %3011 = vmatprep.subr.bf16.mxu0 0
        %3012 = vmatpush1.bf16.msra.mxu0 0
        %3013 = vmatprep.mubr.bf16.mxu0 0
        %3014 = vmatmul.mubr.bf16.gmra.mrb[0].mxu0 %v2931
        %v3015 = vpop.f32.mrb[0].mxu0
        %v3016 = vadd.f32 0.0, %v3015
        %v3017 = vpop.f32.mrb[0].mxu0
        %v3018 = vpop.f32.mrb[0].mxu0
        %v3019 = vadd.f32 0.0, %v3018
        %v3020 = vpop.f32.mrb[0].mxu0
        %3021 = vmatprep.mubr.bf16.mxu0 0
        %3022 = vmatmul.mubr.bf16.gmra.mrb[0].mxu0 %v2934
        %v3023 = vpop.f32.mrb[0].mxu0
        %v3024 = vadd.f32 0.0, %v3023
        %v3025 = vpop.f32.mrb[0].mxu0
        %v3026 = vpop.f32.mrb[0].mxu0
        %v3027 = vadd.f32 0.0, %v3026
        %v3028 = vpop.f32.mrb[0].mxu0
        %3029 = vmatprep.mubr.bf16.mxu0 0
        %3030 = vmatmul.mubr.bf16.gmra.mrb[0].mxu0 %v2937
        %v3031 = vpop.f32.mrb[0].mxu0
        %v3032 = vadd.f32 0.0, %v3031
        %v3033 = vpop.f32.mrb[0].mxu0
        %v3034 = vpop.f32.mrb[0].mxu0
        %v3035 = vadd.f32 0.0, %v3034
        %v3036 = vpop.f32.mrb[0].mxu0
        %3037 = vmatprep.mubr.bf16.mxu0 0
        %3038 = vmatmul.mubr.bf16.gmra.mrb[0].mxu0 %v2940
        %v3039 = vpop.f32.mrb[0].mxu0
        %v3040 = vadd.f32 0.0, %v3039
        %v3041 = vpop.f32.mrb[0].mxu0
        %v3042 = vpop.f32.mrb[0].mxu0
        %v3043 = vadd.f32 0.0, %v3042
        %v3044 = vpop.f32.mrb[0].mxu0
        %3045 = vmatprep.mubr.bf16.mxu0 0
        %3046 = vmatmul.mubr.bf16.gmra.mrb[0].mxu0 %v2943
        %v3047 = vpop.f32.mrb[0].mxu0
        %v3048 = vadd.f32 0.0, %v3047
        %v3049 = vpop.f32.mrb[0].mxu0
        %v3050 = vpop.f32.mrb[0].mxu0
        %v3051 = vadd.f32 0.0, %v3050
        %v3052 = vpop.f32.mrb[0].mxu0
        %3053 = vmatprep.mubr.bf16.mxu0 0
        %3054 = vmatmul.mubr.bf16.gmra.mrb[0].mxu0 %v2946
        %v3055 = vpop.f32.mrb[0].mxu0
        %v3056 = vadd.f32 0.0, %v3055
        %v3057 = vpop.f32.mrb[0].mxu0
        %v3058 = vpop.f32.mrb[0].mxu0
        %v3059 = vadd.f32 0.0, %v3058
        %v3060 = vpop.f32.mrb[0].mxu0
        %3061 = vmatprep.mubr.bf16.mxu0 0
        %3062 = vmatmul.mubr.bf16.gmra.mrb[0].mxu0 %v2949
        %v3063 = vpop.f32.mrb[0].mxu0
        %v3064 = vadd.f32 0.0, %v3063
        %v3065 = vpop.f32.mrb[0].mxu0
        %v3066 = vpop.f32.mrb[0].mxu0
        %v3067 = vadd.f32 0.0, %v3066
        %v3068 = vpop.f32.mrb[0].mxu0
        %3069 = vmatprep.mubr.bf16.mxu0 0
        %3070 = vmatmul.mubr.bf16.gmra.mrb[0].mxu0 %v2952
        %v3071 = vpop.f32.mrb[0].mxu0
        %v3072 = vadd.f32 0.0, %v3071
        %v3073 = vpop.f32.mrb[0].mxu0
        %v3074 = vpop.f32.mrb[0].mxu0
        %v3075 = vadd.f32 0.0, %v3074
        %v3076 = vpop.f32.mrb[0].mxu0
        %3077 = vmatprep.mubr.bf16.mxu0 0
        %3078 = vmatmul.mubr.bf16.gmra.mrb[0].mxu0 %v2955
        %v3079 = vpop.f32.mrb[0].mxu0
        %v3080 = vadd.f32 0.0, %v3079
        %v3081 = vpop.f32.mrb[0].mxu0
        %v3082 = vpop.f32.mrb[0].mxu0
        %v3083 = vadd.f32 0.0, %v3082
        %v3084 = vpop.f32.mrb[0].mxu0
        %3085 = vmatprep.mubr.bf16.mxu0 0
        %3086 = vmatmul.mubr.bf16.gmra.mrb[0].mxu0 %v2958
        %v3087 = vpop.f32.mrb[0].mxu0
        %v3088 = vadd.f32 0.0, %v3087
        %v3089 = vpop.f32.mrb[0].mxu0
        %v3090 = vpop.f32.mrb[0].mxu0
        %v3091 = vadd.f32 0.0, %v3090
        %v3092 = vpop.f32.mrb[0].mxu0
        %3093 = vmatprep.mubr.bf16.mxu0 0
        %3094 = vmatmul.mubr.bf16.gmra.mrb[0].mxu0 %v2961
        %v3095 = vpop.f32.mrb[0].mxu0
        %v3096 = vadd.f32 0.0, %v3095
        %v3097 = vpop.f32.mrb[0].mxu0
        %v3098 = vpop.f32.mrb[0].mxu0
        %v3099 = vadd.f32 0.0, %v3098
        %v3100 = vpop.f32.mrb[0].mxu0
        %3101 = vmatprep.mubr.bf16.mxu0 0
        %3102 = vmatmul.mubr.bf16.gmra.mrb[0].mxu0 %v2964
        %v3103 = vpop.f32.mrb[0].mxu0
        %v3104 = vadd.f32 0.0, %v3103
        %v3105 = vpop.f32.mrb[0].mxu0
        %v3106 = vpop.f32.mrb[0].mxu0
        %v3107 = vadd.f32 0.0, %v3106
        %v3108 = vpop.f32.mrb[0].mxu0
        %3109 = vmatprep.mubr.bf16.mxu0 0
        %3110 = vmatmul.mubr.bf16.gmra.mrb[0].mxu0 %v2967
        %v3111 = vpop.f32.mrb[0].mxu0
        %v3112 = vadd.f32 0.0, %v3111
        %v3113 = vpop.f32.mrb[0].mxu0
        %v3114 = vpop.f32.mrb[0].mxu0
        %v3115 = vadd.f32 0.0, %v3114
        %v3116 = vpop.f32.mrb[0].mxu0
        %3117 = vmatprep.mubr.bf16.mxu0 0
        %3118 = vmatmul.mubr.bf16.gmra.mrb[0].mxu0 %v2970
        %v3119 = vpop.f32.mrb[0].mxu0
        %v3120 = vadd.f32 0.0, %v3119
        %v3121 = vpop.f32.mrb[0].mxu0
        %v3122 = vpop.f32.mrb[0].mxu0
        %v3123 = vadd.f32 0.0, %v3122
        %v3124 = vpop.f32.mrb[0].mxu0
        %3125 = vmatprep.mubr.bf16.mxu0 0
        %3126 = vmatmul.mubr.bf16.gmra.mrb[0].mxu0 %v2973
        %v3127 = vpop.f32.mrb[0].mxu0
        %v3128 = vadd.f32 0.0, %v3127
        %v3129 = vpop.f32.mrb[0].mxu0
        %v3130 = vpop.f32.mrb[0].mxu0
        %v3131 = vadd.f32 0.0, %v3130
        %v3132 = vpop.f32.mrb[0].mxu0
        %3133 = vmatprep.mubr.bf16.mxu0 0
        %3134 = vmatmul.mubr.bf16.gmra.mrb[0].mxu0 %v2976
        %v3135 = vpop.f32.mrb[0].mxu0
        %v3136 = vadd.f32 0.0, %v3135
        %v3137 = vpop.f32.mrb[0].mxu0
        %v3138 = vpop.f32.mrb[0].mxu0
        %v3139 = vadd.f32 0.0, %v3138
        %v3140 = vpop.f32.mrb[0].mxu0
        %3141 = vdwg.mxu0
        %v3142 = vadd.f32 %v2672, %v3016
        %v3143 = vadd.f32 %v2673, %v3019
        %v3144 = vadd.f32 %v2674, %v3024
        %v3145 = vadd.f32 %v2675, %v3027
        %v3146 = vadd.f32 %v2676, %v3032
        %v3147 = vadd.f32 %v2677, %v3035
        %v3148 = vadd.f32 %v2678, %v3040
        %v3149 = vadd.f32 %v2679, %v3043
        %v3150 = vadd.f32 %v2680, %v3048
        %v3151 = vadd.f32 %v2681, %v3051
        %v3152 = vadd.f32 %v2682, %v3056
        %v3153 = vadd.f32 %v2683, %v3059
        %v3154 = vadd.f32 %v2684, %v3064
        %v3155 = vadd.f32 %v2685, %v3067
        %v3156 = vadd.f32 %v2686, %v3072
        %v3157 = vadd.f32 %v2687, %v3075
        %v3158 = vadd.f32 %v2688, %v3080
        %v3159 = vadd.f32 %v2689, %v3083
        %v3160 = vadd.f32 %v2690, %v3088
        %v3161 = vadd.f32 %v2691, %v3091
        %v3162 = vadd.f32 %v2692, %v3096
        %v3163 = vadd.f32 %v2693, %v3099
        %v3164 = vadd.f32 %v2694, %v3104
        %v3165 = vadd.f32 %v2695, %v3107
        %v3166 = vadd.f32 %v2696, %v3112
        %v3167 = vadd.f32 %v2697, %v3115
        %v3168 = vadd.f32 %v2698, %v3120
        %v3169 = vadd.f32 %v2699, %v3123
        %v3170 = vadd.f32 %v2700, %v3128
        %v3171 = vadd.f32 %v2701, %v3131
        %v3172 = vadd.f32 %v2702, %v3136
        %v3173 = vadd.f32 %v2703, %v3139
        %s3174 = scalar_lea.vmem %s168, 24
        %v3175 = vld [vmem:[%s3174] sm:$0xf]
        %v3176 = vld [vmem:[%s3174 + $0x4] sm:$0xf]
        %v3177 = vld [vmem:[%s3174 + $0xc] sm:$0xf]
        %v3178 = vld [vmem:[%s3174 + $0x10] sm:$0xf]
        %v3179 = vld [vmem:[%s3174 + $0x18] sm:$0xf]
        %v3180 = vld [vmem:[%s3174 + $0x1c] sm:$0xf]
        %v3181 = vld [vmem:[%s3174 + $0x24] sm:$0xf]
        %v3182 = vld [vmem:[%s3174 + $0x28] sm:$0xf]
        %v3183 = vld [vmem:[%s3174 + $0x30] sm:$0xf]
        %v3184 = vld [vmem:[%s3174 + $0x34] sm:$0xf]
        %v3185 = vld [vmem:[%s3174 + $0x3c] sm:$0xf]
        %v3186 = vld [vmem:[%s3174 + $0x40] sm:$0xf]
        %v3187 = vld [vmem:[%s3174 + $0x48] sm:$0xf]
        %v3188 = vld [vmem:[%s3174 + $0x4c] sm:$0xf]
        %v3189 = vld [vmem:[%s3174 + $0x54] sm:$0xf]
        %v3190 = vld [vmem:[%s3174 + $0x58] sm:$0xf]
        %v3191 = vld [vmem:[%s3174 + $0x60] sm:$0xf]
        %v3192 = vld [vmem:[%s3174 + $0x64] sm:$0xf]
        %v3193 = vld [vmem:[%s3174 + $0x6c] sm:$0xf]
        %v3194 = vld [vmem:[%s3174 + $0x70] sm:$0xf]
        %v3195 = vld [vmem:[%s3174 + $0x78] sm:$0xf]
        %v3196 = vld [vmem:[%s3174 + $0x7c] sm:$0xf]
        %v3197 = vld [vmem:[%s3174 + $0x84] sm:$0xf]
        %v3198 = vld [vmem:[%s3174 + $0x88] sm:$0xf]
        %v3199 = vld [vmem:[%s3174 + $0x90] sm:$0xf]
        %v3200 = vld [vmem:[%s3174 + $0x94] sm:$0xf]
        %v3201 = vld [vmem:[%s3174 + $0x9c] sm:$0xf]
        %v3202 = vld [vmem:[%s3174 + $0xa0] sm:$0xf]
        %v3203 = vld [vmem:[%s3174 + $0xa8] sm:$0xf]
        %v3204 = vld [vmem:[%s3174 + $0xac] sm:$0xf]
        %v3205 = vld [vmem:[%s3174 + $0xb4] sm:$0xf]
        %v3206 = vld [vmem:[%s3174 + $0xb8] sm:$0xf]
        %s3207 = scalar_lea.vmem %s1, 24
        %v3208 = vld [vmem:[%s3207] sm:$0xf]
        %v3241 = vunpack.c.l.b16 %v3175
        %v3242 = vunpack.c.l.b16 %v3176
        %v3243 = vunpack.c.l.b16 %v3177
        %v3244 = vunpack.c.l.b16 %v3178
        %v3245 = vunpack.c.l.b16 %v3179
        %v3246 = vunpack.c.l.b16 %v3180
        %v3247 = vunpack.c.l.b16 %v3181
        %v3248 = vunpack.c.l.b16 %v3182
        %v3249 = vunpack.c.l.b16 %v3183
        %v3250 = vunpack.c.l.b16 %v3184
        %v3251 = vunpack.c.l.b16 %v3185
        %v3252 = vunpack.c.l.b16 %v3186
        %v3253 = vunpack.c.l.b16 %v3187
        %v3254 = vunpack.c.l.b16 %v3188
        %v3255 = vunpack.c.l.b16 %v3189
        %v3256 = vunpack.c.l.b16 %v3190
        %v3257 = vunpack.c.l.b16 %v3191
        %v3258 = vunpack.c.l.b16 %v3192
        %v3259 = vunpack.c.l.b16 %v3193
        %v3260 = vunpack.c.l.b16 %v3194
        %v3261 = vunpack.c.l.b16 %v3195
        %v3262 = vunpack.c.l.b16 %v3196
        %v3263 = vunpack.c.l.b16 %v3197
        %v3264 = vunpack.c.l.b16 %v3198
        %v3265 = vunpack.c.l.b16 %v3199
        %v3266 = vunpack.c.l.b16 %v3200
        %v3267 = vunpack.c.l.b16 %v3201
        %v3268 = vunpack.c.l.b16 %v3202
        %v3269 = vunpack.c.l.b16 %v3203
        %v3270 = vunpack.c.l.b16 %v3204
        %v3271 = vunpack.c.l.b16 %v3205
        %v3272 = vunpack.c.l.b16 %v3206
        %v3273 = vpack.c.b16 %v3242, %v3241
        %v3274 = vpack.c.b16 %v3244, %v3243
        %v3275 = vpack.c.b16 %v3246, %v3245
        %v3276 = vpack.c.b16 %v3248, %v3247
        %v3277 = vpack.c.b16 %v3250, %v3249
        %v3278 = vpack.c.b16 %v3252, %v3251
        %v3279 = vpack.c.b16 %v3254, %v3253
        %v3280 = vpack.c.b16 %v3256, %v3255
        %v3281 = vpack.c.b16 %v3258, %v3257
        %v3282 = vpack.c.b16 %v3260, %v3259
        %v3283 = vpack.c.b16 %v3262, %v3261
        %v3284 = vpack.c.b16 %v3264, %v3263
        %v3285 = vpack.c.b16 %v3266, %v3265
        %v3286 = vpack.c.b16 %v3268, %v3267
        %v3287 = vpack.c.b16 %v3270, %v3269
        %v3288 = vpack.c.b16 %v3272, %v3271
        %v3290 = vsel %vm656, %v3273, 0
        %v3293 = vsel %vm656, %v3274, 0
        %v3296 = vsel %vm656, %v3275, 0
        %v3299 = vsel %vm656, %v3276, 0
        %v3302 = vsel %vm656, %v3277, 0
        %v3305 = vsel %vm656, %v3278, 0
        %v3308 = vsel %vm656, %v3279, 0
        %v3311 = vsel %vm656, %v3280, 0
        %v3314 = vsel %vm656, %v3281, 0
        %v3317 = vsel %vm656, %v3282, 0
        %v3320 = vsel %vm656, %v3283, 0
        %v3323 = vsel %vm656, %v3284, 0
        %v3326 = vsel %vm656, %v3285, 0
        %v3329 = vsel %vm656, %v3286, 0
        %v3332 = vsel %vm656, %v3287, 0
        %v3335 = vsel %vm656, %v3288, 0
        %v3338 = vsel %vm705, %v3208, 0
        %3340 = vmatprep.subr.bf16.mxu0 0
        %3341 = vmatpush1.bf16.msra.mxu0 %v3338
        %3342 = vmatprep.subr.bf16.mxu0 0
        %3343 = vmatpush1.bf16.msra.mxu0 0
        %3344 = vmatprep.subr.bf16.mxu0 0
        %3345 = vmatpush1.bf16.msra.mxu0 0
        %3346 = vmatprep.subr.bf16.mxu0 0
        %3347 = vmatpush1.bf16.msra.mxu0 0
        %3348 = vmatprep.subr.bf16.mxu0 0
        %3349 = vmatpush1.bf16.msra.mxu0 0
        %3350 = vmatprep.subr.bf16.mxu0 0
        %3351 = vmatpush1.bf16.msra.mxu0 0
        %3352 = vmatprep.subr.bf16.mxu0 0
        %3353 = vmatpush1.bf16.msra.mxu0 0
        %3354 = vmatprep.subr.bf16.mxu0 0
        %3355 = vmatpush1.bf16.msra.mxu0 0
        %3356 = vmatprep.subr.bf16.mxu0 0
        %3357 = vmatpush1.bf16.msra.mxu0 0
        %3358 = vmatprep.subr.bf16.mxu0 0
        %3359 = vmatpush1.bf16.msra.mxu0 0
        %3360 = vmatprep.subr.bf16.mxu0 0
        %3361 = vmatpush1.bf16.msra.mxu0 0
        %3362 = vmatprep.subr.bf16.mxu0 0
        %3363 = vmatpush1.bf16.msra.mxu0 0
        %3364 = vmatprep.subr.bf16.mxu0 0
        %3365 = vmatpush1.bf16.msra.mxu0 0
        %3366 = vmatprep.subr.bf16.mxu0 0
        %3367 = vmatpush1.bf16.msra.mxu0 0
        %3368 = vmatprep.subr.bf16.mxu0 0
        %3369 = vmatpush1.bf16.msra.mxu0 0
        %3370 = vmatprep.subr.bf16.mxu0 0
        %3371 = vmatpush1.bf16.msra.mxu0 0
        %3372 = vmatprep.mubr.bf16.mxu0 0
        %3373 = vmatmul.mubr.bf16.gmra.mrb[0].mxu0 %v3290
        %v3374 = vpop.f32.mrb[0].mxu0
        %v3375 = vadd.f32 0.0, %v3374
        %v3376 = vpop.f32.mrb[0].mxu0
        %v3377 = vpop.f32.mrb[0].mxu0
        %v3378 = vadd.f32 0.0, %v3377
        %v3379 = vpop.f32.mrb[0].mxu0
        %3380 = vmatprep.mubr.bf16.mxu0 0
        %3381 = vmatmul.mubr.bf16.gmra.mrb[0].mxu0 %v3293
        %v3382 = vpop.f32.mrb[0].mxu0
        %v3383 = vadd.f32 0.0, %v3382
        %v3384 = vpop.f32.mrb[0].mxu0
        %v3385 = vpop.f32.mrb[0].mxu0
        %v3386 = vadd.f32 0.0, %v3385
        %v3387 = vpop.f32.mrb[0].mxu0
        %3388 = vmatprep.mubr.bf16.mxu0 0
        %3389 = vmatmul.mubr.bf16.gmra.mrb[0].mxu0 %v3296
        %v3390 = vpop.f32.mrb[0].mxu0
        %v3391 = vadd.f32 0.0, %v3390
        %v3392 = vpop.f32.mrb[0].mxu0
        %v3393 = vpop.f32.mrb[0].mxu0
        %v3394 = vadd.f32 0.0, %v3393
        %v3395 = vpop.f32.mrb[0].mxu0
        %3396 = vmatprep.mubr.bf16.mxu0 0
        %3397 = vmatmul.mubr.bf16.gmra.mrb[0].mxu0 %v3299
        %v3398 = vpop.f32.mrb[0].mxu0
        %v3399 = vadd.f32 0.0, %v3398
        %v3400 = vpop.f32.mrb[0].mxu0
        %v3401 = vpop.f32.mrb[0].mxu0
        %v3402 = vadd.f32 0.0, %v3401
        %v3403 = vpop.f32.mrb[0].mxu0
        %3404 = vmatprep.mubr.bf16.mxu0 0
        %3405 = vmatmul.mubr.bf16.gmra.mrb[0].mxu0 %v3302
        %v3406 = vpop.f32.mrb[0].mxu0
        %v3407 = vadd.f32 0.0, %v3406
        %v3408 = vpop.f32.mrb[0].mxu0
        %v3409 = vpop.f32.mrb[0].mxu0
        %v3410 = vadd.f32 0.0, %v3409
        %v3411 = vpop.f32.mrb[0].mxu0
        %3412 = vmatprep.mubr.bf16.mxu0 0
        %3413 = vmatmul.mubr.bf16.gmra.mrb[0].mxu0 %v3305
        %v3414 = vpop.f32.mrb[0].mxu0
        %v3415 = vadd.f32 0.0, %v3414
        %v3416 = vpop.f32.mrb[0].mxu0
        %v3417 = vpop.f32.mrb[0].mxu0
        %v3418 = vadd.f32 0.0, %v3417
        %v3419 = vpop.f32.mrb[0].mxu0
        %3420 = vmatprep.mubr.bf16.mxu0 0
        %3421 = vmatmul.mubr.bf16.gmra.mrb[0].mxu0 %v3308
        %v3422 = vpop.f32.mrb[0].mxu0
        %v3423 = vadd.f32 0.0, %v3422
        %v3424 = vpop.f32.mrb[0].mxu0
        %v3425 = vpop.f32.mrb[0].mxu0
        %v3426 = vadd.f32 0.0, %v3425
        %v3427 = vpop.f32.mrb[0].mxu0
        %3428 = vmatprep.mubr.bf16.mxu0 0
        %3429 = vmatmul.mubr.bf16.gmra.mrb[0].mxu0 %v3311
        %v3430 = vpop.f32.mrb[0].mxu0
        %v3431 = vadd.f32 0.0, %v3430
        %v3432 = vpop.f32.mrb[0].mxu0
        %v3433 = vpop.f32.mrb[0].mxu0
        %v3434 = vadd.f32 0.0, %v3433
        %v3435 = vpop.f32.mrb[0].mxu0
        %3436 = vmatprep.mubr.bf16.mxu0 0
        %3437 = vmatmul.mubr.bf16.gmra.mrb[0].mxu0 %v3314
        %v3438 = vpop.f32.mrb[0].mxu0
        %v3439 = vadd.f32 0.0, %v3438
        %v3440 = vpop.f32.mrb[0].mxu0
        %v3441 = vpop.f32.mrb[0].mxu0
        %v3442 = vadd.f32 0.0, %v3441
        %v3443 = vpop.f32.mrb[0].mxu0
        %3444 = vmatprep.mubr.bf16.mxu0 0
        %3445 = vmatmul.mubr.bf16.gmra.mrb[0].mxu0 %v3317
        %v3446 = vpop.f32.mrb[0].mxu0
        %v3447 = vadd.f32 0.0, %v3446
        %v3448 = vpop.f32.mrb[0].mxu0
        %v3449 = vpop.f32.mrb[0].mxu0
        %v3450 = vadd.f32 0.0, %v3449
        %v3451 = vpop.f32.mrb[0].mxu0
        %3452 = vmatprep.mubr.bf16.mxu0 0
        %3453 = vmatmul.mubr.bf16.gmra.mrb[0].mxu0 %v3320
        %v3454 = vpop.f32.mrb[0].mxu0
        %v3455 = vadd.f32 0.0, %v3454
        %v3456 = vpop.f32.mrb[0].mxu0
        %v3457 = vpop.f32.mrb[0].mxu0
        %v3458 = vadd.f32 0.0, %v3457
        %v3459 = vpop.f32.mrb[0].mxu0
        %3460 = vmatprep.mubr.bf16.mxu0 0
        %3461 = vmatmul.mubr.bf16.gmra.mrb[0].mxu0 %v3323
        %v3462 = vpop.f32.mrb[0].mxu0
        %v3463 = vadd.f32 0.0, %v3462
        %v3464 = vpop.f32.mrb[0].mxu0
        %v3465 = vpop.f32.mrb[0].mxu0
        %v3466 = vadd.f32 0.0, %v3465
        %v3467 = vpop.f32.mrb[0].mxu0
        %3468 = vmatprep.mubr.bf16.mxu0 0
        %3469 = vmatmul.mubr.bf16.gmra.mrb[0].mxu0 %v3326
        %v3470 = vpop.f32.mrb[0].mxu0
        %v3471 = vadd.f32 0.0, %v3470
        %v3472 = vpop.f32.mrb[0].mxu0
        %v3473 = vpop.f32.mrb[0].mxu0
        %v3474 = vadd.f32 0.0, %v3473
        %v3475 = vpop.f32.mrb[0].mxu0
        %3476 = vmatprep.mubr.bf16.mxu0 0
        %3477 = vmatmul.mubr.bf16.gmra.mrb[0].mxu0 %v3329
        %v3478 = vpop.f32.mrb[0].mxu0
        %v3479 = vadd.f32 0.0, %v3478
        %v3480 = vpop.f32.mrb[0].mxu0
        %v3481 = vpop.f32.mrb[0].mxu0
        %v3482 = vadd.f32 0.0, %v3481
        %v3483 = vpop.f32.mrb[0].mxu0
        %3484 = vmatprep.mubr.bf16.mxu0 0
        %3485 = vmatmul.mubr.bf16.gmra.mrb[0].mxu0 %v3332
        %v3486 = vpop.f32.mrb[0].mxu0
        %v3487 = vadd.f32 0.0, %v3486
        %v3488 = vpop.f32.mrb[0].mxu0
        %v3489 = vpop.f32.mrb[0].mxu0
        %v3490 = vadd.f32 0.0, %v3489
        %v3491 = vpop.f32.mrb[0].mxu0
        %3492 = vmatprep.mubr.bf16.mxu0 0
        %3493 = vmatmul.mubr.bf16.gmra.mrb[0].mxu0 %v3335
        %v3494 = vpop.f32.mrb[0].mxu0
        %v3495 = vadd.f32 0.0, %v3494
        %v3496 = vpop.f32.mrb[0].mxu0
        %v3497 = vpop.f32.mrb[0].mxu0
        %v3498 = vadd.f32 0.0, %v3497
        %v3499 = vpop.f32.mrb[0].mxu0
        %3500 = vdwg.mxu0
        %v3501 = vadd.f32 %v3142, %v3375
        %v3502 = vadd.f32 %v3143, %v3378
        %v3503 = vadd.f32 %v3144, %v3383
        %v3504 = vadd.f32 %v3145, %v3386
        %v3505 = vadd.f32 %v3146, %v3391
        %v3506 = vadd.f32 %v3147, %v3394
        %v3507 = vadd.f32 %v3148, %v3399
        %v3508 = vadd.f32 %v3149, %v3402
        %v3509 = vadd.f32 %v3150, %v3407
        %v3510 = vadd.f32 %v3151, %v3410
        %v3511 = vadd.f32 %v3152, %v3415
        %v3512 = vadd.f32 %v3153, %v3418
        %v3513 = vadd.f32 %v3154, %v3423
        %v3514 = vadd.f32 %v3155, %v3426
        %v3515 = vadd.f32 %v3156, %v3431
        %v3516 = vadd.f32 %v3157, %v3434
        %v3517 = vadd.f32 %v3158, %v3439
        %v3518 = vadd.f32 %v3159, %v3442
        %v3519 = vadd.f32 %v3160, %v3447
        %v3520 = vadd.f32 %v3161, %v3450
        %v3521 = vadd.f32 %v3162, %v3455
        %v3522 = vadd.f32 %v3163, %v3458
        %v3523 = vadd.f32 %v3164, %v3463
        %v3524 = vadd.f32 %v3165, %v3466
        %v3525 = vadd.f32 %v3166, %v3471
        %v3526 = vadd.f32 %v3167, %v3474
        %v3527 = vadd.f32 %v3168, %v3479
        %v3528 = vadd.f32 %v3169, %v3482
        %v3529 = vadd.f32 %v3170, %v3487
        %v3530 = vadd.f32 %v3171, %v3490
        %v3531 = vadd.f32 %v3172, %v3495
        %v3532 = vadd.f32 %v3173, %v3498
        %v3533 = vld [vmem:[%s3174] sm:$0xf]
        %v3534 = vld [vmem:[%s3174 + $0x4] sm:$0xf]
        %v3535 = vld [vmem:[%s3174 + $0x8] sm:$0x1]
        %v3536 = vld [vmem:[%s3174 + $0xc] sm:$0xf]
        %v3537 = vld [vmem:[%s3174 + $0x10] sm:$0xf]
        %v3538 = vld [vmem:[%s3174 + $0x14] sm:$0x1]
        %v3539 = vld [vmem:[%s3174 + $0x18] sm:$0xf]
        %v3540 = vld [vmem:[%s3174 + $0x1c] sm:$0xf]
        %v3541 = vld [vmem:[%s3174 + $0x20] sm:$0x1]
        %v3542 = vld [vmem:[%s3174 + $0x24] sm:$0xf]
        %v3543 = vld [vmem:[%s3174 + $0x28] sm:$0xf]
        %v3544 = vld [vmem:[%s3174 + $0x2c] sm:$0x1]
        %v3545 = vld [vmem:[%s3174 + $0x30] sm:$0xf]
        %v3546 = vld [vmem:[%s3174 + $0x34] sm:$0xf]
        %v3547 = vld [vmem:[%s3174 + $0x38] sm:$0x1]
        %v3548 = vld [vmem:[%s3174 + $0x3c] sm:$0xf]
        %v3549 = vld [vmem:[%s3174 + $0x40] sm:$0xf]
        %v3550 = vld [vmem:[%s3174 + $0x44] sm:$0x1]
        %v3551 = vld [vmem:[%s3174 + $0x48] sm:$0xf]
        %v3552 = vld [vmem:[%s3174 + $0x4c] sm:$0xf]
        %v3553 = vld [vmem:[%s3174 + $0x50] sm:$0x1]
        %v3554 = vld [vmem:[%s3174 + $0x54] sm:$0xf]
        %v3555 = vld [vmem:[%s3174 + $0x58] sm:$0xf]
        %v3556 = vld [vmem:[%s3174 + $0x5c] sm:$0x1]
        %v3557 = vld [vmem:[%s3174 + $0x60] sm:$0xf]
        %v3558 = vld [vmem:[%s3174 + $0x64] sm:$0xf]
        %v3559 = vld [vmem:[%s3174 + $0x68] sm:$0x1]
        %v3560 = vld [vmem:[%s3174 + $0x6c] sm:$0xf]
        %v3561 = vld [vmem:[%s3174 + $0x70] sm:$0xf]
        %v3562 = vld [vmem:[%s3174 + $0x74] sm:$0x1]
        %v3563 = vld [vmem:[%s3174 + $0x78] sm:$0xf]
        %v3564 = vld [vmem:[%s3174 + $0x7c] sm:$0xf]
        %v3565 = vld [vmem:[%s3174 + $0x80] sm:$0x1]
        %v3566 = vld [vmem:[%s3174 + $0x84] sm:$0xf]
        %v3567 = vld [vmem:[%s3174 + $0x88] sm:$0xf]
        %v3568 = vld [vmem:[%s3174 + $0x8c] sm:$0x1]
        %v3569 = vld [vmem:[%s3174 + $0x90] sm:$0xf]
        %v3570 = vld [vmem:[%s3174 + $0x94] sm:$0xf]
        %v3571 = vld [vmem:[%s3174 + $0x98] sm:$0x1]
        %v3572 = vld [vmem:[%s3174 + $0x9c] sm:$0xf]
        %v3573 = vld [vmem:[%s3174 + $0xa0] sm:$0xf]
        %v3574 = vld [vmem:[%s3174 + $0xa4] sm:$0x1]
        %v3575 = vld [vmem:[%s3174 + $0xa8] sm:$0xf]
        %v3576 = vld [vmem:[%s3174 + $0xac] sm:$0xf]
        %v3577 = vld [vmem:[%s3174 + $0xb0] sm:$0x1]
        %v3578 = vld [vmem:[%s3174 + $0xb4] sm:$0xf]
        %v3579 = vld [vmem:[%s3174 + $0xb8] sm:$0xf]
        %v3580 = vld [vmem:[%s3174 + $0xbc] sm:$0x1]
        %v3582 = vshrl.u32 %v3533, 16
        %v3584 = vrot.slane %v3582, 4
        %v3585 = vshll.u32 %v3533, 16
        %v3587 = vrot.slane %v3585, 5
        %v3588 = vor.u32 %v3584, %v3587
        %v3589 = vrot.slane %v3588, 4
        %v3591 = vshll.u32 %v3534, 16
        %v3593 = vrot.slane %v3591, 5
        %v3594 = vsel %vm221, %v3589, %v3593
        %v3595 = vshrl.u32 %v3534, 16
        %v3597 = vrot.slane %v3595, 4
        %v3598 = vor.u32 %v3597, %v3593
        %v3599 = vrot.slane %v3598, 4
        %v3601 = vshll.u32 %v3535, 16
        %v3603 = vrot.slane %v3601, 5
        %v3604 = vsel %vm221, %v3599, %v3603
        %v3606 = vshrl.u32 %v3536, 16
        %v3608 = vrot.slane %v3606, 4
        %v3609 = vshll.u32 %v3536, 16
        %v3611 = vrot.slane %v3609, 5
        %v3612 = vor.u32 %v3608, %v3611
        %v3613 = vrot.slane %v3612, 4
        %v3615 = vshll.u32 %v3537, 16
        %v3617 = vrot.slane %v3615, 5
        %v3618 = vsel %vm221, %v3613, %v3617
        %v3619 = vshrl.u32 %v3537, 16
        %v3621 = vrot.slane %v3619, 4
        %v3622 = vor.u32 %v3621, %v3617
        %v3623 = vrot.slane %v3622, 4
        %v3625 = vshll.u32 %v3538, 16
        %v3627 = vrot.slane %v3625, 5
        %v3628 = vsel %vm221, %v3623, %v3627
        %v3630 = vshrl.u32 %v3539, 16
        %v3632 = vrot.slane %v3630, 4
        %v3633 = vshll.u32 %v3539, 16
        %v3635 = vrot.slane %v3633, 5
        %v3636 = vor.u32 %v3632, %v3635
        %v3637 = vrot.slane %v3636, 4
        %v3639 = vshll.u32 %v3540, 16
        %v3641 = vrot.slane %v3639, 5
        %v3642 = vsel %vm221, %v3637, %v3641
        %v3643 = vshrl.u32 %v3540, 16
        %v3645 = vrot.slane %v3643, 4
        %v3646 = vor.u32 %v3645, %v3641
        %v3647 = vrot.slane %v3646, 4
        %v3649 = vshll.u32 %v3541, 16
        %v3651 = vrot.slane %v3649, 5
        %v3652 = vsel %vm221, %v3647, %v3651
        %v3654 = vshrl.u32 %v3542, 16
        %v3656 = vrot.slane %v3654, 4
        %v3657 = vshll.u32 %v3542, 16
        %v3659 = vrot.slane %v3657, 5
        %v3660 = vor.u32 %v3656, %v3659
        %v3661 = vrot.slane %v3660, 4
        %v3663 = vshll.u32 %v3543, 16
        %v3665 = vrot.slane %v3663, 5
        %v3666 = vsel %vm221, %v3661, %v3665
        %v3667 = vshrl.u32 %v3543, 16
        %v3669 = vrot.slane %v3667, 4
        %v3670 = vor.u32 %v3669, %v3665
        %v3671 = vrot.slane %v3670, 4
        %v3673 = vshll.u32 %v3544, 16
        %v3675 = vrot.slane %v3673, 5
        %v3676 = vsel %vm221, %v3671, %v3675
        %v3678 = vshrl.u32 %v3545, 16
        %v3680 = vrot.slane %v3678, 4
        %v3681 = vshll.u32 %v3545, 16
        %v3683 = vrot.slane %v3681, 5
        %v3684 = vor.u32 %v3680, %v3683
        %v3685 = vrot.slane %v3684, 4
        %v3687 = vshll.u32 %v3546, 16
        %v3689 = vrot.slane %v3687, 5
        %v3690 = vsel %vm221, %v3685, %v3689
        %v3691 = vshrl.u32 %v3546, 16
        %v3693 = vrot.slane %v3691, 4
        %v3694 = vor.u32 %v3693, %v3689
        %v3695 = vrot.slane %v3694, 4
        %v3697 = vshll.u32 %v3547, 16
        %v3699 = vrot.slane %v3697, 5
        %v3700 = vsel %vm221, %v3695, %v3699
        %v3702 = vshrl.u32 %v3548, 16
        %v3704 = vrot.slane %v3702, 4
        %v3705 = vshll.u32 %v3548, 16
        %v3707 = vrot.slane %v3705, 5
        %v3708 = vor.u32 %v3704, %v3707
        %v3709 = vrot.slane %v3708, 4
        %v3711 = vshll.u32 %v3549, 16
        %v3713 = vrot.slane %v3711, 5
        %v3714 = vsel %vm221, %v3709, %v3713
        %v3715 = vshrl.u32 %v3549, 16
        %v3717 = vrot.slane %v3715, 4
        %v3718 = vor.u32 %v3717, %v3713
        %v3719 = vrot.slane %v3718, 4
        %v3721 = vshll.u32 %v3550, 16
        %v3723 = vrot.slane %v3721, 5
        %v3724 = vsel %vm221, %v3719, %v3723
        %v3726 = vshrl.u32 %v3551, 16
        %v3728 = vrot.slane %v3726, 4
        %v3729 = vshll.u32 %v3551, 16
        %v3731 = vrot.slane %v3729, 5
        %v3732 = vor.u32 %v3728, %v3731
        %v3733 = vrot.slane %v3732, 4
        %v3735 = vshll.u32 %v3552, 16
        %v3737 = vrot.slane %v3735, 5
        %v3738 = vsel %vm221, %v3733, %v3737
        %v3739 = vshrl.u32 %v3552, 16
        %v3741 = vrot.slane %v3739, 4
        %v3742 = vor.u32 %v3741, %v3737
        %v3743 = vrot.slane %v3742, 4
        %v3745 = vshll.u32 %v3553, 16
        %v3747 = vrot.slane %v3745, 5
        %v3748 = vsel %vm221, %v3743, %v3747
        %v3750 = vshrl.u32 %v3554, 16
        %v3752 = vrot.slane %v3750, 4
        %v3753 = vshll.u32 %v3554, 16
        %v3755 = vrot.slane %v3753, 5
        %v3756 = vor.u32 %v3752, %v3755
        %v3757 = vrot.slane %v3756, 4
        %v3759 = vshll.u32 %v3555, 16
        %v3761 = vrot.slane %v3759, 5
        %v3762 = vsel %vm221, %v3757, %v3761
        %v3763 = vshrl.u32 %v3555, 16
        %v3765 = vrot.slane %v3763, 4
        %v3766 = vor.u32 %v3765, %v3761
        %v3767 = vrot.slane %v3766, 4
        %v3769 = vshll.u32 %v3556, 16
        %v3771 = vrot.slane %v3769, 5
        %v3772 = vsel %vm221, %v3767, %v3771
        %v3774 = vshrl.u32 %v3557, 16
        %v3776 = vrot.slane %v3774, 4
        %v3777 = vshll.u32 %v3557, 16
        %v3779 = vrot.slane %v3777, 5
        %v3780 = vor.u32 %v3776, %v3779
        %v3781 = vrot.slane %v3780, 4
        %v3783 = vshll.u32 %v3558, 16
        %v3785 = vrot.slane %v3783, 5
        %v3786 = vsel %vm221, %v3781, %v3785
        %v3787 = vshrl.u32 %v3558, 16
        %v3789 = vrot.slane %v3787, 4
        %v3790 = vor.u32 %v3789, %v3785
        %v3791 = vrot.slane %v3790, 4
        %v3793 = vshll.u32 %v3559, 16
        %v3795 = vrot.slane %v3793, 5
        %v3796 = vsel %vm221, %v3791, %v3795
        %v3798 = vshrl.u32 %v3560, 16
        %v3800 = vrot.slane %v3798, 4
        %v3801 = vshll.u32 %v3560, 16
        %v3803 = vrot.slane %v3801, 5
        %v3804 = vor.u32 %v3800, %v3803
        %v3805 = vrot.slane %v3804, 4
        %v3807 = vshll.u32 %v3561, 16
        %v3809 = vrot.slane %v3807, 5
        %v3810 = vsel %vm221, %v3805, %v3809
        %v3811 = vshrl.u32 %v3561, 16
        %v3813 = vrot.slane %v3811, 4
        %v3814 = vor.u32 %v3813, %v3809
        %v3815 = vrot.slane %v3814, 4
        %v3817 = vshll.u32 %v3562, 16
        %v3819 = vrot.slane %v3817, 5
        %v3820 = vsel %vm221, %v3815, %v3819
        %v3822 = vshrl.u32 %v3563, 16
        %v3824 = vrot.slane %v3822, 4
        %v3825 = vshll.u32 %v3563, 16
        %v3827 = vrot.slane %v3825, 5
        %v3828 = vor.u32 %v3824, %v3827
        %v3829 = vrot.slane %v3828, 4
        %v3831 = vshll.u32 %v3564, 16
        %v3833 = vrot.slane %v3831, 5
        %v3834 = vsel %vm221, %v3829, %v3833
        %v3835 = vshrl.u32 %v3564, 16
        %v3837 = vrot.slane %v3835, 4
        %v3838 = vor.u32 %v3837, %v3833
        %v3839 = vrot.slane %v3838, 4
        %v3841 = vshll.u32 %v3565, 16
        %v3843 = vrot.slane %v3841, 5
        %v3844 = vsel %vm221, %v3839, %v3843
        %v3846 = vshrl.u32 %v3566, 16
        %v3848 = vrot.slane %v3846, 4
        %v3849 = vshll.u32 %v3566, 16
        %v3851 = vrot.slane %v3849, 5
        %v3852 = vor.u32 %v3848, %v3851
        %v3853 = vrot.slane %v3852, 4
        %v3855 = vshll.u32 %v3567, 16
        %v3857 = vrot.slane %v3855, 5
        %v3858 = vsel %vm221, %v3853, %v3857
        %v3859 = vshrl.u32 %v3567, 16
        %v3861 = vrot.slane %v3859, 4
        %v3862 = vor.u32 %v3861, %v3857
        %v3863 = vrot.slane %v3862, 4
        %v3865 = vshll.u32 %v3568, 16
        %v3867 = vrot.slane %v3865, 5
        %v3868 = vsel %vm221, %v3863, %v3867
        %v3870 = vshrl.u32 %v3569, 16
        %v3872 = vrot.slane %v3870, 4
        %v3873 = vshll.u32 %v3569, 16
        %v3875 = vrot.slane %v3873, 5
        %v3876 = vor.u32 %v3872, %v3875
        %v3877 = vrot.slane %v3876, 4
        %v3879 = vshll.u32 %v3570, 16
        %v3881 = vrot.slane %v3879, 5
        %v3882 = vsel %vm221, %v3877, %v3881
        %v3883 = vshrl.u32 %v3570, 16
        %v3885 = vrot.slane %v3883, 4
        %v3886 = vor.u32 %v3885, %v3881
        %v3887 = vrot.slane %v3886, 4
        %v3889 = vshll.u32 %v3571, 16
        %v3891 = vrot.slane %v3889, 5
        %v3892 = vsel %vm221, %v3887, %v3891
        %v3894 = vshrl.u32 %v3572, 16
        %v3896 = vrot.slane %v3894, 4
        %v3897 = vshll.u32 %v3572, 16
        %v3899 = vrot.slane %v3897, 5
        %v3900 = vor.u32 %v3896, %v3899
        %v3901 = vrot.slane %v3900, 4
        %v3903 = vshll.u32 %v3573, 16
        %v3905 = vrot.slane %v3903, 5
        %v3906 = vsel %vm221, %v3901, %v3905
        %v3907 = vshrl.u32 %v3573, 16
        %v3909 = vrot.slane %v3907, 4
        %v3910 = vor.u32 %v3909, %v3905
        %v3911 = vrot.slane %v3910, 4
        %v3913 = vshll.u32 %v3574, 16
        %v3915 = vrot.slane %v3913, 5
        %v3916 = vsel %vm221, %v3911, %v3915
        %v3918 = vshrl.u32 %v3575, 16
        %v3920 = vrot.slane %v3918, 4
        %v3921 = vshll.u32 %v3575, 16
        %v3923 = vrot.slane %v3921, 5
        %v3924 = vor.u32 %v3920, %v3923
        %v3925 = vrot.slane %v3924, 4
        %v3927 = vshll.u32 %v3576, 16
        %v3929 = vrot.slane %v3927, 5
        %v3930 = vsel %vm221, %v3925, %v3929
        %v3931 = vshrl.u32 %v3576, 16
        %v3933 = vrot.slane %v3931, 4
        %v3934 = vor.u32 %v3933, %v3929
        %v3935 = vrot.slane %v3934, 4
        %v3937 = vshll.u32 %v3577, 16
        %v3939 = vrot.slane %v3937, 5
        %v3940 = vsel %vm221, %v3935, %v3939
        %v3942 = vshrl.u32 %v3578, 16
        %v3944 = vrot.slane %v3942, 4
        %v3945 = vshll.u32 %v3578, 16
        %v3947 = vrot.slane %v3945, 5
        %v3948 = vor.u32 %v3944, %v3947
        %v3949 = vrot.slane %v3948, 4
        %v3951 = vshll.u32 %v3579, 16
        %v3953 = vrot.slane %v3951, 5
        %v3954 = vsel %vm221, %v3949, %v3953
        %v3955 = vshrl.u32 %v3579, 16
        %v3957 = vrot.slane %v3955, 4
        %v3958 = vor.u32 %v3957, %v3953
        %v3959 = vrot.slane %v3958, 4
        %v3961 = vshll.u32 %v3580, 16
        %v3963 = vrot.slane %v3961, 5
        %v3964 = vsel %vm221, %v3959, %v3963
        %s3965 = scalar_lea.vmem %s1, 28
        %v3966 = vld [vmem:[%s3965] sm:$0xf]
        %v3967 = vunpack.c.l.b16 %v3594
        %v3968 = vunpack.c.l.b16 %v3604
        %v3969 = vunpack.c.l.b16 %v3618
        %v3970 = vunpack.c.l.b16 %v3628
        %v3971 = vunpack.c.l.b16 %v3642
        %v3972 = vunpack.c.l.b16 %v3652
        %v3973 = vunpack.c.l.b16 %v3666
        %v3974 = vunpack.c.l.b16 %v3676
        %v3975 = vunpack.c.l.b16 %v3690
        %v3976 = vunpack.c.l.b16 %v3700
        %v3977 = vunpack.c.l.b16 %v3714
        %v3978 = vunpack.c.l.b16 %v3724
        %v3979 = vunpack.c.l.b16 %v3738
        %v3980 = vunpack.c.l.b16 %v3748
        %v3981 = vunpack.c.l.b16 %v3762
        %v3982 = vunpack.c.l.b16 %v3772
        %v3983 = vunpack.c.l.b16 %v3786
        %v3984 = vunpack.c.l.b16 %v3796
        %v3985 = vunpack.c.l.b16 %v3810
        %v3986 = vunpack.c.l.b16 %v3820
        %v3987 = vunpack.c.l.b16 %v3834
        %v3988 = vunpack.c.l.b16 %v3844
        %v3989 = vunpack.c.l.b16 %v3858
        %v3990 = vunpack.c.l.b16 %v3868
        %v3991 = vunpack.c.l.b16 %v3882
        %v3992 = vunpack.c.l.b16 %v3892
        %v3993 = vunpack.c.l.b16 %v3906
        %v3994 = vunpack.c.l.b16 %v3916
        %v3995 = vunpack.c.l.b16 %v3930
        %v3996 = vunpack.c.l.b16 %v3940
        %v3997 = vunpack.c.l.b16 %v3954
        %v3998 = vunpack.c.l.b16 %v3964
        %v3999 = vpack.c.b16 %v3968, %v3967
        %v4000 = vpack.c.b16 %v3970, %v3969
        %v4001 = vpack.c.b16 %v3972, %v3971
        %v4002 = vpack.c.b16 %v3974, %v3973
        %v4003 = vpack.c.b16 %v3976, %v3975
        %v4004 = vpack.c.b16 %v3978, %v3977
        %v4005 = vpack.c.b16 %v3980, %v3979
        %v4006 = vpack.c.b16 %v3982, %v3981
        %v4007 = vpack.c.b16 %v3984, %v3983
        %v4008 = vpack.c.b16 %v3986, %v3985
        %v4009 = vpack.c.b16 %v3988, %v3987
        %v4010 = vpack.c.b16 %v3990, %v3989
        %v4011 = vpack.c.b16 %v3992, %v3991
        %v4012 = vpack.c.b16 %v3994, %v3993
        %v4013 = vpack.c.b16 %v3996, %v3995
        %v4014 = vpack.c.b16 %v3998, %v3997
        %v4016 = vsel %vm656, %v3999, 0
        %v4019 = vsel %vm656, %v4000, 0
        %v4022 = vsel %vm656, %v4001, 0
        %v4025 = vsel %vm656, %v4002, 0
        %v4028 = vsel %vm656, %v4003, 0
        %v4031 = vsel %vm656, %v4004, 0
        %v4034 = vsel %vm656, %v4005, 0
        %v4037 = vsel %vm656, %v4006, 0
        %v4040 = vsel %vm656, %v4007, 0
        %v4043 = vsel %vm656, %v4008, 0
        %v4046 = vsel %vm656, %v4009, 0
        %v4049 = vsel %vm656, %v4010, 0
        %v4052 = vsel %vm656, %v4011, 0
        %v4055 = vsel %vm656, %v4012, 0
        %v4058 = vsel %vm656, %v4013, 0
        %v4061 = vsel %vm656, %v4014, 0
        %v4064 = vsel %vm705, %v3966, 0
        %4066 = vmatprep.subr.bf16.mxu0 0
        %4067 = vmatpush1.bf16.msra.mxu0 %v4064
        %4068 = vmatprep.subr.bf16.mxu0 0
        %4069 = vmatpush1.bf16.msra.mxu0 0
        %4070 = vmatprep.subr.bf16.mxu0 0
        %4071 = vmatpush1.bf16.msra.mxu0 0
        %4072 = vmatprep.subr.bf16.mxu0 0
        %4073 = vmatpush1.bf16.msra.mxu0 0
        %4074 = vmatprep.subr.bf16.mxu0 0
        %4075 = vmatpush1.bf16.msra.mxu0 0
        %4076 = vmatprep.subr.bf16.mxu0 0
        %4077 = vmatpush1.bf16.msra.mxu0 0
        %4078 = vmatprep.subr.bf16.mxu0 0
        %4079 = vmatpush1.bf16.msra.mxu0 0
        %4080 = vmatprep.subr.bf16.mxu0 0
        %4081 = vmatpush1.bf16.msra.mxu0 0
        %4082 = vmatprep.subr.bf16.mxu0 0
        %4083 = vmatpush1.bf16.msra.mxu0 0
        %4084 = vmatprep.subr.bf16.mxu0 0
        %4085 = vmatpush1.bf16.msra.mxu0 0
        %4086 = vmatprep.subr.bf16.mxu0 0
        %4087 = vmatpush1.bf16.msra.mxu0 0
        %4088 = vmatprep.subr.bf16.mxu0 0
        %4089 = vmatpush1.bf16.msra.mxu0 0
        %4090 = vmatprep.subr.bf16.mxu0 0
        %4091 = vmatpush1.bf16.msra.mxu0 0
        %4092 = vmatprep.subr.bf16.mxu0 0
        %4093 = vmatpush1.bf16.msra.mxu0 0
        %4094 = vmatprep.subr.bf16.mxu0 0
        %4095 = vmatpush1.bf16.msra.mxu0 0
        %4096 = vmatprep.subr.bf16.mxu0 0
        %4097 = vmatpush1.bf16.msra.mxu0 0
        %4098 = vmatprep.mubr.bf16.mxu0 0
        %4099 = vmatmul.mubr.bf16.gmra.mrb[0].mxu0 %v4016
        %v4100 = vpop.f32.mrb[0].mxu0
        %v4101 = vadd.f32 0.0, %v4100
        %v4102 = vpop.f32.mrb[0].mxu0
        %v4103 = vpop.f32.mrb[0].mxu0
        %v4104 = vadd.f32 0.0, %v4103
        %v4105 = vpop.f32.mrb[0].mxu0
        %4106 = vmatprep.mubr.bf16.mxu0 0
        %4107 = vmatmul.mubr.bf16.gmra.mrb[0].mxu0 %v4019
        %v4108 = vpop.f32.mrb[0].mxu0
        %v4109 = vadd.f32 0.0, %v4108
        %v4110 = vpop.f32.mrb[0].mxu0
        %v4111 = vpop.f32.mrb[0].mxu0
        %v4112 = vadd.f32 0.0, %v4111
        %v4113 = vpop.f32.mrb[0].mxu0
        %4114 = vmatprep.mubr.bf16.mxu0 0
        %4115 = vmatmul.mubr.bf16.gmra.mrb[0].mxu0 %v4022
        %v4116 = vpop.f32.mrb[0].mxu0
        %v4117 = vadd.f32 0.0, %v4116
        %v4118 = vpop.f32.mrb[0].mxu0
        %v4119 = vpop.f32.mrb[0].mxu0
        %v4120 = vadd.f32 0.0, %v4119
        %v4121 = vpop.f32.mrb[0].mxu0
        %4122 = vmatprep.mubr.bf16.mxu0 0
        %4123 = vmatmul.mubr.bf16.gmra.mrb[0].mxu0 %v4025
        %v4124 = vpop.f32.mrb[0].mxu0
        %v4125 = vadd.f32 0.0, %v4124
        %v4126 = vpop.f32.mrb[0].mxu0
        %v4127 = vpop.f32.mrb[0].mxu0
        %v4128 = vadd.f32 0.0, %v4127
        %v4129 = vpop.f32.mrb[0].mxu0
        %4130 = vmatprep.mubr.bf16.mxu0 0
        %4131 = vmatmul.mubr.bf16.gmra.mrb[0].mxu0 %v4028
        %v4132 = vpop.f32.mrb[0].mxu0
        %v4133 = vadd.f32 0.0, %v4132
        %v4134 = vpop.f32.mrb[0].mxu0
        %v4135 = vpop.f32.mrb[0].mxu0
        %v4136 = vadd.f32 0.0, %v4135
        %v4137 = vpop.f32.mrb[0].mxu0
        %4138 = vmatprep.mubr.bf16.mxu0 0
        %4139 = vmatmul.mubr.bf16.gmra.mrb[0].mxu0 %v4031
        %v4140 = vpop.f32.mrb[0].mxu0
        %v4141 = vadd.f32 0.0, %v4140
        %v4142 = vpop.f32.mrb[0].mxu0
        %v4143 = vpop.f32.mrb[0].mxu0
        %v4144 = vadd.f32 0.0, %v4143
        %v4145 = vpop.f32.mrb[0].mxu0
        %4146 = vmatprep.mubr.bf16.mxu0 0
        %4147 = vmatmul.mubr.bf16.gmra.mrb[0].mxu0 %v4034
        %v4148 = vpop.f32.mrb[0].mxu0
        %v4149 = vadd.f32 0.0, %v4148
        %v4150 = vpop.f32.mrb[0].mxu0
        %v4151 = vpop.f32.mrb[0].mxu0
        %v4152 = vadd.f32 0.0, %v4151
        %v4153 = vpop.f32.mrb[0].mxu0
        %4154 = vmatprep.mubr.bf16.mxu0 0
        %4155 = vmatmul.mubr.bf16.gmra.mrb[0].mxu0 %v4037
        %v4156 = vpop.f32.mrb[0].mxu0
        %v4157 = vadd.f32 0.0, %v4156
        %v4158 = vpop.f32.mrb[0].mxu0
        %v4159 = vpop.f32.mrb[0].mxu0
        %v4160 = vadd.f32 0.0, %v4159
        %v4161 = vpop.f32.mrb[0].mxu0
        %4162 = vmatprep.mubr.bf16.mxu0 0
        %4163 = vmatmul.mubr.bf16.gmra.mrb[0].mxu0 %v4040
        %v4164 = vpop.f32.mrb[0].mxu0
        %v4165 = vadd.f32 0.0, %v4164
        %v4166 = vpop.f32.mrb[0].mxu0
        %v4167 = vpop.f32.mrb[0].mxu0
        %v4168 = vadd.f32 0.0, %v4167
        %v4169 = vpop.f32.mrb[0].mxu0
        %4170 = vmatprep.mubr.bf16.mxu0 0
        %4171 = vmatmul.mubr.bf16.gmra.mrb[0].mxu0 %v4043
        %v4172 = vpop.f32.mrb[0].mxu0
        %v4173 = vadd.f32 0.0, %v4172
        %v4174 = vpop.f32.mrb[0].mxu0
        %v4175 = vpop.f32.mrb[0].mxu0
        %v4176 = vadd.f32 0.0, %v4175
        %v4177 = vpop.f32.mrb[0].mxu0
        %4178 = vmatprep.mubr.bf16.mxu0 0
        %4179 = vmatmul.mubr.bf16.gmra.mrb[0].mxu0 %v4046
        %v4180 = vpop.f32.mrb[0].mxu0
        %v4181 = vadd.f32 0.0, %v4180
        %v4182 = vpop.f32.mrb[0].mxu0
        %v4183 = vpop.f32.mrb[0].mxu0
        %v4184 = vadd.f32 0.0, %v4183
        %v4185 = vpop.f32.mrb[0].mxu0
        %4186 = vmatprep.mubr.bf16.mxu0 0
        %4187 = vmatmul.mubr.bf16.gmra.mrb[0].mxu0 %v4049
        %v4188 = vpop.f32.mrb[0].mxu0
        %v4189 = vadd.f32 0.0, %v4188
        %v4190 = vpop.f32.mrb[0].mxu0
        %v4191 = vpop.f32.mrb[0].mxu0
        %v4192 = vadd.f32 0.0, %v4191
        %v4193 = vpop.f32.mrb[0].mxu0
        %4194 = vmatprep.mubr.bf16.mxu0 0
        %4195 = vmatmul.mubr.bf16.gmra.mrb[0].mxu0 %v4052
        %v4196 = vpop.f32.mrb[0].mxu0
        %v4197 = vadd.f32 0.0, %v4196
        %v4198 = vpop.f32.mrb[0].mxu0
        %v4199 = vpop.f32.mrb[0].mxu0
        %v4200 = vadd.f32 0.0, %v4199
        %v4201 = vpop.f32.mrb[0].mxu0
        %4202 = vmatprep.mubr.bf16.mxu0 0
        %4203 = vmatmul.mubr.bf16.gmra.mrb[0].mxu0 %v4055
        %v4204 = vpop.f32.mrb[0].mxu0
        %v4205 = vadd.f32 0.0, %v4204
        %v4206 = vpop.f32.mrb[0].mxu0
        %v4207 = vpop.f32.mrb[0].mxu0
        %v4208 = vadd.f32 0.0, %v4207
        %v4209 = vpop.f32.mrb[0].mxu0
        %4210 = vmatprep.mubr.bf16.mxu0 0
        %4211 = vmatmul.mubr.bf16.gmra.mrb[0].mxu0 %v4058
        %v4212 = vpop.f32.mrb[0].mxu0
        %v4213 = vadd.f32 0.0, %v4212
        %v4214 = vpop.f32.mrb[0].mxu0
        %v4215 = vpop.f32.mrb[0].mxu0
        %v4216 = vadd.f32 0.0, %v4215
        %v4217 = vpop.f32.mrb[0].mxu0
        %4218 = vmatprep.mubr.bf16.mxu0 0
        %4219 = vmatmul.mubr.bf16.gmra.mrb[0].mxu0 %v4061
        %v4220 = vpop.f32.mrb[0].mxu0
        %v4221 = vadd.f32 0.0, %v4220
        %v4222 = vpop.f32.mrb[0].mxu0
        %v4223 = vpop.f32.mrb[0].mxu0
        %v4224 = vadd.f32 0.0, %v4223
        %v4225 = vpop.f32.mrb[0].mxu0
        %4226 = vdwg.mxu0
        %v4227 = vadd.f32 %v3501, %v4101
        %v4228 = vadd.f32 %v3502, %v4104
        %v4229 = vadd.f32 %v3503, %v4109
        %v4230 = vadd.f32 %v3504, %v4112
        %v4231 = vadd.f32 %v3505, %v4117
        %v4232 = vadd.f32 %v3506, %v4120
        %v4233 = vadd.f32 %v3507, %v4125
        %v4234 = vadd.f32 %v3508, %v4128
        %v4235 = vadd.f32 %v3509, %v4133
        %v4236 = vadd.f32 %v3510, %v4136
        %v4237 = vadd.f32 %v3511, %v4141
        %v4238 = vadd.f32 %v3512, %v4144
        %v4239 = vadd.f32 %v3513, %v4149
        %v4240 = vadd.f32 %v3514, %v4152
        %v4241 = vadd.f32 %v3515, %v4157
        %v4242 = vadd.f32 %v3516, %v4160
        %v4243 = vadd.f32 %v3517, %v4165
        %v4244 = vadd.f32 %v3518, %v4168
        %v4245 = vadd.f32 %v3519, %v4173
        %v4246 = vadd.f32 %v3520, %v4176
        %v4247 = vadd.f32 %v3521, %v4181
        %v4248 = vadd.f32 %v3522, %v4184
        %v4249 = vadd.f32 %v3523, %v4189
        %v4250 = vadd.f32 %v3524, %v4192
        %v4251 = vadd.f32 %v3525, %v4197
        %v4252 = vadd.f32 %v3526, %v4200
        %v4253 = vadd.f32 %v3527, %v4205
        %v4254 = vadd.f32 %v3528, %v4208
        %v4255 = vadd.f32 %v3529, %v4213
        %v4256 = vadd.f32 %v3530, %v4216
        %v4257 = vadd.f32 %v3531, %v4221
        %v4258 = vadd.f32 %v3532, %v4224
        %v4259 = vld [vmem:[%s3174] sm:$0xe]
        %v4260 = vld [vmem:[%s3174 + $0xc] sm:$0xe]
        %v4261 = vld [vmem:[%s3174 + $0x18] sm:$0xe]
        %v4262 = vld [vmem:[%s3174 + $0x24] sm:$0xe]
        %v4263 = vld [vmem:[%s3174 + $0x30] sm:$0xe]
        %v4264 = vld [vmem:[%s3174 + $0x3c] sm:$0xe]
        %v4265 = vld [vmem:[%s3174 + $0x48] sm:$0xe]
        %v4266 = vld [vmem:[%s3174 + $0x54] sm:$0xe]
        %v4267 = vld [vmem:[%s3174 + $0x60] sm:$0xe]
        %v4268 = vld [vmem:[%s3174 + $0x6c] sm:$0xe]
        %v4269 = vld [vmem:[%s3174 + $0x78] sm:$0xe]
        %v4270 = vld [vmem:[%s3174 + $0x84] sm:$0xe]
        %v4271 = vld [vmem:[%s3174 + $0x90] sm:$0xe]
        %v4272 = vld [vmem:[%s3174 + $0x9c] sm:$0xe]
        %v4273 = vld [vmem:[%s3174 + $0xa8] sm:$0xe]
        %v4274 = vld [vmem:[%s3174 + $0xb4] sm:$0xe]
        %v4323 = vrot.slane %v4259, 5
        %v4324 = vrot.slane %v4323, 4
        %v4325 = vrot.slane %v3534, 5
        %v4326 = vsel %vm1212, %v4324, %v4325
        %v4327 = vrot.slane %v4325, 4
        %v4328 = vrot.slane %v3535, 5
        %v4329 = vsel %vm1212, %v4327, %v4328
        %v4330 = vrot.slane %v4260, 5
        %v4331 = vrot.slane %v4330, 4
        %v4332 = vrot.slane %v3537, 5
        %v4333 = vsel %vm1212, %v4331, %v4332
        %v4334 = vrot.slane %v4332, 4
        %v4335 = vrot.slane %v3538, 5
        %v4336 = vsel %vm1212, %v4334, %v4335
        %v4337 = vrot.slane %v4261, 5
        %v4338 = vrot.slane %v4337, 4
        %v4339 = vrot.slane %v3540, 5
        %v4340 = vsel %vm1212, %v4338, %v4339
        %v4341 = vrot.slane %v4339, 4
        %v4342 = vrot.slane %v3541, 5
        %v4343 = vsel %vm1212, %v4341, %v4342
        %v4344 = vrot.slane %v4262, 5
        %v4345 = vrot.slane %v4344, 4
        %v4346 = vrot.slane %v3543, 5
        %v4347 = vsel %vm1212, %v4345, %v4346
        %v4348 = vrot.slane %v4346, 4
        %v4349 = vrot.slane %v3544, 5
        %v4350 = vsel %vm1212, %v4348, %v4349
        %v4351 = vrot.slane %v4263, 5
        %v4352 = vrot.slane %v4351, 4
        %v4353 = vrot.slane %v3546, 5
        %v4354 = vsel %vm1212, %v4352, %v4353
        %v4355 = vrot.slane %v4353, 4
        %v4356 = vrot.slane %v3547, 5
        %v4357 = vsel %vm1212, %v4355, %v4356
        %v4358 = vrot.slane %v4264, 5
        %v4359 = vrot.slane %v4358, 4
        %v4360 = vrot.slane %v3549, 5
        %v4361 = vsel %vm1212, %v4359, %v4360
        %v4362 = vrot.slane %v4360, 4
        %v4363 = vrot.slane %v3550, 5
        %v4364 = vsel %vm1212, %v4362, %v4363
        %v4365 = vrot.slane %v4265, 5
        %v4366 = vrot.slane %v4365, 4
        %v4367 = vrot.slane %v3552, 5
        %v4368 = vsel %vm1212, %v4366, %v4367
        %v4369 = vrot.slane %v4367, 4
        %v4370 = vrot.slane %v3553, 5
        %v4371 = vsel %vm1212, %v4369, %v4370
        %v4372 = vrot.slane %v4266, 5
        %v4373 = vrot.slane %v4372, 4
        %v4374 = vrot.slane %v3555, 5
        %v4375 = vsel %vm1212, %v4373, %v4374
        %v4376 = vrot.slane %v4374, 4
        %v4377 = vrot.slane %v3556, 5
        %v4378 = vsel %vm1212, %v4376, %v4377
        %v4379 = vrot.slane %v4267, 5
        %v4380 = vrot.slane %v4379, 4
        %v4381 = vrot.slane %v3558, 5
        %v4382 = vsel %vm1212, %v4380, %v4381
        %v4383 = vrot.slane %v4381, 4
        %v4384 = vrot.slane %v3559, 5
        %v4385 = vsel %vm1212, %v4383, %v4384
        %v4386 = vrot.slane %v4268, 5
        %v4387 = vrot.slane %v4386, 4
        %v4388 = vrot.slane %v3561, 5
        %v4389 = vsel %vm1212, %v4387, %v4388
        %v4390 = vrot.slane %v4388, 4
        %v4391 = vrot.slane %v3562, 5
        %v4392 = vsel %vm1212, %v4390, %v4391
        %v4393 = vrot.slane %v4269, 5
        %v4394 = vrot.slane %v4393, 4
        %v4395 = vrot.slane %v3564, 5
        %v4396 = vsel %vm1212, %v4394, %v4395
        %v4397 = vrot.slane %v4395, 4
        %v4398 = vrot.slane %v3565, 5
        %v4399 = vsel %vm1212, %v4397, %v4398
        %v4400 = vrot.slane %v4270, 5
        %v4401 = vrot.slane %v4400, 4
        %v4402 = vrot.slane %v3567, 5
        %v4403 = vsel %vm1212, %v4401, %v4402
        %v4404 = vrot.slane %v4402, 4
        %v4405 = vrot.slane %v3568, 5
        %v4406 = vsel %vm1212, %v4404, %v4405
        %v4407 = vrot.slane %v4271, 5
        %v4408 = vrot.slane %v4407, 4
        %v4409 = vrot.slane %v3570, 5
        %v4410 = vsel %vm1212, %v4408, %v4409
        %v4411 = vrot.slane %v4409, 4
        %v4412 = vrot.slane %v3571, 5
        %v4413 = vsel %vm1212, %v4411, %v4412
        %v4414 = vrot.slane %v4272, 5
        %v4415 = vrot.slane %v4414, 4
        %v4416 = vrot.slane %v3573, 5
        %v4417 = vsel %vm1212, %v4415, %v4416
        %v4418 = vrot.slane %v4416, 4
        %v4419 = vrot.slane %v3574, 5
        %v4420 = vsel %vm1212, %v4418, %v4419
        %v4421 = vrot.slane %v4273, 5
        %v4422 = vrot.slane %v4421, 4
        %v4423 = vrot.slane %v3576, 5
        %v4424 = vsel %vm1212, %v4422, %v4423
        %v4425 = vrot.slane %v4423, 4
        %v4426 = vrot.slane %v3577, 5
        %v4427 = vsel %vm1212, %v4425, %v4426
        %v4428 = vrot.slane %v4274, 5
        %v4429 = vrot.slane %v4428, 4
        %v4430 = vrot.slane %v3579, 5
        %v4431 = vsel %vm1212, %v4429, %v4430
        %v4432 = vrot.slane %v4430, 4
        %v4433 = vrot.slane %v3580, 5
        %v4434 = vsel %vm1212, %v4432, %v4433
        %s4435 = scalar_lea.vmem %s1, 32
        %v4436 = vld [vmem:[%s4435] sm:$0xf]
        %v4437 = vunpack.c.l.b16 %v4326
        %v4438 = vunpack.c.l.b16 %v4329
        %v4439 = vunpack.c.l.b16 %v4333
        %v4440 = vunpack.c.l.b16 %v4336
        %v4441 = vunpack.c.l.b16 %v4340
        %v4442 = vunpack.c.l.b16 %v4343
        %v4443 = vunpack.c.l.b16 %v4347
        %v4444 = vunpack.c.l.b16 %v4350
        %v4445 = vunpack.c.l.b16 %v4354
        %v4446 = vunpack.c.l.b16 %v4357
        %v4447 = vunpack.c.l.b16 %v4361
        %v4448 = vunpack.c.l.b16 %v4364
        %v4449 = vunpack.c.l.b16 %v4368
        %v4450 = vunpack.c.l.b16 %v4371
        %v4451 = vunpack.c.l.b16 %v4375
        %v4452 = vunpack.c.l.b16 %v4378
        %v4453 = vunpack.c.l.b16 %v4382
        %v4454 = vunpack.c.l.b16 %v4385
        %v4455 = vunpack.c.l.b16 %v4389
        %v4456 = vunpack.c.l.b16 %v4392
        %v4457 = vunpack.c.l.b16 %v4396
        %v4458 = vunpack.c.l.b16 %v4399
        %v4459 = vunpack.c.l.b16 %v4403
        %v4460 = vunpack.c.l.b16 %v4406
        %v4461 = vunpack.c.l.b16 %v4410
        %v4462 = vunpack.c.l.b16 %v4413
        %v4463 = vunpack.c.l.b16 %v4417
        %v4464 = vunpack.c.l.b16 %v4420
        %v4465 = vunpack.c.l.b16 %v4424
        %v4466 = vunpack.c.l.b16 %v4427
        %v4467 = vunpack.c.l.b16 %v4431
        %v4468 = vunpack.c.l.b16 %v4434
        %v4469 = vpack.c.b16 %v4438, %v4437
        %v4470 = vpack.c.b16 %v4440, %v4439
        %v4471 = vpack.c.b16 %v4442, %v4441
        %v4472 = vpack.c.b16 %v4444, %v4443
        %v4473 = vpack.c.b16 %v4446, %v4445
        %v4474 = vpack.c.b16 %v4448, %v4447
        %v4475 = vpack.c.b16 %v4450, %v4449
        %v4476 = vpack.c.b16 %v4452, %v4451
        %v4477 = vpack.c.b16 %v4454, %v4453
        %v4478 = vpack.c.b16 %v4456, %v4455
        %v4479 = vpack.c.b16 %v4458, %v4457
        %v4480 = vpack.c.b16 %v4460, %v4459
        %v4481 = vpack.c.b16 %v4462, %v4461
        %v4482 = vpack.c.b16 %v4464, %v4463
        %v4483 = vpack.c.b16 %v4466, %v4465
        %v4484 = vpack.c.b16 %v4468, %v4467
        %v4486 = vsel %vm656, %v4469, 0
        %v4489 = vsel %vm656, %v4470, 0
        %v4492 = vsel %vm656, %v4471, 0
        %v4495 = vsel %vm656, %v4472, 0
        %v4498 = vsel %vm656, %v4473, 0
        %v4501 = vsel %vm656, %v4474, 0
        %v4504 = vsel %vm656, %v4475, 0
        %v4507 = vsel %vm656, %v4476, 0
        %v4510 = vsel %vm656, %v4477, 0
        %v4513 = vsel %vm656, %v4478, 0
        %v4516 = vsel %vm656, %v4479, 0
        %v4519 = vsel %vm656, %v4480, 0
        %v4522 = vsel %vm656, %v4481, 0
        %v4525 = vsel %vm656, %v4482, 0
        %v4528 = vsel %vm656, %v4483, 0
        %v4531 = vsel %vm656, %v4484, 0
        %v4534 = vsel %vm705, %v4436, 0
        %4536 = vmatprep.subr.bf16.mxu0 0
        %4537 = vmatpush1.bf16.msra.mxu0 %v4534
        %4538 = vmatprep.subr.bf16.mxu0 0
        %4539 = vmatpush1.bf16.msra.mxu0 0
        %4540 = vmatprep.subr.bf16.mxu0 0
        %4541 = vmatpush1.bf16.msra.mxu0 0
        %4542 = vmatprep.subr.bf16.mxu0 0
        %4543 = vmatpush1.bf16.msra.mxu0 0
        %4544 = vmatprep.subr.bf16.mxu0 0
        %4545 = vmatpush1.bf16.msra.mxu0 0
        %4546 = vmatprep.subr.bf16.mxu0 0
        %4547 = vmatpush1.bf16.msra.mxu0 0
        %4548 = vmatprep.subr.bf16.mxu0 0
        %4549 = vmatpush1.bf16.msra.mxu0 0
        %4550 = vmatprep.subr.bf16.mxu0 0
        %4551 = vmatpush1.bf16.msra.mxu0 0
        %4552 = vmatprep.subr.bf16.mxu0 0
        %4553 = vmatpush1.bf16.msra.mxu0 0
        %4554 = vmatprep.subr.bf16.mxu0 0
        %4555 = vmatpush1.bf16.msra.mxu0 0
        %4556 = vmatprep.subr.bf16.mxu0 0
        %4557 = vmatpush1.bf16.msra.mxu0 0
        %4558 = vmatprep.subr.bf16.mxu0 0
        %4559 = vmatpush1.bf16.msra.mxu0 0
        %4560 = vmatprep.subr.bf16.mxu0 0
        %4561 = vmatpush1.bf16.msra.mxu0 0
        %4562 = vmatprep.subr.bf16.mxu0 0
        %4563 = vmatpush1.bf16.msra.mxu0 0
        %4564 = vmatprep.subr.bf16.mxu0 0
        %4565 = vmatpush1.bf16.msra.mxu0 0
        %4566 = vmatprep.subr.bf16.mxu0 0
        %4567 = vmatpush1.bf16.msra.mxu0 0
        %4568 = vmatprep.mubr.bf16.mxu0 0
        %4569 = vmatmul.mubr.bf16.gmra.mrb[0].mxu0 %v4486
        %v4570 = vpop.f32.mrb[0].mxu0
        %v4571 = vadd.f32 0.0, %v4570
        %v4572 = vpop.f32.mrb[0].mxu0
        %v4573 = vpop.f32.mrb[0].mxu0
        %v4574 = vadd.f32 0.0, %v4573
        %v4575 = vpop.f32.mrb[0].mxu0
        %4576 = vmatprep.mubr.bf16.mxu0 0
        %4577 = vmatmul.mubr.bf16.gmra.mrb[0].mxu0 %v4489
        %v4578 = vpop.f32.mrb[0].mxu0
        %v4579 = vadd.f32 0.0, %v4578
        %v4580 = vpop.f32.mrb[0].mxu0
        %v4581 = vpop.f32.mrb[0].mxu0
        %v4582 = vadd.f32 0.0, %v4581
        %v4583 = vpop.f32.mrb[0].mxu0
        %4584 = vmatprep.mubr.bf16.mxu0 0
        %4585 = vmatmul.mubr.bf16.gmra.mrb[0].mxu0 %v4492
        %v4586 = vpop.f32.mrb[0].mxu0
        %v4587 = vadd.f32 0.0, %v4586
        %v4588 = vpop.f32.mrb[0].mxu0
        %v4589 = vpop.f32.mrb[0].mxu0
        %v4590 = vadd.f32 0.0, %v4589
        %v4591 = vpop.f32.mrb[0].mxu0
        %4592 = vmatprep.mubr.bf16.mxu0 0
        %4593 = vmatmul.mubr.bf16.gmra.mrb[0].mxu0 %v4495
        %v4594 = vpop.f32.mrb[0].mxu0
        %v4595 = vadd.f32 0.0, %v4594
        %v4596 = vpop.f32.mrb[0].mxu0
        %v4597 = vpop.f32.mrb[0].mxu0
        %v4598 = vadd.f32 0.0, %v4597
        %v4599 = vpop.f32.mrb[0].mxu0
        %4600 = vmatprep.mubr.bf16.mxu0 0
        %4601 = vmatmul.mubr.bf16.gmra.mrb[0].mxu0 %v4498
        %v4602 = vpop.f32.mrb[0].mxu0
        %v4603 = vadd.f32 0.0, %v4602
        %v4604 = vpop.f32.mrb[0].mxu0
        %v4605 = vpop.f32.mrb[0].mxu0
        %v4606 = vadd.f32 0.0, %v4605
        %v4607 = vpop.f32.mrb[0].mxu0
        %4608 = vmatprep.mubr.bf16.mxu0 0
        %4609 = vmatmul.mubr.bf16.gmra.mrb[0].mxu0 %v4501
        %v4610 = vpop.f32.mrb[0].mxu0
        %v4611 = vadd.f32 0.0, %v4610
        %v4612 = vpop.f32.mrb[0].mxu0
        %v4613 = vpop.f32.mrb[0].mxu0
        %v4614 = vadd.f32 0.0, %v4613
        %v4615 = vpop.f32.mrb[0].mxu0
        %4616 = vmatprep.mubr.bf16.mxu0 0
        %4617 = vmatmul.mubr.bf16.gmra.mrb[0].mxu0 %v4504
        %v4618 = vpop.f32.mrb[0].mxu0
        %v4619 = vadd.f32 0.0, %v4618
        %v4620 = vpop.f32.mrb[0].mxu0
        %v4621 = vpop.f32.mrb[0].mxu0
        %v4622 = vadd.f32 0.0, %v4621
        %v4623 = vpop.f32.mrb[0].mxu0
        %4624 = vmatprep.mubr.bf16.mxu0 0
        %4625 = vmatmul.mubr.bf16.gmra.mrb[0].mxu0 %v4507
        %v4626 = vpop.f32.mrb[0].mxu0
        %v4627 = vadd.f32 0.0, %v4626
        %v4628 = vpop.f32.mrb[0].mxu0
        %v4629 = vpop.f32.mrb[0].mxu0
        %v4630 = vadd.f32 0.0, %v4629
        %v4631 = vpop.f32.mrb[0].mxu0
        %4632 = vmatprep.mubr.bf16.mxu0 0
        %4633 = vmatmul.mubr.bf16.gmra.mrb[0].mxu0 %v4510
        %v4634 = vpop.f32.mrb[0].mxu0
        %v4635 = vadd.f32 0.0, %v4634
        %v4636 = vpop.f32.mrb[0].mxu0
        %v4637 = vpop.f32.mrb[0].mxu0
        %v4638 = vadd.f32 0.0, %v4637
        %v4639 = vpop.f32.mrb[0].mxu0
        %4640 = vmatprep.mubr.bf16.mxu0 0
        %4641 = vmatmul.mubr.bf16.gmra.mrb[0].mxu0 %v4513
        %v4642 = vpop.f32.mrb[0].mxu0
        %v4643 = vadd.f32 0.0, %v4642
        %v4644 = vpop.f32.mrb[0].mxu0
        %v4645 = vpop.f32.mrb[0].mxu0
        %v4646 = vadd.f32 0.0, %v4645
        %v4647 = vpop.f32.mrb[0].mxu0
        %4648 = vmatprep.mubr.bf16.mxu0 0
        %4649 = vmatmul.mubr.bf16.gmra.mrb[0].mxu0 %v4516
        %v4650 = vpop.f32.mrb[0].mxu0
        %v4651 = vadd.f32 0.0, %v4650
        %v4652 = vpop.f32.mrb[0].mxu0
        %v4653 = vpop.f32.mrb[0].mxu0
        %v4654 = vadd.f32 0.0, %v4653
        %v4655 = vpop.f32.mrb[0].mxu0
        %4656 = vmatprep.mubr.bf16.mxu0 0
        %4657 = vmatmul.mubr.bf16.gmra.mrb[0].mxu0 %v4519
        %v4658 = vpop.f32.mrb[0].mxu0
        %v4659 = vadd.f32 0.0, %v4658
        %v4660 = vpop.f32.mrb[0].mxu0
        %v4661 = vpop.f32.mrb[0].mxu0
        %v4662 = vadd.f32 0.0, %v4661
        %v4663 = vpop.f32.mrb[0].mxu0
        %4664 = vmatprep.mubr.bf16.mxu0 0
        %4665 = vmatmul.mubr.bf16.gmra.mrb[0].mxu0 %v4522
        %v4666 = vpop.f32.mrb[0].mxu0
        %v4667 = vadd.f32 0.0, %v4666
        %v4668 = vpop.f32.mrb[0].mxu0
        %v4669 = vpop.f32.mrb[0].mxu0
        %v4670 = vadd.f32 0.0, %v4669
        %v4671 = vpop.f32.mrb[0].mxu0
        %4672 = vmatprep.mubr.bf16.mxu0 0
        %4673 = vmatmul.mubr.bf16.gmra.mrb[0].mxu0 %v4525
        %v4674 = vpop.f32.mrb[0].mxu0
        %v4675 = vadd.f32 0.0, %v4674
        %v4676 = vpop.f32.mrb[0].mxu0
        %v4677 = vpop.f32.mrb[0].mxu0
        %v4678 = vadd.f32 0.0, %v4677
        %v4679 = vpop.f32.mrb[0].mxu0
        %4680 = vmatprep.mubr.bf16.mxu0 0
        %4681 = vmatmul.mubr.bf16.gmra.mrb[0].mxu0 %v4528
        %v4682 = vpop.f32.mrb[0].mxu0
        %v4683 = vadd.f32 0.0, %v4682
        %v4684 = vpop.f32.mrb[0].mxu0
        %v4685 = vpop.f32.mrb[0].mxu0
        %v4686 = vadd.f32 0.0, %v4685
        %v4687 = vpop.f32.mrb[0].mxu0
        %4688 = vmatprep.mubr.bf16.mxu0 0
        %4689 = vmatmul.mubr.bf16.gmra.mrb[0].mxu0 %v4531
        %v4690 = vpop.f32.mrb[0].mxu0
        %v4691 = vadd.f32 0.0, %v4690
        %v4692 = vpop.f32.mrb[0].mxu0
        %v4693 = vpop.f32.mrb[0].mxu0
        %v4694 = vadd.f32 0.0, %v4693
        %v4695 = vpop.f32.mrb[0].mxu0
        %4696 = vdwg.mxu0
        %v4697 = vadd.f32 %v4227, %v4571
        %v4698 = vadd.f32 %v4228, %v4574
        %v4699 = vadd.f32 %v4229, %v4579
        %v4700 = vadd.f32 %v4230, %v4582
        %v4701 = vadd.f32 %v4231, %v4587
        %v4702 = vadd.f32 %v4232, %v4590
        %v4703 = vadd.f32 %v4233, %v4595
        %v4704 = vadd.f32 %v4234, %v4598
        %v4705 = vadd.f32 %v4235, %v4603
        %v4706 = vadd.f32 %v4236, %v4606
        %v4707 = vadd.f32 %v4237, %v4611
        %v4708 = vadd.f32 %v4238, %v4614
        %v4709 = vadd.f32 %v4239, %v4619
        %v4710 = vadd.f32 %v4240, %v4622
        %v4711 = vadd.f32 %v4241, %v4627
        %v4712 = vadd.f32 %v4242, %v4630
        %v4713 = vadd.f32 %v4243, %v4635
        %v4714 = vadd.f32 %v4244, %v4638
        %v4715 = vadd.f32 %v4245, %v4643
        %v4716 = vadd.f32 %v4246, %v4646
        %v4717 = vadd.f32 %v4247, %v4651
        %v4718 = vadd.f32 %v4248, %v4654
        %v4719 = vadd.f32 %v4249, %v4659
        %v4720 = vadd.f32 %v4250, %v4662
        %v4721 = vadd.f32 %v4251, %v4667
        %v4722 = vadd.f32 %v4252, %v4670
        %v4723 = vadd.f32 %v4253, %v4675
        %v4724 = vadd.f32 %v4254, %v4678
        %v4725 = vadd.f32 %v4255, %v4683
        %v4726 = vadd.f32 %v4256, %v4686
        %v4727 = vadd.f32 %v4257, %v4691
        %v4728 = vadd.f32 %v4258, %v4694
        %v4729 = vld [vmem:[%s2] sm:$0x1]
        %v4731 = vlaneseq
        %v4732 = vshrl.u32 %v4731, 7
        %v4733 = vsub.s32 0, %v4732
        %v4734 = vrot.slane %v4729, %v4733
        %v4736 = vadd.f32 %v4697, %v4734
        %v4737 = vadd.f32 %v4698, %v4734
        %v4738 = vadd.f32 %v4699, %v4734
        %v4739 = vadd.f32 %v4700, %v4734
        %v4740 = vadd.f32 %v4701, %v4734
        %v4741 = vadd.f32 %v4702, %v4734
        %v4742 = vadd.f32 %v4703, %v4734
        %v4743 = vadd.f32 %v4704, %v4734
        %v4744 = vadd.f32 %v4705, %v4734
        %v4745 = vadd.f32 %v4706, %v4734
        %v4746 = vadd.f32 %v4707, %v4734
        %v4747 = vadd.f32 %v4708, %v4734
        %v4748 = vadd.f32 %v4709, %v4734
        %v4749 = vadd.f32 %v4710, %v4734
        %v4750 = vadd.f32 %v4711, %v4734
        %v4751 = vadd.f32 %v4712, %v4734
        %v4752 = vadd.f32 %v4713, %v4734
        %v4753 = vadd.f32 %v4714, %v4734
        %v4754 = vadd.f32 %v4715, %v4734
        %v4755 = vadd.f32 %v4716, %v4734
        %v4756 = vadd.f32 %v4717, %v4734
        %v4757 = vadd.f32 %v4718, %v4734
        %v4758 = vadd.f32 %v4719, %v4734
        %v4759 = vadd.f32 %v4720, %v4734
        %v4760 = vadd.f32 %v4721, %v4734
        %v4761 = vadd.f32 %v4722, %v4734
        %v4762 = vadd.f32 %v4723, %v4734
        %v4763 = vadd.f32 %v4724, %v4734
        %v4764 = vadd.f32 %v4725, %v4734
        %v4765 = vadd.f32 %v4726, %v4734
        %v4766 = vadd.f32 %v4727, %v4734
        %v4767 = vadd.f32 %v4728, %v4734
        %v4768 = vmax.f32 %v4736, 0.0
        %v4769 = vmax.f32 %v4737, 0.0
        %v4770 = vmax.f32 %v4738, 0.0
        %v4771 = vmax.f32 %v4739, 0.0
        %v4772 = vmax.f32 %v4740, 0.0
        %v4773 = vmax.f32 %v4741, 0.0
        %v4774 = vmax.f32 %v4742, 0.0
        %v4775 = vmax.f32 %v4743, 0.0
        %v4776 = vmax.f32 %v4744, 0.0
        %v4777 = vmax.f32 %v4745, 0.0
        %v4778 = vmax.f32 %v4746, 0.0
        %v4779 = vmax.f32 %v4747, 0.0
        %v4780 = vmax.f32 %v4748, 0.0
        %v4781 = vmax.f32 %v4749, 0.0
        %v4782 = vmax.f32 %v4750, 0.0
        %v4783 = vmax.f32 %v4751, 0.0
        %v4784 = vmax.f32 %v4752, 0.0
        %v4785 = vmax.f32 %v4753, 0.0
        %v4786 = vmax.f32 %v4754, 0.0
        %v4787 = vmax.f32 %v4755, 0.0
        %v4788 = vmax.f32 %v4756, 0.0
        %v4789 = vmax.f32 %v4757, 0.0
        %v4790 = vmax.f32 %v4758, 0.0
        %v4791 = vmax.f32 %v4759, 0.0
        %v4792 = vmax.f32 %v4760, 0.0
        %v4793 = vmax.f32 %v4761, 0.0
        %v4794 = vmax.f32 %v4762, 0.0
        %v4795 = vmax.f32 %v4763, 0.0
        %v4796 = vmax.f32 %v4764, 0.0
        %v4797 = vmax.f32 %v4765, 0.0
        %v4798 = vmax.f32 %v4766, 0.0
        %v4799 = vmax.f32 %v4767, 0.0
        %vm4800 = vcmask 523264
        %4801 = vst.msk [vmem:[%s163] sm:$0xff] %vm4800, %v4768
        %4802 = vst.msk [vmem:[%s163 + $0x8] sm:$0xff] %vm4800, %v4769
        %4803 = vst.msk [vmem:[%s163 + $0x10] sm:$0xff] %vm4800, %v4770
        %4804 = vst.msk [vmem:[%s163 + $0x18] sm:$0xff] %vm4800, %v4771
        %4805 = vst.msk [vmem:[%s163 + $0x20] sm:$0xff] %vm4800, %v4772
        %4806 = vst.msk [vmem:[%s163 + $0x28] sm:$0xff] %vm4800, %v4773
        %4807 = vst.msk [vmem:[%s163 + $0x30] sm:$0xff] %vm4800, %v4774
        %4808 = vst.msk [vmem:[%s163 + $0x38] sm:$0xff] %vm4800, %v4775
        %4809 = vst.msk [vmem:[%s163 + $0x40] sm:$0xff] %vm4800, %v4776
        %4810 = vst.msk [vmem:[%s163 + $0x48] sm:$0xff] %vm4800, %v4777
        %4811 = vst.msk [vmem:[%s163 + $0x50] sm:$0xff] %vm4800, %v4778
        %4812 = vst.msk [vmem:[%s163 + $0x58] sm:$0xff] %vm4800, %v4779
        %4813 = vst.msk [vmem:[%s163 + $0x60] sm:$0xff] %vm4800, %v4780
        %4814 = vst.msk [vmem:[%s163 + $0x68] sm:$0xff] %vm4800, %v4781
        %4815 = vst.msk [vmem:[%s163 + $0x70] sm:$0xff] %vm4800, %v4782
        %4816 = vst.msk [vmem:[%s163 + $0x78] sm:$0xff] %vm4800, %v4783
        %4817 = vst.msk [vmem:[%s163 + $0x80] sm:$0xff] %vm4800, %v4784
        %4818 = vst.msk [vmem:[%s163 + $0x88] sm:$0xff] %vm4800, %v4785
        %4819 = vst.msk [vmem:[%s163 + $0x90] sm:$0xff] %vm4800, %v4786
        %4820 = vst.msk [vmem:[%s163 + $0x98] sm:$0xff] %vm4800, %v4787
        %4821 = vst.msk [vmem:[%s163 + $0xa0] sm:$0xff] %vm4800, %v4788
        %4822 = vst.msk [vmem:[%s163 + $0xa8] sm:$0xff] %vm4800, %v4789
        %4823 = vst.msk [vmem:[%s163 + $0xb0] sm:$0xff] %vm4800, %v4790
        %4824 = vst.msk [vmem:[%s163 + $0xb8] sm:$0xff] %vm4800, %v4791
        %4825 = vst.msk [vmem:[%s163 + $0xc0] sm:$0xff] %vm4800, %v4792
        %4826 = vst.msk [vmem:[%s163 + $0xc8] sm:$0xff] %vm4800, %v4793
        %4827 = vst.msk [vmem:[%s163 + $0xd0] sm:$0xff] %vm4800, %v4794
        %4828 = vst.msk [vmem:[%s163 + $0xd8] sm:$0xff] %vm4800, %v4795
        %4829 = vst.msk [vmem:[%s163 + $0xe0] sm:$0xff] %vm4800, %v4796
        %4830 = vst.msk [vmem:[%s163 + $0xe8] sm:$0xff] %vm4800, %v4797
        %4831 = vst.msk [vmem:[%s163 + $0xf0] sm:$0xff] %vm4800, %v4798
        %4832 = vst.msk [vmem:[%s163 + $0xf8] sm:$0xff] %vm4800, %v4799
        %s4833 = sand.u32 %s93, 1
        %s4834 = scalar_lea.sflag [#allocation3], %s4833
        %s4835 = sand.u32 %s93, 1
        %s4836 = smul.addr %s4835, 256
        %s4837 = scalar_lea.vmem [#allocation2], %s4836
        // Predicated region
        $region33: #{tpu_custom_call.1} parent=31 // pred_check
          %p4838 = pneg %p103
        $region34: #{tpu_custom_call.1} parent=31 // pred_check_branch
          %4840 = sbr.rel (%p4838) target = $region36
        $region35: #{tpu_custom_call.1} parent=31 // pred_region
          %s4842 = ssub.s32 4096, 4096
          %4843 = vsyncadd %s4834, %s4842
          %s4844 = smul.addr %s17, 32
          %s4845 = smul.addr %s4844, 128
          %s4846 = scalar_lea.hbm %s3, %s4845
          %s4847 = sshll.u32 %s4837, 4
          %s4848 = int_to_ptr.vmem [resolvable:$true] %s4847
          %4853 = dma.vmem_to_hbm [thread:$0]  %s4848, 4096, %s4846, %s4834, 128, 128, 8
        $region36: #{tpu_custom_call.1} parent=31 // pred_fallthru
          _
      $region32: #{tpu_custom_call.1} parent=5 // pred_fallthru
        _
      %p4854 = scmp.le.s32.totalorder 2, %s12
      // Predicated region
      $region37: #{tpu_custom_call.1} parent=5 // pred_check
        %p4855 = pneg %p4854
      $region38: #{tpu_custom_call.1} parent=5 // pred_check_branch
        %4857 = sbr.rel (%p4855) target = $region40
      $region39: #{tpu_custom_call.1} parent=5 // pred_region
        %s4858 = ssub.s32 %s12, 2
        // Predicated region
        $region41: #{tpu_custom_call.1} parent=39 // pred_check
          %p4859 = pneg %p109
        $region42: #{tpu_custom_call.1} parent=39 // pred_check_branch
          %4861 = sbr.rel (%p4859) target = $region44
        $region43: #{tpu_custom_call.1} parent=39 // pred_region
          %s4862 = sand.u32 %s94, 1
          %s4863 = scalar_lea.sflag [#allocation3], %s4862
          %s4864 = sand.u32 %s94, 1
          %s4865 = smul.addr %s4864, 256
          %s4866 = scalar_lea.vmem [#allocation2], %s4865
          %4867 = dma.done %s4863, 4096
        $region44: #{tpu_custom_call.1} parent=39 // pred_fallthru
          _
      $region40: #{tpu_custom_call.1} parent=5 // pred_fallthru
        _
    $region6: #{tpu_custom_call.1} parent=1 // loop_footer
      %s16 = sadd.s32 1, %s12
    $region7: #{tpu_custom_call.1} parent=1 // loop_footer_branch
      %11 = sbr.rel target = $region3
    $region8: #{tpu_custom_call.1} parent=1 // loop_exit
      _
    %4868 = vsyncpa [#allocation3], 1
    %s4869 = scalar_lea.sflag [#allocation3], 1
    %4870 = vsyncpa %s4869, 1

</llo_original>
